<compile_context>
chip_gen: v7x
topology: tpu7x:2x2x1
jax: 0.10.0
libtpu: 0.0.40
codegen_flags: <defaults>
</compile_context>

<pallas_src>
import math
import jax
import jax.numpy as jnp
from jax.experimental import pallas as pl
from jax.experimental.pallas import tpu as pltpu

# ---------------- config (matches the GPT module shapes) ---------------------
VOCAB_SIZE = 128
BLOCK_SIZE = 16          # max sequence length (wpe rows)
N_EMBD = 64
N_HEAD = 4
N_BLOCK = 2
HEAD_DIM = N_EMBD // N_HEAD
LN_EPS = 1e-5
PER_BLOCK_PARAMS = 12    # params per transformer block passed to the kernel


# ---------------- in-kernel helpers ------------------------------------------
def _layernorm(x, w, b):
    mu = jnp.mean(x, axis=-1, keepdims=True)
    xc = x - mu
    var = jnp.mean(xc * xc, axis=-1, keepdims=True)
    return xc * jax.lax.rsqrt(var + LN_EPS) * w + b


def _mm(a, w):
    """MXU matmul: cast activation to the (bf16) weight dtype, accumulate f32."""
    return jnp.dot(a.astype(w.dtype), w, preferred_element_type=jnp.float32)


# ---------------- fused GPT kernel --------------------------------------------
def gpt_fused_kernel(idx_ref, *refs):
    """Full GPT forward for one batch element (grid axis = batch)."""
    n_in = 2 + PER_BLOCK_PARAMS * N_BLOCK + 3
    in_refs = refs[:n_in]
    o_ref = refs[n_in]
    emb_scratch = refs[n_in + 1]          # (T, C) f32
    head_scratch = refs[n_in + 2]         # (T, C) f32

    wte_ref, wpe_ref = in_refs[0], in_refs[1]
    lnf_w_ref, lnf_b_ref, wte_t_ref = in_refs[-3], in_refs[-2], in_refs[-1]

    b = pl.program_id(0)
    T = emb_scratch.shape[0]

    # ---- token + position embeddings (gather via SMEM-prefetched idx) -------
    for t in range(T):                                   # static unroll, T = 8
        tok = idx_ref[b, t]
        emb_scratch[pl.ds(t, 1), :] = (
            wte_ref[pl.ds(tok, 1), :] + wpe_ref[pl.ds(t, 1), :])
    x = emb_scratch[...]                                 # (T, C) f32

    causal = (jax.lax.broadcasted_iota(jnp.int32, (T, T), 0)
              >= jax.lax.broadcasted_iota(jnp.int32, (T, T), 1))
    scale = 1.0 / math.sqrt(HEAD_DIM)

    # ---- transformer blocks (statically unrolled) ----------------------------
    for l in range(N_BLOCK):
        p = in_refs[2 + l * PER_BLOCK_PARAMS: 2 + (l + 1) * PER_BLOCK_PARAMS]
        (ln1w, ln1b, wqkv, bqkv, wapr, bapr,
         ln2w, ln2b, wfc, bfc, wmpr, bmpr) = p

        # --- causal self-attention ---
        h = _layernorm(x, ln1w[...], ln1b[...])
        qkv = _mm(h, wqkv[...]) + bqkv[...]              # (T, 3C) f32
        q = qkv[:, 0 * N_EMBD:1 * N_EMBD] * scale        # fold 1/sqrt(hd) once
        k = qkv[:, 1 * N_EMBD:2 * N_EMBD]
        v = qkv[:, 2 * N_EMBD:3 * N_EMBD]
        for hh in range(N_HEAD):                         # static unroll
            sl = slice(hh * HEAD_DIM, (hh + 1) * HEAD_DIM)
            qh = q[:, sl].astype(jnp.bfloat16)
            kh = k[:, sl].astype(jnp.bfloat16)
            vh = v[:, sl].astype(jnp.bfloat16)
            # q @ k.T without an explicit transpose (contract last dims).
            s = jax.lax.dot_general(qh, kh, (((1,), (1,)), ((), ())),
                                    preferred_element_type=jnp.float32)
            s = jnp.where(causal, s, -1e30)              # finite mask (no NaN risk)
            s = s - jnp.max(s, axis=-1, keepdims=True)
            pw = jnp.exp(s)
            pw = pw * pl.reciprocal(jnp.sum(pw, axis=-1, keepdims=True),
                                    approx=True)
            # write head output at its static column slice (no concatenate)
            head_scratch[:, sl] = jnp.dot(pw.astype(jnp.bfloat16), vh,
                                          preferred_element_type=jnp.float32)
        y = head_scratch[...]                            # (T, C)
        x = x + _mm(y, wapr[...]) + bapr[...]

        # --- MLP ---
        h = _layernorm(x, ln2w[...], ln2b[...])
        h = _mm(h, wfc[...]) + bfc[...]
        h = jax.nn.gelu(h, approximate=True)             # matches nn.GELU('tanh')
        x = x + _mm(h, wmpr[...]) + bmpr[...]

    # ---- final LayerNorm + weight-tied lm_head (lane-dense V=128 output) ----
    h = _layernorm(x, lnf_w_ref[...], lnf_b_ref[...])
    o_ref[0] = _mm(h, wte_t_ref[...])


# ---------------- pallas_call wrapper -----------------------------------------
def _full_spec(shape):
    # whole array VMEM-resident; same block for every grid point
    return pl.BlockSpec(shape, lambda b, idx_ref: (0,) * len(shape))


_BLOCK_PARAM_ORDER = ("ln1_w", "ln1_b", "w_qkv", "b_qkv", "w_aproj", "b_aproj",
                      "ln2_w", "ln2_b", "w_fc", "b_fc", "w_mproj", "b_mproj")


def gpt_forward(params, idx):
    B, T = idx.shape
    C, V = N_EMBD, VOCAB_SIZE

    weight_args = [params["wte"], params["wpe"]]
    in_specs = [_full_spec(params["wte"].shape), _full_spec(params["wpe"].shape)]
    for blk in params["blocks"]:
        for name in _BLOCK_PARAM_ORDER:
            weight_args.append(blk[name])
            in_specs.append(_full_spec(blk[name].shape))
    weight_args += [params["lnf_w"], params["lnf_b"], params["wte_t"]]
    in_specs += [_full_spec(params["lnf_w"].shape),
                 _full_spec(params["lnf_b"].shape),
                 _full_spec(params["wte_t"].shape)]

    grid_spec = pltpu.PrefetchScalarGridSpec(
        num_scalar_prefetch=1,                 # idx -> SMEM, drives the gather
        grid=(B,),
        in_specs=in_specs,
        out_specs=pl.BlockSpec((1, T, V), lambda b, idx_ref: (b, 0, 0)),
        scratch_shapes=[pltpu.VMEM((T, C), jnp.float32),   # embedding rows
                        pltpu.VMEM((T, C), jnp.float32)],  # attention head outs
    )
    return pl.pallas_call(
        gpt_fused_kernel,
        out_shape=jax.ShapeDtypeStruct((B, T, V), jnp.float32),
        grid_spec=grid_spec,
        compiler_params=pltpu.CompilerParams(
            dimension_semantics=("parallel",)),            # v7x: 1 batch row / TC
    )(idx, *weight_args)


# ---------------- parameter init (deterministic, matches _init_weights) -------
def init_params(key):
    keys = iter(jax.random.split(key, 2 + 4 * N_BLOCK))

    def nrm(shape, dtype=jnp.float32):
        return (0.02 * jax.random.normal(next(keys), shape, jnp.float32)).astype(dtype)

    wte = nrm((VOCAB_SIZE, N_EMBD))                       # f32: embedding gather
    params = dict(
        wte=wte,
        wte_t=wte.T.astype(jnp.bfloat16),                 # cached tied lm_head weight
        wpe=nrm((BLOCK_SIZE, N_EMBD)),
        lnf_w=jnp.ones((1, N_EMBD), jnp.float32),
        lnf_b=jnp.zeros((1, N_EMBD), jnp.float32),
        blocks=[],
    )
    for _ in range(N_BLOCK):
        params["blocks"].append(dict(
            ln1_w=jnp.ones((1, N_EMBD), jnp.float32),
            ln1_b=jnp.zeros((1, N_EMBD), jnp.float32),
            w_qkv=nrm((N_EMBD, 3 * N_EMBD), jnp.bfloat16),
            b_qkv=jnp.zeros((1, 3 * N_EMBD), jnp.float32),
            w_aproj=nrm((N_EMBD, N_EMBD), jnp.bfloat16),
            b_aproj=jnp.zeros((1, N_EMBD), jnp.float32),
            ln2_w=jnp.ones((1, N_EMBD), jnp.float32),
            ln2_b=jnp.zeros((1, N_EMBD), jnp.float32),
            w_fc=nrm((N_EMBD, 4 * N_EMBD), jnp.bfloat16),
            b_fc=jnp.zeros((1, 4 * N_EMBD), jnp.float32),
            w_mproj=nrm((4 * N_EMBD, N_EMBD), jnp.bfloat16),
            b_mproj=jnp.zeros((1, N_EMBD), jnp.float32),
        ))
    return params


if __name__ == "__main__":
    key = jax.random.PRNGKey(0)
    k_param, k_idx = jax.random.split(key)
    params = init_params(k_param)

    B, T = 2, 8
    idx = jax.random.randint(k_idx, (B, T), 0, VOCAB_SIZE, dtype=jnp.int32)

    # TODO(synk): cross-entropy loss path (target != None) not kernelized.
    logits = gpt_forward(params, idx)
    logits = jax.block_until_ready(logits)
    assert logits.shape == (B, T, VOCAB_SIZE)
    assert bool(jnp.all(jnp.isfinite(logits)))
    print("KERNEL_OK")
</pallas_src>

<mosaic_0001>
module attributes {stable_mosaic.version = 11 : i64} {
  func.func @gpt_fused_kernel(%arg0: i32, %arg1: memref<2x8xi32, #tpu.memory_space<smem>>, %arg2: memref<128x64xf32, #tpu.memory_space<vmem>>, %arg3: memref<16x64xf32, #tpu.memory_space<vmem>>, %arg4: memref<1x64xf32, #tpu.memory_space<vmem>>, %arg5: memref<1x64xf32, #tpu.memory_space<vmem>>, %arg6: memref<64x192xbf16, #tpu.memory_space<vmem>>, %arg7: memref<1x192xf32, #tpu.memory_space<vmem>>, %arg8: memref<64x64xbf16, #tpu.memory_space<vmem>>, %arg9: memref<1x64xf32, #tpu.memory_space<vmem>>, %arg10: memref<1x64xf32, #tpu.memory_space<vmem>>, %arg11: memref<1x64xf32, #tpu.memory_space<vmem>>, %arg12: memref<64x256xbf16, #tpu.memory_space<vmem>>, %arg13: memref<1x256xf32, #tpu.memory_space<vmem>>, %arg14: memref<256x64xbf16, #tpu.memory_space<vmem>>, %arg15: memref<1x64xf32, #tpu.memory_space<vmem>>, %arg16: memref<1x64xf32, #tpu.memory_space<vmem>>, %arg17: memref<1x64xf32, #tpu.memory_space<vmem>>, %arg18: memref<64x192xbf16, #tpu.memory_space<vmem>>, %arg19: memref<1x192xf32, #tpu.memory_space<vmem>>, %arg20: memref<64x64xbf16, #tpu.memory_space<vmem>>, %arg21: memref<1x64xf32, #tpu.memory_space<vmem>>, %arg22: memref<1x64xf32, #tpu.memory_space<vmem>>, %arg23: memref<1x64xf32, #tpu.memory_space<vmem>>, %arg24: memref<64x256xbf16, #tpu.memory_space<vmem>>, %arg25: memref<1x256xf32, #tpu.memory_space<vmem>>, %arg26: memref<256x64xbf16, #tpu.memory_space<vmem>>, %arg27: memref<1x64xf32, #tpu.memory_space<vmem>>, %arg28: memref<1x64xf32, #tpu.memory_space<vmem>>, %arg29: memref<1x64xf32, #tpu.memory_space<vmem>>, %arg30: memref<64x128xbf16, #tpu.memory_space<vmem>>, %arg31: memref<1x8x128xf32, #tpu.memory_space<vmem>>, %arg32: memref<8x64xf32, #tpu.memory_space<vmem>>, %arg33: memref<8x64xf32, #tpu.memory_space<vmem>>) attributes {dimension_semantics = [#tpu.dimension_semantics<parallel>], iteration_bounds = array<i64: 2>, scalar_prefetch = 1 : i64, scratch_operands = 2 : i64, tpu.core_type = #tpu.core_type<tc>, window_params = [{pipeline_mode = #tpu.pipeline_mode<synchronous>, transform_indices = @transform_0, window_bounds = array<i64: 128, 64>}, {pipeline_mode = #tpu.pipeline_mode<synchronous>, transform_indices = @transform_1, window_bounds = array<i64: 16, 64>}, {pipeline_mode = #tpu.pipeline_mode<synchronous>, transform_indices = @transform_2, window_bounds = array<i64: 1, 64>}, {pipeline_mode = #tpu.pipeline_mode<synchronous>, transform_indices = @transform_3, window_bounds = array<i64: 1, 64>}, {pipeline_mode = #tpu.pipeline_mode<synchronous>, transform_indices = @transform_4, window_bounds = array<i64: 64, 192>}, {pipeline_mode = #tpu.pipeline_mode<synchronous>, transform_indices = @transform_5, window_bounds = array<i64: 1, 192>}, {pipeline_mode = #tpu.pipeline_mode<synchronous>, transform_indices = @transform_6, window_bounds = array<i64: 64, 64>}, {pipeline_mode = #tpu.pipeline_mode<synchronous>, transform_indices = @transform_7, window_bounds = array<i64: 1, 64>}, {pipeline_mode = #tpu.pipeline_mode<synchronous>, transform_indices = @transform_8, window_bounds = array<i64: 1, 64>}, {pipeline_mode = #tpu.pipeline_mode<synchronous>, transform_indices = @transform_9, window_bounds = array<i64: 1, 64>}, {pipeline_mode = #tpu.pipeline_mode<synchronous>, transform_indices = @transform_10, window_bounds = array<i64: 64, 256>}, {pipeline_mode = #tpu.pipeline_mode<synchronous>, transform_indices = @transform_11, window_bounds = array<i64: 1, 256>}, {pipeline_mode = #tpu.pipeline_mode<synchronous>, transform_indices = @transform_12, window_bounds = array<i64: 256, 64>}, {pipeline_mode = #tpu.pipeline_mode<synchronous>, transform_indices = @transform_13, window_bounds = array<i64: 1, 64>}, {pipeline_mode = #tpu.pipeline_mode<synchronous>, transform_indices = @transform_14, window_bounds = array<i64: 1, 64>}, {pipeline_mode = #tpu.pipeline_mode<synchronous>, transform_indices = @transform_15, window_bounds = array<i64: 1, 64>}, {pipeline_mode = #tpu.pipeline_mode<synchronous>, transform_indices = @transform_16, window_bounds = array<i64: 64, 192>}, {pipeline_mode = #tpu.pipeline_mode<synchronous>, transform_indices = @transform_17, window_bounds = array<i64: 1, 192>}, {pipeline_mode = #tpu.pipeline_mode<synchronous>, transform_indices = @transform_18, window_bounds = array<i64: 64, 64>}, {pipeline_mode = #tpu.pipeline_mode<synchronous>, transform_indices = @transform_19, window_bounds = array<i64: 1, 64>}, {pipeline_mode = #tpu.pipeline_mode<synchronous>, transform_indices = @transform_20, window_bounds = array<i64: 1, 64>}, {pipeline_mode = #tpu.pipeline_mode<synchronous>, transform_indices = @transform_21, window_bounds = array<i64: 1, 64>}, {pipeline_mode = #tpu.pipeline_mode<synchronous>, transform_indices = @transform_22, window_bounds = array<i64: 64, 256>}, {pipeline_mode = #tpu.pipeline_mode<synchronous>, transform_indices = @transform_23, window_bounds = array<i64: 1, 256>}, {pipeline_mode = #tpu.pipeline_mode<synchronous>, transform_indices = @transform_24, window_bounds = array<i64: 256, 64>}, {pipeline_mode = #tpu.pipeline_mode<synchronous>, transform_indices = @transform_25, window_bounds = array<i64: 1, 64>}, {pipeline_mode = #tpu.pipeline_mode<synchronous>, transform_indices = @transform_26, window_bounds = array<i64: 1, 64>}, {pipeline_mode = #tpu.pipeline_mode<synchronous>, transform_indices = @transform_27, window_bounds = array<i64: 1, 64>}, {pipeline_mode = #tpu.pipeline_mode<synchronous>, transform_indices = @transform_28, window_bounds = array<i64: 64, 128>}, {transform_indices = @transform_29, window_bounds = array<i64: 1, 8, 128>}]} {
    %0 = arith.index_cast %arg0 : i32 to index
    %c0 = arith.constant 0 : index
    %1 = memref.load %arg1[%0, %c0] : memref<2x8xi32, #tpu.memory_space<smem>>
    %2 = arith.index_cast %1 : i32 to index
    %c0_0 = arith.constant 0 : index
    %3 = vector.load %arg2[%2, %c0_0] : memref<128x64xf32, #tpu.memory_space<vmem>>, vector<1x64xf32>
    %c0_1 = arith.constant 0 : index
    %c0_2 = arith.constant 0 : index
    %4 = vector.load %arg3[%c0_1, %c0_2] : memref<16x64xf32, #tpu.memory_space<vmem>>, vector<1x64xf32>
    %5 = arith.addf %3, %4 : vector<1x64xf32>
    %c0_3 = arith.constant 0 : index
    %c0_4 = arith.constant 0 : index
    %6 = vector.load %arg32[%c0_3, %c0_4] : memref<8x64xf32, #tpu.memory_space<vmem>>, vector<1x64xf32>
    tpu.vector_store %arg32[%c0_3, %c0_4], %5 {strides = array<i32>} : memref<8x64xf32, #tpu.memory_space<vmem>>, vector<1x64xf32>,
    %7 = arith.index_cast %arg0 : i32 to index
    %c1 = arith.constant 1 : index
    %8 = memref.load %arg1[%7, %c1] : memref<2x8xi32, #tpu.memory_space<smem>>
    %9 = arith.index_cast %8 : i32 to index
    %c0_5 = arith.constant 0 : index
    %10 = vector.load %arg2[%9, %c0_5] : memref<128x64xf32, #tpu.memory_space<vmem>>, vector<1x64xf32>
    %c1_6 = arith.constant 1 : index
    %c0_7 = arith.constant 0 : index
    %11 = vector.load %arg3[%c1_6, %c0_7] : memref<16x64xf32, #tpu.memory_space<vmem>>, vector<1x64xf32>
    %12 = arith.addf %10, %11 : vector<1x64xf32>
    %c1_8 = arith.constant 1 : index
    %c0_9 = arith.constant 0 : index
    %13 = vector.load %arg32[%c1_8, %c0_9] : memref<8x64xf32, #tpu.memory_space<vmem>>, vector<1x64xf32>
    tpu.vector_store %arg32[%c1_8, %c0_9], %12 {strides = array<i32>} : memref<8x64xf32, #tpu.memory_space<vmem>>, vector<1x64xf32>,
    %14 = arith.index_cast %arg0 : i32 to index
    %c2 = arith.constant 2 : index
    %15 = memref.load %arg1[%14, %c2] : memref<2x8xi32, #tpu.memory_space<smem>>
    %16 = arith.index_cast %15 : i32 to index
    %c0_10 = arith.constant 0 : index
    %17 = vector.load %arg2[%16, %c0_10] : memref<128x64xf32, #tpu.memory_space<vmem>>, vector<1x64xf32>
    %c2_11 = arith.constant 2 : index
    %c0_12 = arith.constant 0 : index
    %18 = vector.load %arg3[%c2_11, %c0_12] : memref<16x64xf32, #tpu.memory_space<vmem>>, vector<1x64xf32>
    %19 = arith.addf %17, %18 : vector<1x64xf32>
    %c2_13 = arith.constant 2 : index
    %c0_14 = arith.constant 0 : index
    %20 = vector.load %arg32[%c2_13, %c0_14] : memref<8x64xf32, #tpu.memory_space<vmem>>, vector<1x64xf32>
    tpu.vector_store %arg32[%c2_13, %c0_14], %19 {strides = array<i32>} : memref<8x64xf32, #tpu.memory_space<vmem>>, vector<1x64xf32>,
    %21 = arith.index_cast %arg0 : i32 to index
    %c3 = arith.constant 3 : index
    %22 = memref.load %arg1[%21, %c3] : memref<2x8xi32, #tpu.memory_space<smem>>
    %23 = arith.index_cast %22 : i32 to index
    %c0_15 = arith.constant 0 : index
    %24 = vector.load %arg2[%23, %c0_15] : memref<128x64xf32, #tpu.memory_space<vmem>>, vector<1x64xf32>
    %c3_16 = arith.constant 3 : index
    %c0_17 = arith.constant 0 : index
    %25 = vector.load %arg3[%c3_16, %c0_17] : memref<16x64xf32, #tpu.memory_space<vmem>>, vector<1x64xf32>
    %26 = arith.addf %24, %25 : vector<1x64xf32>
    %c3_18 = arith.constant 3 : index
    %c0_19 = arith.constant 0 : index
    %27 = vector.load %arg32[%c3_18, %c0_19] : memref<8x64xf32, #tpu.memory_space<vmem>>, vector<1x64xf32>
    tpu.vector_store %arg32[%c3_18, %c0_19], %26 {strides = array<i32>} : memref<8x64xf32, #tpu.memory_space<vmem>>, vector<1x64xf32>,
    %28 = arith.index_cast %arg0 : i32 to index
    %c4 = arith.constant 4 : index
    %29 = memref.load %arg1[%28, %c4] : memref<2x8xi32, #tpu.memory_space<smem>>
    %30 = arith.index_cast %29 : i32 to index
    %c0_20 = arith.constant 0 : index
    %31 = vector.load %arg2[%30, %c0_20] : memref<128x64xf32, #tpu.memory_space<vmem>>, vector<1x64xf32>
    %c4_21 = arith.constant 4 : index
    %c0_22 = arith.constant 0 : index
    %32 = vector.load %arg3[%c4_21, %c0_22] : memref<16x64xf32, #tpu.memory_space<vmem>>, vector<1x64xf32>
    %33 = arith.addf %31, %32 : vector<1x64xf32>
    %c4_23 = arith.constant 4 : index
    %c0_24 = arith.constant 0 : index
    %34 = vector.load %arg32[%c4_23, %c0_24] : memref<8x64xf32, #tpu.memory_space<vmem>>, vector<1x64xf32>
    tpu.vector_store %arg32[%c4_23, %c0_24], %33 {strides = array<i32>} : memref<8x64xf32, #tpu.memory_space<vmem>>, vector<1x64xf32>,
    %35 = arith.index_cast %arg0 : i32 to index
    %c5 = arith.constant 5 : index
    %36 = memref.load %arg1[%35, %c5] : memref<2x8xi32, #tpu.memory_space<smem>>
    %37 = arith.index_cast %36 : i32 to index
    %c0_25 = arith.constant 0 : index
    %38 = vector.load %arg2[%37, %c0_25] : memref<128x64xf32, #tpu.memory_space<vmem>>, vector<1x64xf32>
    %c5_26 = arith.constant 5 : index
    %c0_27 = arith.constant 0 : index
    %39 = vector.load %arg3[%c5_26, %c0_27] : memref<16x64xf32, #tpu.memory_space<vmem>>, vector<1x64xf32>
    %40 = arith.addf %38, %39 : vector<1x64xf32>
    %c5_28 = arith.constant 5 : index
    %c0_29 = arith.constant 0 : index
    %41 = vector.load %arg32[%c5_28, %c0_29] : memref<8x64xf32, #tpu.memory_space<vmem>>, vector<1x64xf32>
    tpu.vector_store %arg32[%c5_28, %c0_29], %40 {strides = array<i32>} : memref<8x64xf32, #tpu.memory_space<vmem>>, vector<1x64xf32>,
    %42 = arith.index_cast %arg0 : i32 to index
    %c6 = arith.constant 6 : index
    %43 = memref.load %arg1[%42, %c6] : memref<2x8xi32, #tpu.memory_space<smem>>
    %44 = arith.index_cast %43 : i32 to index
    %c0_30 = arith.constant 0 : index
    %45 = vector.load %arg2[%44, %c0_30] : memref<128x64xf32, #tpu.memory_space<vmem>>, vector<1x64xf32>
    %c6_31 = arith.constant 6 : index
    %c0_32 = arith.constant 0 : index
    %46 = vector.load %arg3[%c6_31, %c0_32] : memref<16x64xf32, #tpu.memory_space<vmem>>, vector<1x64xf32>
    %47 = arith.addf %45, %46 : vector<1x64xf32>
    %c6_33 = arith.constant 6 : index
    %c0_34 = arith.constant 0 : index
    %48 = vector.load %arg32[%c6_33, %c0_34] : memref<8x64xf32, #tpu.memory_space<vmem>>, vector<1x64xf32>
    tpu.vector_store %arg32[%c6_33, %c0_34], %47 {strides = array<i32>} : memref<8x64xf32, #tpu.memory_space<vmem>>, vector<1x64xf32>,
    %49 = arith.index_cast %arg0 : i32 to index
    %c7 = arith.constant 7 : index
    %50 = memref.load %arg1[%49, %c7] : memref<2x8xi32, #tpu.memory_space<smem>>
    %51 = arith.index_cast %50 : i32 to index
    %c0_35 = arith.constant 0 : index
    %52 = vector.load %arg2[%51, %c0_35] : memref<128x64xf32, #tpu.memory_space<vmem>>, vector<1x64xf32>
    %c7_36 = arith.constant 7 : index
    %c0_37 = arith.constant 0 : index
    %53 = vector.load %arg3[%c7_36, %c0_37] : memref<16x64xf32, #tpu.memory_space<vmem>>, vector<1x64xf32>
    %54 = arith.addf %52, %53 : vector<1x64xf32>
    %c7_38 = arith.constant 7 : index
    %c0_39 = arith.constant 0 : index
    %55 = vector.load %arg32[%c7_38, %c0_39] : memref<8x64xf32, #tpu.memory_space<vmem>>, vector<1x64xf32>
    tpu.vector_store %arg32[%c7_38, %c0_39], %54 {strides = array<i32>} : memref<8x64xf32, #tpu.memory_space<vmem>>, vector<1x64xf32>,
    %c0_40 = arith.constant 0 : index
    %c0_41 = arith.constant 0 : index
    %56 = vector.load %arg32[%c0_40, %c0_41] : memref<8x64xf32, #tpu.memory_space<vmem>>, vector<8x64xf32>
    %57 = tpu.iota {dimensions = array<i32: 0>} : vector<8x8xi32>
    %58 = tpu.iota {dimensions = array<i32: 1>} : vector<8x8xi32>
    %59 = arith.cmpi sge, %57, %58 : vector<8x8xi32>
    %c0_42 = arith.constant 0 : index
    %c0_43 = arith.constant 0 : index
    %60 = vector.load %arg4[%c0_42, %c0_43] : memref<1x64xf32, #tpu.memory_space<vmem>>, vector<1x64xf32>
    %c0_44 = arith.constant 0 : index
    %c0_45 = arith.constant 0 : index
    %61 = vector.load %arg5[%c0_44, %c0_45] : memref<1x64xf32, #tpu.memory_space<vmem>>, vector<1x64xf32>
    %cst = arith.constant dense<0.000000e+00> : vector<8xf32>
    %62 = vector.multi_reduction <add>, %56, %cst [1] : vector<8x64xf32> to vector<8xf32>
    %63 = vector.shape_cast %62 : vector<8xf32> to vector<8x1xf32>
    %cst_46 = arith.constant 6.400000e+01 : f32
    %64 = vector.broadcast %cst_46 : f32 to vector<8x1xf32>
    %65 = arith.divf %63, %64 : vector<8x1xf32>
    %66 = vector.broadcast %65 : vector<8x1xf32> to vector<8x64xf32>
    %67 = arith.subf %56, %66 : vector<8x64xf32>
    %68 = arith.mulf %67, %67 : vector<8x64xf32>
    %cst_47 = arith.constant dense<0.000000e+00> : vector<8xf32>
    %69 = vector.multi_reduction <add>, %68, %cst_47 [1] : vector<8x64xf32> to vector<8xf32>
    %70 = vector.shape_cast %69 : vector<8xf32> to vector<8x1xf32>
    %cst_48 = arith.constant 6.400000e+01 : f32
    %71 = vector.broadcast %cst_48 : f32 to vector<8x1xf32>
    %72 = arith.divf %70, %71 : vector<8x1xf32>
    %cst_49 = arith.constant 9.99999974E-6 : f32
    %73 = vector.broadcast %cst_49 : f32 to vector<8x1xf32>
    %74 = arith.addf %72, %73 : vector<8x1xf32>
    %75 = math.rsqrt %74 : vector<8x1xf32>
    %76 = vector.broadcast %75 : vector<8x1xf32> to vector<8x64xf32>
    %77 = arith.mulf %67, %76 : vector<8x64xf32>
    %78 = vector.broadcast %60 : vector<1x64xf32> to vector<8x64xf32>
    %79 = arith.mulf %77, %78 : vector<8x64xf32>
    %80 = vector.broadcast %61 : vector<1x64xf32> to vector<8x64xf32>
    %81 = arith.addf %79, %80 : vector<8x64xf32>
    %c0_50 = arith.constant 0 : index
    %c0_51 = arith.constant 0 : index
    %82 = vector.load %arg6[%c0_50, %c0_51] : memref<64x192xbf16, #tpu.memory_space<vmem>>, vector<64x192xbf16>
    %83 = arith.truncf %81 : vector<8x64xf32> to vector<8x64xbf16>
    %cst_52 = arith.constant dense<0.000000e+00> : vector<8x192xf32>
    %84 = tpu.matmul %83, %82, %cst_52 {dimension_numbers = #tpu.dot_dimension_numbers<[1], [0], [0], [1], [0, 0, 1, 1], [], []>} : vector<8x64xbf16>, vector<64x192xbf16>, vector<8x192xf32> -> vector<8x192xf32>
    %c0_53 = arith.constant 0 : index
    %c0_54 = arith.constant 0 : index
    %85 = vector.load %arg7[%c0_53, %c0_54] : memref<1x192xf32, #tpu.memory_space<vmem>>, vector<1x192xf32>
    %86 = vector.broadcast %85 : vector<1x192xf32> to vector<8x192xf32>
    %87 = arith.addf %84, %86 : vector<8x192xf32>
    %88 = vector.extract_strided_slice %87 {offsets = [0, 0], sizes = [8, 64], strides = [1, 1]} : vector<8x192xf32> to vector<8x64xf32>
    %cst_55 = arith.constant 2.500000e-01 : f32
    %89 = vector.broadcast %cst_55 : f32 to vector<8x64xf32>
    %90 = arith.mulf %88, %89 : vector<8x64xf32>
    %91 = vector.extract_strided_slice %87 {offsets = [0, 64], sizes = [8, 64], strides = [1, 1]} : vector<8x192xf32> to vector<8x64xf32>
    %92 = vector.extract_strided_slice %87 {offsets = [0, 128], sizes = [8, 64], strides = [1, 1]} : vector<8x192xf32> to vector<8x64xf32>
    %93 = vector.extract_strided_slice %90 {offsets = [0, 0], sizes = [8, 16], strides = [1, 1]} : vector<8x64xf32> to vector<8x16xf32>
    %94 = arith.truncf %93 : vector<8x16xf32> to vector<8x16xbf16>
    %95 = vector.extract_strided_slice %91 {offsets = [0, 0], sizes = [8, 16], strides = [1, 1]} : vector<8x64xf32> to vector<8x16xf32>
    %96 = arith.truncf %95 : vector<8x16xf32> to vector<8x16xbf16>
    %97 = vector.extract_strided_slice %92 {offsets = [0, 0], sizes = [8, 16], strides = [1, 1]} : vector<8x64xf32> to vector<8x16xf32>
    %98 = arith.truncf %97 : vector<8x16xf32> to vector<8x16xbf16>
    %cst_56 = arith.constant dense<0.000000e+00> : vector<8x8xf32>
    %99 = tpu.matmul %94, %96, %cst_56 {dimension_numbers = #tpu.dot_dimension_numbers<[1], [1], [0], [0], [0, 0, 1, 0], [], []>} : vector<8x16xbf16>, vector<8x16xbf16>, vector<8x8xf32> -> vector<8x8xf32>
    %cst_57 = arith.constant -1.000000e+30 : f32
    %100 = vector.broadcast %cst_57 : f32 to vector<8x8xf32>
    %101 = arith.select %59, %99, %100 : vector<8x8xi1>, vector<8x8xf32>
    %cst_58 = arith.constant dense<0xFF800000> : vector<8xf32>
    %102 = vector.multi_reduction <maximumf>, %101, %cst_58 [1] : vector<8x8xf32> to vector<8xf32>
    %103 = vector.shape_cast %102 : vector<8xf32> to vector<8x1xf32>
    %104 = vector.broadcast %103 : vector<8x1xf32> to vector<8x8xf32>
    %105 = arith.subf %101, %104 : vector<8x8xf32>
    %106 = math.exp %105 : vector<8x8xf32>
    %cst_59 = arith.constant dense<0.000000e+00> : vector<8xf32>
    %107 = vector.multi_reduction <add>, %106, %cst_59 [1] : vector<8x8xf32> to vector<8xf32>
    %108 = vector.shape_cast %107 : vector<8xf32> to vector<8x1xf32>
    %109 = tpu.reciprocal %108 {approx = true} : vector<8x1xf32> -> vector<8x1xf32>
    %110 = vector.broadcast %109 : vector<8x1xf32> to vector<8x8xf32>
    %111 = arith.mulf %106, %110 : vector<8x8xf32>
    %112 = arith.truncf %111 : vector<8x8xf32> to vector<8x8xbf16>
    %cst_60 = arith.constant dense<0.000000e+00> : vector<8x16xf32>
    %113 = tpu.matmul %112, %98, %cst_60 {dimension_numbers = #tpu.dot_dimension_numbers<[1], [0], [0], [1], [0, 0, 1, 1], [], []>} : vector<8x8xbf16>, vector<8x16xbf16>, vector<8x16xf32> -> vector<8x16xf32>
    %c0_61 = arith.constant 0 : index
    %c0_62 = arith.constant 0 : index
    %114 = vector.load %arg33[%c0_61, %c0_62] : memref<8x64xf32, #tpu.memory_space<vmem>>, vector<8x16xf32>
    tpu.vector_store %arg33[%c0_61, %c0_62], %113 {strides = array<i32>} : memref<8x64xf32, #tpu.memory_space<vmem>>, vector<8x16xf32>,
    %115 = vector.extract_strided_slice %90 {offsets = [0, 16], sizes = [8, 16], strides = [1, 1]} : vector<8x64xf32> to vector<8x16xf32>
    %116 = arith.truncf %115 : vector<8x16xf32> to vector<8x16xbf16>
    %117 = vector.extract_strided_slice %91 {offsets = [0, 16], sizes = [8, 16], strides = [1, 1]} : vector<8x64xf32> to vector<8x16xf32>
    %118 = arith.truncf %117 : vector<8x16xf32> to vector<8x16xbf16>
    %119 = vector.extract_strided_slice %92 {offsets = [0, 16], sizes = [8, 16], strides = [1, 1]} : vector<8x64xf32> to vector<8x16xf32>
    %120 = arith.truncf %119 : vector<8x16xf32> to vector<8x16xbf16>
    %cst_63 = arith.constant dense<0.000000e+00> : vector<8x8xf32>
    %121 = tpu.matmul %116, %118, %cst_63 {dimension_numbers = #tpu.dot_dimension_numbers<[1], [1], [0], [0], [0, 0, 1, 0], [], []>} : vector<8x16xbf16>, vector<8x16xbf16>, vector<8x8xf32> -> vector<8x8xf32>
    %cst_64 = arith.constant -1.000000e+30 : f32
    %122 = vector.broadcast %cst_64 : f32 to vector<8x8xf32>
    %123 = arith.select %59, %121, %122 : vector<8x8xi1>, vector<8x8xf32>
    %cst_65 = arith.constant dense<0xFF800000> : vector<8xf32>
    %124 = vector.multi_reduction <maximumf>, %123, %cst_65 [1] : vector<8x8xf32> to vector<8xf32>
    %125 = vector.shape_cast %124 : vector<8xf32> to vector<8x1xf32>
    %126 = vector.broadcast %125 : vector<8x1xf32> to vector<8x8xf32>
    %127 = arith.subf %123, %126 : vector<8x8xf32>
    %128 = math.exp %127 : vector<8x8xf32>
    %cst_66 = arith.constant dense<0.000000e+00> : vector<8xf32>
    %129 = vector.multi_reduction <add>, %128, %cst_66 [1] : vector<8x8xf32> to vector<8xf32>
    %130 = vector.shape_cast %129 : vector<8xf32> to vector<8x1xf32>
    %131 = tpu.reciprocal %130 {approx = true} : vector<8x1xf32> -> vector<8x1xf32>
    %132 = vector.broadcast %131 : vector<8x1xf32> to vector<8x8xf32>
    %133 = arith.mulf %128, %132 : vector<8x8xf32>
    %134 = arith.truncf %133 : vector<8x8xf32> to vector<8x8xbf16>
    %cst_67 = arith.constant dense<0.000000e+00> : vector<8x16xf32>
    %135 = tpu.matmul %134, %120, %cst_67 {dimension_numbers = #tpu.dot_dimension_numbers<[1], [0], [0], [1], [0, 0, 1, 1], [], []>} : vector<8x8xbf16>, vector<8x16xbf16>, vector<8x16xf32> -> vector<8x16xf32>
    %c0_68 = arith.constant 0 : index
    %c16 = arith.constant 16 : index
    %136 = vector.load %arg33[%c0_68, %c16] : memref<8x64xf32, #tpu.memory_space<vmem>>, vector<8x16xf32>
    tpu.vector_store %arg33[%c0_68, %c16], %135 {strides = array<i32>} : memref<8x64xf32, #tpu.memory_space<vmem>>, vector<8x16xf32>,
    %137 = vector.extract_strided_slice %90 {offsets = [0, 32], sizes = [8, 16], strides = [1, 1]} : vector<8x64xf32> to vector<8x16xf32>
    %138 = arith.truncf %137 : vector<8x16xf32> to vector<8x16xbf16>
    %139 = vector.extract_strided_slice %91 {offsets = [0, 32], sizes = [8, 16], strides = [1, 1]} : vector<8x64xf32> to vector<8x16xf32>
    %140 = arith.truncf %139 : vector<8x16xf32> to vector<8x16xbf16>
    %141 = vector.extract_strided_slice %92 {offsets = [0, 32], sizes = [8, 16], strides = [1, 1]} : vector<8x64xf32> to vector<8x16xf32>
    %142 = arith.truncf %141 : vector<8x16xf32> to vector<8x16xbf16>
    %cst_69 = arith.constant dense<0.000000e+00> : vector<8x8xf32>
    %143 = tpu.matmul %138, %140, %cst_69 {dimension_numbers = #tpu.dot_dimension_numbers<[1], [1], [0], [0], [0, 0, 1, 0], [], []>} : vector<8x16xbf16>, vector<8x16xbf16>, vector<8x8xf32> -> vector<8x8xf32>
    %cst_70 = arith.constant -1.000000e+30 : f32
    %144 = vector.broadcast %cst_70 : f32 to vector<8x8xf32>
    %145 = arith.select %59, %143, %144 : vector<8x8xi1>, vector<8x8xf32>
    %cst_71 = arith.constant dense<0xFF800000> : vector<8xf32>
    %146 = vector.multi_reduction <maximumf>, %145, %cst_71 [1] : vector<8x8xf32> to vector<8xf32>
    %147 = vector.shape_cast %146 : vector<8xf32> to vector<8x1xf32>
    %148 = vector.broadcast %147 : vector<8x1xf32> to vector<8x8xf32>
    %149 = arith.subf %145, %148 : vector<8x8xf32>
    %150 = math.exp %149 : vector<8x8xf32>
    %cst_72 = arith.constant dense<0.000000e+00> : vector<8xf32>
    %151 = vector.multi_reduction <add>, %150, %cst_72 [1] : vector<8x8xf32> to vector<8xf32>
    %152 = vector.shape_cast %151 : vector<8xf32> to vector<8x1xf32>
    %153 = tpu.reciprocal %152 {approx = true} : vector<8x1xf32> -> vector<8x1xf32>
    %154 = vector.broadcast %153 : vector<8x1xf32> to vector<8x8xf32>
    %155 = arith.mulf %150, %154 : vector<8x8xf32>
    %156 = arith.truncf %155 : vector<8x8xf32> to vector<8x8xbf16>
    %cst_73 = arith.constant dense<0.000000e+00> : vector<8x16xf32>
    %157 = tpu.matmul %156, %142, %cst_73 {dimension_numbers = #tpu.dot_dimension_numbers<[1], [0], [0], [1], [0, 0, 1, 1], [], []>} : vector<8x8xbf16>, vector<8x16xbf16>, vector<8x16xf32> -> vector<8x16xf32>
    %c0_74 = arith.constant 0 : index
    %c32 = arith.constant 32 : index
    %158 = vector.load %arg33[%c0_74, %c32] : memref<8x64xf32, #tpu.memory_space<vmem>>, vector<8x16xf32>
    tpu.vector_store %arg33[%c0_74, %c32], %157 {strides = array<i32>} : memref<8x64xf32, #tpu.memory_space<vmem>>, vector<8x16xf32>,
    %159 = vector.extract_strided_slice %90 {offsets = [0, 48], sizes = [8, 16], strides = [1, 1]} : vector<8x64xf32> to vector<8x16xf32>
    %160 = arith.truncf %159 : vector<8x16xf32> to vector<8x16xbf16>
    %161 = vector.extract_strided_slice %91 {offsets = [0, 48], sizes = [8, 16], strides = [1, 1]} : vector<8x64xf32> to vector<8x16xf32>
    %162 = arith.truncf %161 : vector<8x16xf32> to vector<8x16xbf16>
    %163 = vector.extract_strided_slice %92 {offsets = [0, 48], sizes = [8, 16], strides = [1, 1]} : vector<8x64xf32> to vector<8x16xf32>
    %164 = arith.truncf %163 : vector<8x16xf32> to vector<8x16xbf16>
    %cst_75 = arith.constant dense<0.000000e+00> : vector<8x8xf32>
    %165 = tpu.matmul %160, %162, %cst_75 {dimension_numbers = #tpu.dot_dimension_numbers<[1], [1], [0], [0], [0, 0, 1, 0], [], []>} : vector<8x16xbf16>, vector<8x16xbf16>, vector<8x8xf32> -> vector<8x8xf32>
    %cst_76 = arith.constant -1.000000e+30 : f32
    %166 = vector.broadcast %cst_76 : f32 to vector<8x8xf32>
    %167 = arith.select %59, %165, %166 : vector<8x8xi1>, vector<8x8xf32>
    %cst_77 = arith.constant dense<0xFF800000> : vector<8xf32>
    %168 = vector.multi_reduction <maximumf>, %167, %cst_77 [1] : vector<8x8xf32> to vector<8xf32>
    %169 = vector.shape_cast %168 : vector<8xf32> to vector<8x1xf32>
    %170 = vector.broadcast %169 : vector<8x1xf32> to vector<8x8xf32>
    %171 = arith.subf %167, %170 : vector<8x8xf32>
    %172 = math.exp %171 : vector<8x8xf32>
    %cst_78 = arith.constant dense<0.000000e+00> : vector<8xf32>
    %173 = vector.multi_reduction <add>, %172, %cst_78 [1] : vector<8x8xf32> to vector<8xf32>
    %174 = vector.shape_cast %173 : vector<8xf32> to vector<8x1xf32>
    %175 = tpu.reciprocal %174 {approx = true} : vector<8x1xf32> -> vector<8x1xf32>
    %176 = vector.broadcast %175 : vector<8x1xf32> to vector<8x8xf32>
    %177 = arith.mulf %172, %176 : vector<8x8xf32>
    %178 = arith.truncf %177 : vector<8x8xf32> to vector<8x8xbf16>
    %cst_79 = arith.constant dense<0.000000e+00> : vector<8x16xf32>
    %179 = tpu.matmul %178, %164, %cst_79 {dimension_numbers = #tpu.dot_dimension_numbers<[1], [0], [0], [1], [0, 0, 1, 1], [], []>} : vector<8x8xbf16>, vector<8x16xbf16>, vector<8x16xf32> -> vector<8x16xf32>
    %c0_80 = arith.constant 0 : index
    %c48 = arith.constant 48 : index
    %180 = vector.load %arg33[%c0_80, %c48] : memref<8x64xf32, #tpu.memory_space<vmem>>, vector<8x16xf32>
    tpu.vector_store %arg33[%c0_80, %c48], %179 {strides = array<i32>} : memref<8x64xf32, #tpu.memory_space<vmem>>, vector<8x16xf32>,
    %c0_81 = arith.constant 0 : index
    %c0_82 = arith.constant 0 : index
    %181 = vector.load %arg33[%c0_81, %c0_82] : memref<8x64xf32, #tpu.memory_space<vmem>>, vector<8x64xf32>
    %c0_83 = arith.constant 0 : index
    %c0_84 = arith.constant 0 : index
    %182 = vector.load %arg8[%c0_83, %c0_84] : memref<64x64xbf16, #tpu.memory_space<vmem>>, vector<64x64xbf16>
    %183 = arith.truncf %181 : vector<8x64xf32> to vector<8x64xbf16>
    %cst_85 = arith.constant dense<0.000000e+00> : vector<8x64xf32>
    %184 = tpu.matmul %183, %182, %cst_85 {dimension_numbers = #tpu.dot_dimension_numbers<[1], [0], [0], [1], [0, 0, 1, 1], [], []>} : vector<8x64xbf16>, vector<64x64xbf16>, vector<8x64xf32> -> vector<8x64xf32>
    %185 = arith.addf %56, %184 : vector<8x64xf32>
    %c0_86 = arith.constant 0 : index
    %c0_87 = arith.constant 0 : index
    %186 = vector.load %arg9[%c0_86, %c0_87] : memref<1x64xf32, #tpu.memory_space<vmem>>, vector<1x64xf32>
    %187 = vector.broadcast %186 : vector<1x64xf32> to vector<8x64xf32>
    %188 = arith.addf %185, %187 : vector<8x64xf32>
    %c0_88 = arith.constant 0 : index
    %c0_89 = arith.constant 0 : index
    %189 = vector.load %arg10[%c0_88, %c0_89] : memref<1x64xf32, #tpu.memory_space<vmem>>, vector<1x64xf32>
    %c0_90 = arith.constant 0 : index
    %c0_91 = arith.constant 0 : index
    %190 = vector.load %arg11[%c0_90, %c0_91] : memref<1x64xf32, #tpu.memory_space<vmem>>, vector<1x64xf32>
    %cst_92 = arith.constant dense<0.000000e+00> : vector<8xf32>
    %191 = vector.multi_reduction <add>, %188, %cst_92 [1] : vector<8x64xf32> to vector<8xf32>
    %192 = vector.shape_cast %191 : vector<8xf32> to vector<8x1xf32>
    %cst_93 = arith.constant 6.400000e+01 : f32
    %193 = vector.broadcast %cst_93 : f32 to vector<8x1xf32>
    %194 = arith.divf %192, %193 : vector<8x1xf32>
    %195 = vector.broadcast %194 : vector<8x1xf32> to vector<8x64xf32>
    %196 = arith.subf %188, %195 : vector<8x64xf32>
    %197 = arith.mulf %196, %196 : vector<8x64xf32>
    %cst_94 = arith.constant dense<0.000000e+00> : vector<8xf32>
    %198 = vector.multi_reduction <add>, %197, %cst_94 [1] : vector<8x64xf32> to vector<8xf32>
    %199 = vector.shape_cast %198 : vector<8xf32> to vector<8x1xf32>
    %cst_95 = arith.constant 6.400000e+01 : f32
    %200 = vector.broadcast %cst_95 : f32 to vector<8x1xf32>
    %201 = arith.divf %199, %200 : vector<8x1xf32>
    %cst_96 = arith.constant 9.99999974E-6 : f32
    %202 = vector.broadcast %cst_96 : f32 to vector<8x1xf32>
    %203 = arith.addf %201, %202 : vector<8x1xf32>
    %204 = math.rsqrt %203 : vector<8x1xf32>
    %205 = vector.broadcast %204 : vector<8x1xf32> to vector<8x64xf32>
    %206 = arith.mulf %196, %205 : vector<8x64xf32>
    %207 = vector.broadcast %189 : vector<1x64xf32> to vector<8x64xf32>
    %208 = arith.mulf %206, %207 : vector<8x64xf32>
    %209 = vector.broadcast %190 : vector<1x64xf32> to vector<8x64xf32>
    %210 = arith.addf %208, %209 : vector<8x64xf32>
    %c0_97 = arith.constant 0 : index
    %c0_98 = arith.constant 0 : index
    %211 = vector.load %arg12[%c0_97, %c0_98] : memref<64x256xbf16, #tpu.memory_space<vmem>>, vector<64x256xbf16>
    %212 = arith.truncf %210 : vector<8x64xf32> to vector<8x64xbf16>
    %cst_99 = arith.constant dense<0.000000e+00> : vector<8x256xf32>
    %213 = tpu.matmul %212, %211, %cst_99 {dimension_numbers = #tpu.dot_dimension_numbers<[1], [0], [0], [1], [0, 0, 1, 1], [], []>} : vector<8x64xbf16>, vector<64x256xbf16>, vector<8x256xf32> -> vector<8x256xf32>
    %c0_100 = arith.constant 0 : index
    %c0_101 = arith.constant 0 : index
    %214 = vector.load %arg13[%c0_100, %c0_101] : memref<1x256xf32, #tpu.memory_space<vmem>>, vector<1x256xf32>
    %215 = vector.broadcast %214 : vector<1x256xf32> to vector<8x256xf32>
    %216 = arith.addf %213, %215 : vector<8x256xf32>
    %217 = arith.mulf %216, %216 : vector<8x256xf32>
    %218 = arith.mulf %216, %217 : vector<8x256xf32>
    %cst_102 = arith.constant 4.471500e-02 : f32
    %219 = vector.broadcast %cst_102 : f32 to vector<8x256xf32>
    %220 = arith.mulf %219, %218 : vector<8x256xf32>
    %221 = arith.addf %216, %220 : vector<8x256xf32>
    %cst_103 = arith.constant 0.797884583 : f32
    %222 = vector.broadcast %cst_103 : f32 to vector<8x256xf32>
    %223 = arith.mulf %222, %221 : vector<8x256xf32>
    %224 = math.tanh %223 : vector<8x256xf32>
    %cst_104 = arith.constant 1.000000e+00 : f32
    %225 = vector.broadcast %cst_104 : f32 to vector<8x256xf32>
    %226 = arith.addf %225, %224 : vector<8x256xf32>
    %cst_105 = arith.constant 5.000000e-01 : f32
    %227 = vector.broadcast %cst_105 : f32 to vector<8x256xf32>
    %228 = arith.mulf %227, %226 : vector<8x256xf32>
    %229 = arith.mulf %216, %228 : vector<8x256xf32>
    %c0_106 = arith.constant 0 : index
    %c0_107 = arith.constant 0 : index
    %230 = vector.load %arg14[%c0_106, %c0_107] : memref<256x64xbf16, #tpu.memory_space<vmem>>, vector<256x64xbf16>
    %231 = arith.truncf %229 : vector<8x256xf32> to vector<8x256xbf16>
    %cst_108 = arith.constant dense<0.000000e+00> : vector<8x64xf32>
    %232 = tpu.matmul %231, %230, %cst_108 {dimension_numbers = #tpu.dot_dimension_numbers<[1], [0], [0], [1], [0, 0, 1, 1], [], []>} : vector<8x256xbf16>, vector<256x64xbf16>, vector<8x64xf32> -> vector<8x64xf32>
    %233 = arith.addf %188, %232 : vector<8x64xf32>
    %c0_109 = arith.constant 0 : index
    %c0_110 = arith.constant 0 : index
    %234 = vector.load %arg15[%c0_109, %c0_110] : memref<1x64xf32, #tpu.memory_space<vmem>>, vector<1x64xf32>
    %235 = vector.broadcast %234 : vector<1x64xf32> to vector<8x64xf32>
    %236 = arith.addf %233, %235 : vector<8x64xf32>
    %c0_111 = arith.constant 0 : index
    %c0_112 = arith.constant 0 : index
    %237 = vector.load %arg16[%c0_111, %c0_112] : memref<1x64xf32, #tpu.memory_space<vmem>>, vector<1x64xf32>
    %c0_113 = arith.constant 0 : index
    %c0_114 = arith.constant 0 : index
    %238 = vector.load %arg17[%c0_113, %c0_114] : memref<1x64xf32, #tpu.memory_space<vmem>>, vector<1x64xf32>
    %cst_115 = arith.constant dense<0.000000e+00> : vector<8xf32>
    %239 = vector.multi_reduction <add>, %236, %cst_115 [1] : vector<8x64xf32> to vector<8xf32>
    %240 = vector.shape_cast %239 : vector<8xf32> to vector<8x1xf32>
    %cst_116 = arith.constant 6.400000e+01 : f32
    %241 = vector.broadcast %cst_116 : f32 to vector<8x1xf32>
    %242 = arith.divf %240, %241 : vector<8x1xf32>
    %243 = vector.broadcast %242 : vector<8x1xf32> to vector<8x64xf32>
    %244 = arith.subf %236, %243 : vector<8x64xf32>
    %245 = arith.mulf %244, %244 : vector<8x64xf32>
    %cst_117 = arith.constant dense<0.000000e+00> : vector<8xf32>
    %246 = vector.multi_reduction <add>, %245, %cst_117 [1] : vector<8x64xf32> to vector<8xf32>
    %247 = vector.shape_cast %246 : vector<8xf32> to vector<8x1xf32>
    %cst_118 = arith.constant 6.400000e+01 : f32
    %248 = vector.broadcast %cst_118 : f32 to vector<8x1xf32>
    %249 = arith.divf %247, %248 : vector<8x1xf32>
    %cst_119 = arith.constant 9.99999974E-6 : f32
    %250 = vector.broadcast %cst_119 : f32 to vector<8x1xf32>
    %251 = arith.addf %249, %250 : vector<8x1xf32>
    %252 = math.rsqrt %251 : vector<8x1xf32>
    %253 = vector.broadcast %252 : vector<8x1xf32> to vector<8x64xf32>
    %254 = arith.mulf %244, %253 : vector<8x64xf32>
    %255 = vector.broadcast %237 : vector<1x64xf32> to vector<8x64xf32>
    %256 = arith.mulf %254, %255 : vector<8x64xf32>
    %257 = vector.broadcast %238 : vector<1x64xf32> to vector<8x64xf32>
    %258 = arith.addf %256, %257 : vector<8x64xf32>
    %c0_120 = arith.constant 0 : index
    %c0_121 = arith.constant 0 : index
    %259 = vector.load %arg18[%c0_120, %c0_121] : memref<64x192xbf16, #tpu.memory_space<vmem>>, vector<64x192xbf16>
    %260 = arith.truncf %258 : vector<8x64xf32> to vector<8x64xbf16>
    %cst_122 = arith.constant dense<0.000000e+00> : vector<8x192xf32>
    %261 = tpu.matmul %260, %259, %cst_122 {dimension_numbers = #tpu.dot_dimension_numbers<[1], [0], [0], [1], [0, 0, 1, 1], [], []>} : vector<8x64xbf16>, vector<64x192xbf16>, vector<8x192xf32> -> vector<8x192xf32>
    %c0_123 = arith.constant 0 : index
    %c0_124 = arith.constant 0 : index
    %262 = vector.load %arg19[%c0_123, %c0_124] : memref<1x192xf32, #tpu.memory_space<vmem>>, vector<1x192xf32>
    %263 = vector.broadcast %262 : vector<1x192xf32> to vector<8x192xf32>
    %264 = arith.addf %261, %263 : vector<8x192xf32>
    %265 = vector.extract_strided_slice %264 {offsets = [0, 0], sizes = [8, 64], strides = [1, 1]} : vector<8x192xf32> to vector<8x64xf32>
    %cst_125 = arith.constant 2.500000e-01 : f32
    %266 = vector.broadcast %cst_125 : f32 to vector<8x64xf32>
    %267 = arith.mulf %265, %266 : vector<8x64xf32>
    %268 = vector.extract_strided_slice %264 {offsets = [0, 64], sizes = [8, 64], strides = [1, 1]} : vector<8x192xf32> to vector<8x64xf32>
    %269 = vector.extract_strided_slice %264 {offsets = [0, 128], sizes = [8, 64], strides = [1, 1]} : vector<8x192xf32> to vector<8x64xf32>
    %270 = vector.extract_strided_slice %267 {offsets = [0, 0], sizes = [8, 16], strides = [1, 1]} : vector<8x64xf32> to vector<8x16xf32>
    %271 = arith.truncf %270 : vector<8x16xf32> to vector<8x16xbf16>
    %272 = vector.extract_strided_slice %268 {offsets = [0, 0], sizes = [8, 16], strides = [1, 1]} : vector<8x64xf32> to vector<8x16xf32>
    %273 = arith.truncf %272 : vector<8x16xf32> to vector<8x16xbf16>
    %274 = vector.extract_strided_slice %269 {offsets = [0, 0], sizes = [8, 16], strides = [1, 1]} : vector<8x64xf32> to vector<8x16xf32>
    %275 = arith.truncf %274 : vector<8x16xf32> to vector<8x16xbf16>
    %cst_126 = arith.constant dense<0.000000e+00> : vector<8x8xf32>
    %276 = tpu.matmul %271, %273, %cst_126 {dimension_numbers = #tpu.dot_dimension_numbers<[1], [1], [0], [0], [0, 0, 1, 0], [], []>} : vector<8x16xbf16>, vector<8x16xbf16>, vector<8x8xf32> -> vector<8x8xf32>
    %cst_127 = arith.constant -1.000000e+30 : f32
    %277 = vector.broadcast %cst_127 : f32 to vector<8x8xf32>
    %278 = arith.select %59, %276, %277 : vector<8x8xi1>, vector<8x8xf32>
    %cst_128 = arith.constant dense<0xFF800000> : vector<8xf32>
    %279 = vector.multi_reduction <maximumf>, %278, %cst_128 [1] : vector<8x8xf32> to vector<8xf32>
    %280 = vector.shape_cast %279 : vector<8xf32> to vector<8x1xf32>
    %281 = vector.broadcast %280 : vector<8x1xf32> to vector<8x8xf32>
    %282 = arith.subf %278, %281 : vector<8x8xf32>
    %283 = math.exp %282 : vector<8x8xf32>
    %cst_129 = arith.constant dense<0.000000e+00> : vector<8xf32>
    %284 = vector.multi_reduction <add>, %283, %cst_129 [1] : vector<8x8xf32> to vector<8xf32>
    %285 = vector.shape_cast %284 : vector<8xf32> to vector<8x1xf32>
    %286 = tpu.reciprocal %285 {approx = true} : vector<8x1xf32> -> vector<8x1xf32>
    %287 = vector.broadcast %286 : vector<8x1xf32> to vector<8x8xf32>
    %288 = arith.mulf %283, %287 : vector<8x8xf32>
    %289 = arith.truncf %288 : vector<8x8xf32> to vector<8x8xbf16>
    %cst_130 = arith.constant dense<0.000000e+00> : vector<8x16xf32>
    %290 = tpu.matmul %289, %275, %cst_130 {dimension_numbers = #tpu.dot_dimension_numbers<[1], [0], [0], [1], [0, 0, 1, 1], [], []>} : vector<8x8xbf16>, vector<8x16xbf16>, vector<8x16xf32> -> vector<8x16xf32>
    %c0_131 = arith.constant 0 : index
    %c0_132 = arith.constant 0 : index
    %291 = vector.load %arg33[%c0_131, %c0_132] : memref<8x64xf32, #tpu.memory_space<vmem>>, vector<8x16xf32>
    tpu.vector_store %arg33[%c0_131, %c0_132], %290 {strides = array<i32>} : memref<8x64xf32, #tpu.memory_space<vmem>>, vector<8x16xf32>,
    %292 = vector.extract_strided_slice %267 {offsets = [0, 16], sizes = [8, 16], strides = [1, 1]} : vector<8x64xf32> to vector<8x16xf32>
    %293 = arith.truncf %292 : vector<8x16xf32> to vector<8x16xbf16>
    %294 = vector.extract_strided_slice %268 {offsets = [0, 16], sizes = [8, 16], strides = [1, 1]} : vector<8x64xf32> to vector<8x16xf32>
    %295 = arith.truncf %294 : vector<8x16xf32> to vector<8x16xbf16>
    %296 = vector.extract_strided_slice %269 {offsets = [0, 16], sizes = [8, 16], strides = [1, 1]} : vector<8x64xf32> to vector<8x16xf32>
    %297 = arith.truncf %296 : vector<8x16xf32> to vector<8x16xbf16>
    %cst_133 = arith.constant dense<0.000000e+00> : vector<8x8xf32>
    %298 = tpu.matmul %293, %295, %cst_133 {dimension_numbers = #tpu.dot_dimension_numbers<[1], [1], [0], [0], [0, 0, 1, 0], [], []>} : vector<8x16xbf16>, vector<8x16xbf16>, vector<8x8xf32> -> vector<8x8xf32>
    %cst_134 = arith.constant -1.000000e+30 : f32
    %299 = vector.broadcast %cst_134 : f32 to vector<8x8xf32>
    %300 = arith.select %59, %298, %299 : vector<8x8xi1>, vector<8x8xf32>
    %cst_135 = arith.constant dense<0xFF800000> : vector<8xf32>
    %301 = vector.multi_reduction <maximumf>, %300, %cst_135 [1] : vector<8x8xf32> to vector<8xf32>
    %302 = vector.shape_cast %301 : vector<8xf32> to vector<8x1xf32>
    %303 = vector.broadcast %302 : vector<8x1xf32> to vector<8x8xf32>
    %304 = arith.subf %300, %303 : vector<8x8xf32>
    %305 = math.exp %304 : vector<8x8xf32>
    %cst_136 = arith.constant dense<0.000000e+00> : vector<8xf32>
    %306 = vector.multi_reduction <add>, %305, %cst_136 [1] : vector<8x8xf32> to vector<8xf32>
    %307 = vector.shape_cast %306 : vector<8xf32> to vector<8x1xf32>
    %308 = tpu.reciprocal %307 {approx = true} : vector<8x1xf32> -> vector<8x1xf32>
    %309 = vector.broadcast %308 : vector<8x1xf32> to vector<8x8xf32>
    %310 = arith.mulf %305, %309 : vector<8x8xf32>
    %311 = arith.truncf %310 : vector<8x8xf32> to vector<8x8xbf16>
    %cst_137 = arith.constant dense<0.000000e+00> : vector<8x16xf32>
    %312 = tpu.matmul %311, %297, %cst_137 {dimension_numbers = #tpu.dot_dimension_numbers<[1], [0], [0], [1], [0, 0, 1, 1], [], []>} : vector<8x8xbf16>, vector<8x16xbf16>, vector<8x16xf32> -> vector<8x16xf32>
    %c0_138 = arith.constant 0 : index
    %c16_139 = arith.constant 16 : index
    %313 = vector.load %arg33[%c0_138, %c16_139] : memref<8x64xf32, #tpu.memory_space<vmem>>, vector<8x16xf32>
    tpu.vector_store %arg33[%c0_138, %c16_139], %312 {strides = array<i32>} : memref<8x64xf32, #tpu.memory_space<vmem>>, vector<8x16xf32>,
    %314 = vector.extract_strided_slice %267 {offsets = [0, 32], sizes = [8, 16], strides = [1, 1]} : vector<8x64xf32> to vector<8x16xf32>
    %315 = arith.truncf %314 : vector<8x16xf32> to vector<8x16xbf16>
    %316 = vector.extract_strided_slice %268 {offsets = [0, 32], sizes = [8, 16], strides = [1, 1]} : vector<8x64xf32> to vector<8x16xf32>
    %317 = arith.truncf %316 : vector<8x16xf32> to vector<8x16xbf16>
    %318 = vector.extract_strided_slice %269 {offsets = [0, 32], sizes = [8, 16], strides = [1, 1]} : vector<8x64xf32> to vector<8x16xf32>
    %319 = arith.truncf %318 : vector<8x16xf32> to vector<8x16xbf16>
    %cst_140 = arith.constant dense<0.000000e+00> : vector<8x8xf32>
    %320 = tpu.matmul %315, %317, %cst_140 {dimension_numbers = #tpu.dot_dimension_numbers<[1], [1], [0], [0], [0, 0, 1, 0], [], []>} : vector<8x16xbf16>, vector<8x16xbf16>, vector<8x8xf32> -> vector<8x8xf32>
    %cst_141 = arith.constant -1.000000e+30 : f32
    %321 = vector.broadcast %cst_141 : f32 to vector<8x8xf32>
    %322 = arith.select %59, %320, %321 : vector<8x8xi1>, vector<8x8xf32>
    %cst_142 = arith.constant dense<0xFF800000> : vector<8xf32>
    %323 = vector.multi_reduction <maximumf>, %322, %cst_142 [1] : vector<8x8xf32> to vector<8xf32>
    %324 = vector.shape_cast %323 : vector<8xf32> to vector<8x1xf32>
    %325 = vector.broadcast %324 : vector<8x1xf32> to vector<8x8xf32>
    %326 = arith.subf %322, %325 : vector<8x8xf32>
    %327 = math.exp %326 : vector<8x8xf32>
    %cst_143 = arith.constant dense<0.000000e+00> : vector<8xf32>
    %328 = vector.multi_reduction <add>, %327, %cst_143 [1] : vector<8x8xf32> to vector<8xf32>
    %329 = vector.shape_cast %328 : vector<8xf32> to vector<8x1xf32>
    %330 = tpu.reciprocal %329 {approx = true} : vector<8x1xf32> -> vector<8x1xf32>
    %331 = vector.broadcast %330 : vector<8x1xf32> to vector<8x8xf32>
    %332 = arith.mulf %327, %331 : vector<8x8xf32>
    %333 = arith.truncf %332 : vector<8x8xf32> to vector<8x8xbf16>
    %cst_144 = arith.constant dense<0.000000e+00> : vector<8x16xf32>
    %334 = tpu.matmul %333, %319, %cst_144 {dimension_numbers = #tpu.dot_dimension_numbers<[1], [0], [0], [1], [0, 0, 1, 1], [], []>} : vector<8x8xbf16>, vector<8x16xbf16>, vector<8x16xf32> -> vector<8x16xf32>
    %c0_145 = arith.constant 0 : index
    %c32_146 = arith.constant 32 : index
    %335 = vector.load %arg33[%c0_145, %c32_146] : memref<8x64xf32, #tpu.memory_space<vmem>>, vector<8x16xf32>
    tpu.vector_store %arg33[%c0_145, %c32_146], %334 {strides = array<i32>} : memref<8x64xf32, #tpu.memory_space<vmem>>, vector<8x16xf32>,
    %336 = vector.extract_strided_slice %267 {offsets = [0, 48], sizes = [8, 16], strides = [1, 1]} : vector<8x64xf32> to vector<8x16xf32>
    %337 = arith.truncf %336 : vector<8x16xf32> to vector<8x16xbf16>
    %338 = vector.extract_strided_slice %268 {offsets = [0, 48], sizes = [8, 16], strides = [1, 1]} : vector<8x64xf32> to vector<8x16xf32>
    %339 = arith.truncf %338 : vector<8x16xf32> to vector<8x16xbf16>
    %340 = vector.extract_strided_slice %269 {offsets = [0, 48], sizes = [8, 16], strides = [1, 1]} : vector<8x64xf32> to vector<8x16xf32>
    %341 = arith.truncf %340 : vector<8x16xf32> to vector<8x16xbf16>
    %cst_147 = arith.constant dense<0.000000e+00> : vector<8x8xf32>
    %342 = tpu.matmul %337, %339, %cst_147 {dimension_numbers = #tpu.dot_dimension_numbers<[1], [1], [0], [0], [0, 0, 1, 0], [], []>} : vector<8x16xbf16>, vector<8x16xbf16>, vector<8x8xf32> -> vector<8x8xf32>
    %cst_148 = arith.constant -1.000000e+30 : f32
    %343 = vector.broadcast %cst_148 : f32 to vector<8x8xf32>
    %344 = arith.select %59, %342, %343 : vector<8x8xi1>, vector<8x8xf32>
    %cst_149 = arith.constant dense<0xFF800000> : vector<8xf32>
    %345 = vector.multi_reduction <maximumf>, %344, %cst_149 [1] : vector<8x8xf32> to vector<8xf32>
    %346 = vector.shape_cast %345 : vector<8xf32> to vector<8x1xf32>
    %347 = vector.broadcast %346 : vector<8x1xf32> to vector<8x8xf32>
    %348 = arith.subf %344, %347 : vector<8x8xf32>
    %349 = math.exp %348 : vector<8x8xf32>
    %cst_150 = arith.constant dense<0.000000e+00> : vector<8xf32>
    %350 = vector.multi_reduction <add>, %349, %cst_150 [1] : vector<8x8xf32> to vector<8xf32>
    %351 = vector.shape_cast %350 : vector<8xf32> to vector<8x1xf32>
    %352 = tpu.reciprocal %351 {approx = true} : vector<8x1xf32> -> vector<8x1xf32>
    %353 = vector.broadcast %352 : vector<8x1xf32> to vector<8x8xf32>
    %354 = arith.mulf %349, %353 : vector<8x8xf32>
    %355 = arith.truncf %354 : vector<8x8xf32> to vector<8x8xbf16>
    %cst_151 = arith.constant dense<0.000000e+00> : vector<8x16xf32>
    %356 = tpu.matmul %355, %341, %cst_151 {dimension_numbers = #tpu.dot_dimension_numbers<[1], [0], [0], [1], [0, 0, 1, 1], [], []>} : vector<8x8xbf16>, vector<8x16xbf16>, vector<8x16xf32> -> vector<8x16xf32>
    %c0_152 = arith.constant 0 : index
    %c48_153 = arith.constant 48 : index
    %357 = vector.load %arg33[%c0_152, %c48_153] : memref<8x64xf32, #tpu.memory_space<vmem>>, vector<8x16xf32>
    tpu.vector_store %arg33[%c0_152, %c48_153], %356 {strides = array<i32>} : memref<8x64xf32, #tpu.memory_space<vmem>>, vector<8x16xf32>,
    %c0_154 = arith.constant 0 : index
    %c0_155 = arith.constant 0 : index
    %358 = vector.load %arg33[%c0_154, %c0_155] : memref<8x64xf32, #tpu.memory_space<vmem>>, vector<8x64xf32>
    %c0_156 = arith.constant 0 : index
    %c0_157 = arith.constant 0 : index
    %359 = vector.load %arg20[%c0_156, %c0_157] : memref<64x64xbf16, #tpu.memory_space<vmem>>, vector<64x64xbf16>
    %360 = arith.truncf %358 : vector<8x64xf32> to vector<8x64xbf16>
    %cst_158 = arith.constant dense<0.000000e+00> : vector<8x64xf32>
    %361 = tpu.matmul %360, %359, %cst_158 {dimension_numbers = #tpu.dot_dimension_numbers<[1], [0], [0], [1], [0, 0, 1, 1], [], []>} : vector<8x64xbf16>, vector<64x64xbf16>, vector<8x64xf32> -> vector<8x64xf32>
    %362 = arith.addf %236, %361 : vector<8x64xf32>
    %c0_159 = arith.constant 0 : index
    %c0_160 = arith.constant 0 : index
    %363 = vector.load %arg21[%c0_159, %c0_160] : memref<1x64xf32, #tpu.memory_space<vmem>>, vector<1x64xf32>
    %364 = vector.broadcast %363 : vector<1x64xf32> to vector<8x64xf32>
    %365 = arith.addf %362, %364 : vector<8x64xf32>
    %c0_161 = arith.constant 0 : index
    %c0_162 = arith.constant 0 : index
    %366 = vector.load %arg22[%c0_161, %c0_162] : memref<1x64xf32, #tpu.memory_space<vmem>>, vector<1x64xf32>
    %c0_163 = arith.constant 0 : index
    %c0_164 = arith.constant 0 : index
    %367 = vector.load %arg23[%c0_163, %c0_164] : memref<1x64xf32, #tpu.memory_space<vmem>>, vector<1x64xf32>
    %cst_165 = arith.constant dense<0.000000e+00> : vector<8xf32>
    %368 = vector.multi_reduction <add>, %365, %cst_165 [1] : vector<8x64xf32> to vector<8xf32>
    %369 = vector.shape_cast %368 : vector<8xf32> to vector<8x1xf32>
    %cst_166 = arith.constant 6.400000e+01 : f32
    %370 = vector.broadcast %cst_166 : f32 to vector<8x1xf32>
    %371 = arith.divf %369, %370 : vector<8x1xf32>
    %372 = vector.broadcast %371 : vector<8x1xf32> to vector<8x64xf32>
    %373 = arith.subf %365, %372 : vector<8x64xf32>
    %374 = arith.mulf %373, %373 : vector<8x64xf32>
    %cst_167 = arith.constant dense<0.000000e+00> : vector<8xf32>
    %375 = vector.multi_reduction <add>, %374, %cst_167 [1] : vector<8x64xf32> to vector<8xf32>
    %376 = vector.shape_cast %375 : vector<8xf32> to vector<8x1xf32>
    %cst_168 = arith.constant 6.400000e+01 : f32
    %377 = vector.broadcast %cst_168 : f32 to vector<8x1xf32>
    %378 = arith.divf %376, %377 : vector<8x1xf32>
    %cst_169 = arith.constant 9.99999974E-6 : f32
    %379 = vector.broadcast %cst_169 : f32 to vector<8x1xf32>
    %380 = arith.addf %378, %379 : vector<8x1xf32>
    %381 = math.rsqrt %380 : vector<8x1xf32>
    %382 = vector.broadcast %381 : vector<8x1xf32> to vector<8x64xf32>
    %383 = arith.mulf %373, %382 : vector<8x64xf32>
    %384 = vector.broadcast %366 : vector<1x64xf32> to vector<8x64xf32>
    %385 = arith.mulf %383, %384 : vector<8x64xf32>
    %386 = vector.broadcast %367 : vector<1x64xf32> to vector<8x64xf32>
    %387 = arith.addf %385, %386 : vector<8x64xf32>
    %c0_170 = arith.constant 0 : index
    %c0_171 = arith.constant 0 : index
    %388 = vector.load %arg24[%c0_170, %c0_171] : memref<64x256xbf16, #tpu.memory_space<vmem>>, vector<64x256xbf16>
    %389 = arith.truncf %387 : vector<8x64xf32> to vector<8x64xbf16>
    %cst_172 = arith.constant dense<0.000000e+00> : vector<8x256xf32>
    %390 = tpu.matmul %389, %388, %cst_172 {dimension_numbers = #tpu.dot_dimension_numbers<[1], [0], [0], [1], [0, 0, 1, 1], [], []>} : vector<8x64xbf16>, vector<64x256xbf16>, vector<8x256xf32> -> vector<8x256xf32>
    %c0_173 = arith.constant 0 : index
    %c0_174 = arith.constant 0 : index
    %391 = vector.load %arg25[%c0_173, %c0_174] : memref<1x256xf32, #tpu.memory_space<vmem>>, vector<1x256xf32>
    %392 = vector.broadcast %391 : vector<1x256xf32> to vector<8x256xf32>
    %393 = arith.addf %390, %392 : vector<8x256xf32>
    %394 = arith.mulf %393, %393 : vector<8x256xf32>
    %395 = arith.mulf %393, %394 : vector<8x256xf32>
    %cst_175 = arith.constant 4.471500e-02 : f32
    %396 = vector.broadcast %cst_175 : f32 to vector<8x256xf32>
    %397 = arith.mulf %396, %395 : vector<8x256xf32>
    %398 = arith.addf %393, %397 : vector<8x256xf32>
    %cst_176 = arith.constant 0.797884583 : f32
    %399 = vector.broadcast %cst_176 : f32 to vector<8x256xf32>
    %400 = arith.mulf %399, %398 : vector<8x256xf32>
    %401 = math.tanh %400 : vector<8x256xf32>
    %cst_177 = arith.constant 1.000000e+00 : f32
    %402 = vector.broadcast %cst_177 : f32 to vector<8x256xf32>
    %403 = arith.addf %402, %401 : vector<8x256xf32>
    %cst_178 = arith.constant 5.000000e-01 : f32
    %404 = vector.broadcast %cst_178 : f32 to vector<8x256xf32>
    %405 = arith.mulf %404, %403 : vector<8x256xf32>
    %406 = arith.mulf %393, %405 : vector<8x256xf32>
    %c0_179 = arith.constant 0 : index
    %c0_180 = arith.constant 0 : index
    %407 = vector.load %arg26[%c0_179, %c0_180] : memref<256x64xbf16, #tpu.memory_space<vmem>>, vector<256x64xbf16>
    %408 = arith.truncf %406 : vector<8x256xf32> to vector<8x256xbf16>
    %cst_181 = arith.constant dense<0.000000e+00> : vector<8x64xf32>
    %409 = tpu.matmul %408, %407, %cst_181 {dimension_numbers = #tpu.dot_dimension_numbers<[1], [0], [0], [1], [0, 0, 1, 1], [], []>} : vector<8x256xbf16>, vector<256x64xbf16>, vector<8x64xf32> -> vector<8x64xf32>
    %410 = arith.addf %365, %409 : vector<8x64xf32>
    %c0_182 = arith.constant 0 : index
    %c0_183 = arith.constant 0 : index
    %411 = vector.load %arg27[%c0_182, %c0_183] : memref<1x64xf32, #tpu.memory_space<vmem>>, vector<1x64xf32>
    %412 = vector.broadcast %411 : vector<1x64xf32> to vector<8x64xf32>
    %413 = arith.addf %410, %412 : vector<8x64xf32>
    %c0_184 = arith.constant 0 : index
    %c0_185 = arith.constant 0 : index
    %414 = vector.load %arg28[%c0_184, %c0_185] : memref<1x64xf32, #tpu.memory_space<vmem>>, vector<1x64xf32>
    %c0_186 = arith.constant 0 : index
    %c0_187 = arith.constant 0 : index
    %415 = vector.load %arg29[%c0_186, %c0_187] : memref<1x64xf32, #tpu.memory_space<vmem>>, vector<1x64xf32>
    %cst_188 = arith.constant dense<0.000000e+00> : vector<8xf32>
    %416 = vector.multi_reduction <add>, %413, %cst_188 [1] : vector<8x64xf32> to vector<8xf32>
    %417 = vector.shape_cast %416 : vector<8xf32> to vector<8x1xf32>
    %cst_189 = arith.constant 6.400000e+01 : f32
    %418 = vector.broadcast %cst_189 : f32 to vector<8x1xf32>
    %419 = arith.divf %417, %418 : vector<8x1xf32>
    %420 = vector.broadcast %419 : vector<8x1xf32> to vector<8x64xf32>
    %421 = arith.subf %413, %420 : vector<8x64xf32>
    %422 = arith.mulf %421, %421 : vector<8x64xf32>
    %cst_190 = arith.constant dense<0.000000e+00> : vector<8xf32>
    %423 = vector.multi_reduction <add>, %422, %cst_190 [1] : vector<8x64xf32> to vector<8xf32>
    %424 = vector.shape_cast %423 : vector<8xf32> to vector<8x1xf32>
    %cst_191 = arith.constant 6.400000e+01 : f32
    %425 = vector.broadcast %cst_191 : f32 to vector<8x1xf32>
    %426 = arith.divf %424, %425 : vector<8x1xf32>
    %cst_192 = arith.constant 9.99999974E-6 : f32
    %427 = vector.broadcast %cst_192 : f32 to vector<8x1xf32>
    %428 = arith.addf %426, %427 : vector<8x1xf32>
    %429 = math.rsqrt %428 : vector<8x1xf32>
    %430 = vector.broadcast %429 : vector<8x1xf32> to vector<8x64xf32>
    %431 = arith.mulf %421, %430 : vector<8x64xf32>
    %432 = vector.broadcast %414 : vector<1x64xf32> to vector<8x64xf32>
    %433 = arith.mulf %431, %432 : vector<8x64xf32>
    %434 = vector.broadcast %415 : vector<1x64xf32> to vector<8x64xf32>
    %435 = arith.addf %433, %434 : vector<8x64xf32>
    %c0_193 = arith.constant 0 : index
    %c0_194 = arith.constant 0 : index
    %436 = vector.load %arg30[%c0_193, %c0_194] : memref<64x128xbf16, #tpu.memory_space<vmem>>, vector<64x128xbf16>
    %437 = arith.truncf %435 : vector<8x64xf32> to vector<8x64xbf16>
    %cst_195 = arith.constant dense<0.000000e+00> : vector<8x128xf32>
    %438 = tpu.matmul %437, %436, %cst_195 {dimension_numbers = #tpu.dot_dimension_numbers<[1], [0], [0], [1], [0, 0, 1, 1], [], []>} : vector<8x64xbf16>, vector<64x128xbf16>, vector<8x128xf32> -> vector<8x128xf32>
    %c0_196 = arith.constant 0 : index
    %c0_197 = arith.constant 0 : index
    %c0_198 = arith.constant 0 : index
    %439 = vector.load %arg31[%c0_196, %c0_197, %c0_198] : memref<1x8x128xf32, #tpu.memory_space<vmem>>, vector<1x8x128xf32>
    %440 = vector.shape_cast %439 : vector<1x8x128xf32> to vector<8x128xf32>
    %441 = vector.shape_cast %438 : vector<8x128xf32> to vector<1x8x128xf32>
    tpu.vector_store %arg31[%c0_196, %c0_197, %c0_198], %441 {strides = array<i32>} : memref<1x8x128xf32, #tpu.memory_space<vmem>>, vector<1x8x128xf32>,
    return
  }
  func.func @transform_0(%arg0: i32, %arg1: memref<2x8xi32, #tpu.memory_space<smem>>) -> (i32, i32) {
    %c0_i32 = arith.constant 0 : i32
    %c0_i32_0 = arith.constant 0 : i32
    %c0_i32_1 = arith.constant 0 : i32
    return %c0_i32, %c0_i32_0 : i32, i32
  }
  func.func @transform_1(%arg0: i32, %arg1: memref<2x8xi32, #tpu.memory_space<smem>>) -> (i32, i32) {
    %c0_i32 = arith.constant 0 : i32
    %c0_i32_0 = arith.constant 0 : i32
    %c0_i32_1 = arith.constant 0 : i32
    return %c0_i32, %c0_i32_0 : i32, i32
  }
  func.func @transform_2(%arg0: i32, %arg1: memref<2x8xi32, #tpu.memory_space<smem>>) -> (i32, i32) {
    %c0_i32 = arith.constant 0 : i32
    %c0_i32_0 = arith.constant 0 : i32
    %c0_i32_1 = arith.constant 0 : i32
    return %c0_i32, %c0_i32_0 : i32, i32
  }
  func.func @transform_3(%arg0: i32, %arg1: memref<2x8xi32, #tpu.memory_space<smem>>) -> (i32, i32) {
    %c0_i32 = arith.constant 0 : i32
    %c0_i32_0 = arith.constant 0 : i32
    %c0_i32_1 = arith.constant 0 : i32
    return %c0_i32, %c0_i32_0 : i32, i32
  }
  func.func @transform_4(%arg0: i32, %arg1: memref<2x8xi32, #tpu.memory_space<smem>>) -> (i32, i32) {
    %c0_i32 = arith.constant 0 : i32
    %c0_i32_0 = arith.constant 0 : i32
    %c0_i32_1 = arith.constant 0 : i32
    return %c0_i32, %c0_i32_0 : i32, i32
  }
  func.func @transform_5(%arg0: i32, %arg1: memref<2x8xi32, #tpu.memory_space<smem>>) -> (i32, i32) {
    %c0_i32 = arith.constant 0 : i32
    %c0_i32_0 = arith.constant 0 : i32
    %c0_i32_1 = arith.constant 0 : i32
    return %c0_i32, %c0_i32_0 : i32, i32
  }
  func.func @transform_6(%arg0: i32, %arg1: memref<2x8xi32, #tpu.memory_space<smem>>) -> (i32, i32) {
    %c0_i32 = arith.constant 0 : i32
    %c0_i32_0 = arith.constant 0 : i32
    %c0_i32_1 = arith.constant 0 : i32
    return %c0_i32, %c0_i32_0 : i32, i32
  }
  func.func @transform_7(%arg0: i32, %arg1: memref<2x8xi32, #tpu.memory_space<smem>>) -> (i32, i32) {
    %c0_i32 = arith.constant 0 : i32
    %c0_i32_0 = arith.constant 0 : i32
    %c0_i32_1 = arith.constant 0 : i32
    return %c0_i32, %c0_i32_0 : i32, i32
  }
  func.func @transform_8(%arg0: i32, %arg1: memref<2x8xi32, #tpu.memory_space<smem>>) -> (i32, i32) {
    %c0_i32 = arith.constant 0 : i32
    %c0_i32_0 = arith.constant 0 : i32
    %c0_i32_1 = arith.constant 0 : i32
    return %c0_i32, %c0_i32_0 : i32, i32
  }
  func.func @transform_9(%arg0: i32, %arg1: memref<2x8xi32, #tpu.memory_space<smem>>) -> (i32, i32) {
    %c0_i32 = arith.constant 0 : i32
    %c0_i32_0 = arith.constant 0 : i32
    %c0_i32_1 = arith.constant 0 : i32
    return %c0_i32, %c0_i32_0 : i32, i32
  }
  func.func @transform_10(%arg0: i32, %arg1: memref<2x8xi32, #tpu.memory_space<smem>>) -> (i32, i32) {
    %c0_i32 = arith.constant 0 : i32
    %c0_i32_0 = arith.constant 0 : i32
    %c0_i32_1 = arith.constant 0 : i32
    return %c0_i32, %c0_i32_0 : i32, i32
  }
  func.func @transform_11(%arg0: i32, %arg1: memref<2x8xi32, #tpu.memory_space<smem>>) -> (i32, i32) {
    %c0_i32 = arith.constant 0 : i32
    %c0_i32_0 = arith.constant 0 : i32
    %c0_i32_1 = arith.constant 0 : i32
    return %c0_i32, %c0_i32_0 : i32, i32
  }
  func.func @transform_12(%arg0: i32, %arg1: memref<2x8xi32, #tpu.memory_space<smem>>) -> (i32, i32) {
    %c0_i32 = arith.constant 0 : i32
    %c0_i32_0 = arith.constant 0 : i32
    %c0_i32_1 = arith.constant 0 : i32
    return %c0_i32, %c0_i32_0 : i32, i32
  }
  func.func @transform_13(%arg0: i32, %arg1: memref<2x8xi32, #tpu.memory_space<smem>>) -> (i32, i32) {
    %c0_i32 = arith.constant 0 : i32
    %c0_i32_0 = arith.constant 0 : i32
    %c0_i32_1 = arith.constant 0 : i32
    return %c0_i32, %c0_i32_0 : i32, i32
  }
  func.func @transform_14(%arg0: i32, %arg1: memref<2x8xi32, #tpu.memory_space<smem>>) -> (i32, i32) {
    %c0_i32 = arith.constant 0 : i32
    %c0_i32_0 = arith.constant 0 : i32
    %c0_i32_1 = arith.constant 0 : i32
    return %c0_i32, %c0_i32_0 : i32, i32
  }
  func.func @transform_15(%arg0: i32, %arg1: memref<2x8xi32, #tpu.memory_space<smem>>) -> (i32, i32) {
    %c0_i32 = arith.constant 0 : i32
    %c0_i32_0 = arith.constant 0 : i32
    %c0_i32_1 = arith.constant 0 : i32
    return %c0_i32, %c0_i32_0 : i32, i32
  }
  func.func @transform_16(%arg0: i32, %arg1: memref<2x8xi32, #tpu.memory_space<smem>>) -> (i32, i32) {
    %c0_i32 = arith.constant 0 : i32
    %c0_i32_0 = arith.constant 0 : i32
    %c0_i32_1 = arith.constant 0 : i32
    return %c0_i32, %c0_i32_0 : i32, i32
  }
  func.func @transform_17(%arg0: i32, %arg1: memref<2x8xi32, #tpu.memory_space<smem>>) -> (i32, i32) {
    %c0_i32 = arith.constant 0 : i32
    %c0_i32_0 = arith.constant 0 : i32
    %c0_i32_1 = arith.constant 0 : i32
    return %c0_i32, %c0_i32_0 : i32, i32
  }
  func.func @transform_18(%arg0: i32, %arg1: memref<2x8xi32, #tpu.memory_space<smem>>) -> (i32, i32) {
    %c0_i32 = arith.constant 0 : i32
    %c0_i32_0 = arith.constant 0 : i32
    %c0_i32_1 = arith.constant 0 : i32
    return %c0_i32, %c0_i32_0 : i32, i32
  }
  func.func @transform_19(%arg0: i32, %arg1: memref<2x8xi32, #tpu.memory_space<smem>>) -> (i32, i32) {
    %c0_i32 = arith.constant 0 : i32
    %c0_i32_0 = arith.constant 0 : i32
    %c0_i32_1 = arith.constant 0 : i32
    return %c0_i32, %c0_i32_0 : i32, i32
  }
  func.func @transform_20(%arg0: i32, %arg1: memref<2x8xi32, #tpu.memory_space<smem>>) -> (i32, i32) {
    %c0_i32 = arith.constant 0 : i32
    %c0_i32_0 = arith.constant 0 : i32
    %c0_i32_1 = arith.constant 0 : i32
    return %c0_i32, %c0_i32_0 : i32, i32
  }
  func.func @transform_21(%arg0: i32, %arg1: memref<2x8xi32, #tpu.memory_space<smem>>) -> (i32, i32) {
    %c0_i32 = arith.constant 0 : i32
    %c0_i32_0 = arith.constant 0 : i32
    %c0_i32_1 = arith.constant 0 : i32
    return %c0_i32, %c0_i32_0 : i32, i32
  }
  func.func @transform_22(%arg0: i32, %arg1: memref<2x8xi32, #tpu.memory_space<smem>>) -> (i32, i32) {
    %c0_i32 = arith.constant 0 : i32
    %c0_i32_0 = arith.constant 0 : i32
    %c0_i32_1 = arith.constant 0 : i32
    return %c0_i32, %c0_i32_0 : i32, i32
  }
  func.func @transform_23(%arg0: i32, %arg1: memref<2x8xi32, #tpu.memory_space<smem>>) -> (i32, i32) {
    %c0_i32 = arith.constant 0 : i32
    %c0_i32_0 = arith.constant 0 : i32
    %c0_i32_1 = arith.constant 0 : i32
    return %c0_i32, %c0_i32_0 : i32, i32
  }
  func.func @transform_24(%arg0: i32, %arg1: memref<2x8xi32, #tpu.memory_space<smem>>) -> (i32, i32) {
    %c0_i32 = arith.constant 0 : i32
    %c0_i32_0 = arith.constant 0 : i32
    %c0_i32_1 = arith.constant 0 : i32
    return %c0_i32, %c0_i32_0 : i32, i32
  }
  func.func @transform_25(%arg0: i32, %arg1: memref<2x8xi32, #tpu.memory_space<smem>>) -> (i32, i32) {
    %c0_i32 = arith.constant 0 : i32
    %c0_i32_0 = arith.constant 0 : i32
    %c0_i32_1 = arith.constant 0 : i32
    return %c0_i32, %c0_i32_0 : i32, i32
  }
  func.func @transform_26(%arg0: i32, %arg1: memref<2x8xi32, #tpu.memory_space<smem>>) -> (i32, i32) {
    %c0_i32 = arith.constant 0 : i32
    %c0_i32_0 = arith.constant 0 : i32
    %c0_i32_1 = arith.constant 0 : i32
    return %c0_i32, %c0_i32_0 : i32, i32
  }
  func.func @transform_27(%arg0: i32, %arg1: memref<2x8xi32, #tpu.memory_space<smem>>) -> (i32, i32) {
    %c0_i32 = arith.constant 0 : i32
    %c0_i32_0 = arith.constant 0 : i32
    %c0_i32_1 = arith.constant 0 : i32
    return %c0_i32, %c0_i32_0 : i32, i32
  }
  func.func @transform_28(%arg0: i32, %arg1: memref<2x8xi32, #tpu.memory_space<smem>>) -> (i32, i32) {
    %c0_i32 = arith.constant 0 : i32
    %c0_i32_0 = arith.constant 0 : i32
    %c0_i32_1 = arith.constant 0 : i32
    return %c0_i32, %c0_i32_0 : i32, i32
  }
  func.func @transform_29(%arg0: i32, %arg1: memref<2x8xi32, #tpu.memory_space<smem>>) -> (i32, i32, i32) {
    %c0_i32 = arith.constant 0 : i32
    %c0_i32_0 = arith.constant 0 : i32
    %c0_i32_1 = arith.constant 0 : i32
    return %arg0, %c0_i32, %c0_i32_0 : i32, i32, i32
  }
}

</mosaic_0001>

<llo_original>
// kernel: tpu_custom_call.1
$region0: #{tpu_custom_call.1}
  #allocation0 [shape = 'u32[]', space=smem, size = 0x4, offset = 0x4, fixed_abs, tag = 'smem constant byte address 0x4 - core index']
  #allocation1 [shape = 'u32[144,128]{1,0:T(1,128)}', space=vmem, size = 0x12000, scoped, tag = 'internal scratch']
  #allocation2 [shape = 'f32[8,64]{1,0:T(8,128)}', space=vmem, size = 0x1000, scoped, tag = 'scratch operand']
  #allocation3 [shape = 'f32[8,64]{1,0:T(8,128)}', space=vmem, size = 0x1000, scoped, tag = 'scratch operand']
  #allocation4 [shape = 's32[1]{0}', space=sflag, size = 0x4, scoped, tag = 'scoped memory for tpu_custom_call.1']
  #allocation5 [shape = 'u8[1024]{0}', space=smem, size = 0x400, scoped, tag = 'prefetched SMEM operand 0']
  %s0 = inlined_call_operand.smem [shape: u32[31], index: -1, kind: input, shape index: {}]
  %s1 = sld [smem:[%s0]]
  %s2 = scalar_lea.smem %s0, 1
  %s3 = sld [smem:[%s2]]
  %s4 = scalar_lea.smem %s0, 2
  %s5 = sld [smem:[%s4]]
  %s6 = scalar_lea.smem %s0, 3
  %s7 = sld [smem:[%s6]]
  %s8 = scalar_lea.smem %s0, 4
  %s9 = sld [smem:[%s8]]
  %s10 = scalar_lea.smem %s0, 5
  %s11 = sld [smem:[%s10]]
  %s12 = scalar_lea.smem %s0, 6
  %s13 = sld [smem:[%s12]]
  %s14 = scalar_lea.smem %s0, 7
  %s15 = sld [smem:[%s14]]
  %s16 = scalar_lea.smem %s0, 8
  %s17 = sld [smem:[%s16]]
  %s18 = scalar_lea.smem %s0, 9
  %s19 = sld [smem:[%s18]]
  %s20 = scalar_lea.smem %s0, 10
  %s21 = sld [smem:[%s20]]
  %s22 = scalar_lea.smem %s0, 11
  %s23 = sld [smem:[%s22]]
  %s24 = scalar_lea.smem %s0, 12
  %s25 = sld [smem:[%s24]]
  %s26 = scalar_lea.smem %s0, 13
  %s27 = sld [smem:[%s26]]
  %s28 = scalar_lea.smem %s0, 14
  %s29 = sld [smem:[%s28]]
  %s30 = scalar_lea.smem %s0, 15
  %s31 = sld [smem:[%s30]]
  %s32 = scalar_lea.smem %s0, 16
  %s33 = sld [smem:[%s32]]
  %s34 = scalar_lea.smem %s0, 17
  %s35 = sld [smem:[%s34]]
  %s36 = scalar_lea.smem %s0, 18
  %s37 = sld [smem:[%s36]]
  %s38 = scalar_lea.smem %s0, 19
  %s39 = sld [smem:[%s38]]
  %s40 = scalar_lea.smem %s0, 20
  %s41 = sld [smem:[%s40]]
  %s42 = scalar_lea.smem %s0, 21
  %s43 = sld [smem:[%s42]]
  %s44 = scalar_lea.smem %s0, 22
  %s45 = sld [smem:[%s44]]
  %s46 = scalar_lea.smem %s0, 23
  %s47 = sld [smem:[%s46]]
  %s48 = scalar_lea.smem %s0, 24
  %s49 = sld [smem:[%s48]]
  %s50 = scalar_lea.smem %s0, 25
  %s51 = sld [smem:[%s50]]
  %s52 = scalar_lea.smem %s0, 26
  %s53 = sld [smem:[%s52]]
  %s54 = scalar_lea.smem %s0, 27
  %s55 = sld [smem:[%s54]]
  %s56 = scalar_lea.smem %s0, 28
  %s57 = sld [smem:[%s56]]
  %s58 = scalar_lea.smem %s0, 29
  %s59 = sld [smem:[%s58]]
  %s60 = scalar_lea.smem %s0, 30
  %s61 = sld [smem:[%s60]]
  %s62 = sld [smem:[#allocation0]]
  $region149: #{tpu_custom_call.1} parent=0
    _
  %s64 = ssub.s32 1, %s62
  %s65 = scalar_select 0, %s64, %s62
  %s66 = sshll.u32 %s1, 4
  %s67 = int_to_ptr.vmem [resolvable:$true] %s66
  %69 = dma.vmem_to_smem %s67, 32, [#allocation5], [#allocation4]
  %70 = dma.done [#allocation4], 32
  %71 = sfence
  $region1: #{tpu_custom_call.1} parent=0
    #allocation6 [shape = 'u8[8192]{0}', space=vmem, size = 0x2000, scoped, tag = 'output window, operand 0']
    #allocation7 [shape = 's32[2]{0}', space=sflag, size = 0x8, scoped, tag = 'scoped memory for tpu_custom_call.1']
    %72 = vsyncpa [#allocation7], 0
    %s73 = scalar_lea.sflag [#allocation7], 1
    %74 = vsyncpa %s73, 0
    loop: start=0, step=1, limit=4
    $region2: #{tpu_custom_call.1} parent=1 // loop_pre_header
      _
    $region3: #{tpu_custom_call.1} parent=1 // loop_header
      %s76 = sphi 0, %s80
      %p77 = scmp.ge.s32.totalorder %s76, 4
      %s84 = sphi 0, %s84
      %s86 = sphi 0, %s84
      %s87 = sphi 0, %s86
      %s101 = sphi 0, %s87
      %s105 = sphi 0, %s105
      %s107 = sphi 0, %s105
      %s108 = sphi 0, %s107
      %s122 = sphi 0, %s108
      %s126 = sphi 0, %s126
      %s128 = sphi 0, %s126
      %s129 = sphi 0, %s128
      %s143 = sphi 0, %s129
      %s147 = sphi 0, %s147
      %s149 = sphi 0, %s147
      %s150 = sphi 0, %s149
      %s164 = sphi 0, %s150
      %s168 = sphi 0, %s168
      %s170 = sphi 0, %s168
      %s171 = sphi 0, %s170
      %s185 = sphi 0, %s171
      %s189 = sphi 0, %s189
      %s191 = sphi 0, %s189
      %s192 = sphi 0, %s191
      %s206 = sphi 0, %s192
      %s210 = sphi 0, %s210
      %s212 = sphi 0, %s210
      %s213 = sphi 0, %s212
      %s227 = sphi 0, %s213
      %s231 = sphi 0, %s231
      %s233 = sphi 0, %s231
      %s234 = sphi 0, %s233
      %s248 = sphi 0, %s234
      %s252 = sphi 0, %s252
      %s254 = sphi 0, %s252
      %s255 = sphi 0, %s254
      %s269 = sphi 0, %s255
      %s273 = sphi 0, %s273
      %s275 = sphi 0, %s273
      %s276 = sphi 0, %s275
      %s290 = sphi 0, %s276
      %s294 = sphi 0, %s294
      %s296 = sphi 0, %s294
      %s297 = sphi 0, %s296
      %s311 = sphi 0, %s297
      %s315 = sphi 0, %s315
      %s317 = sphi 0, %s315
      %s318 = sphi 0, %s317
      %s332 = sphi 0, %s318
      %s336 = sphi 0, %s336
      %s338 = sphi 0, %s336
      %s339 = sphi 0, %s338
      %s353 = sphi 0, %s339
      %s357 = sphi 0, %s357
      %s359 = sphi 0, %s357
      %s360 = sphi 0, %s359
      %s374 = sphi 0, %s360
      %s378 = sphi 0, %s378
      %s380 = sphi 0, %s378
      %s381 = sphi 0, %s380
      %s395 = sphi 0, %s381
      %s399 = sphi 0, %s399
      %s401 = sphi 0, %s399
      %s402 = sphi 0, %s401
      %s416 = sphi 0, %s402
      %s420 = sphi 0, %s420
      %s422 = sphi 0, %s420
      %s423 = sphi 0, %s422
      %s437 = sphi 0, %s423
      %s441 = sphi 0, %s441
      %s443 = sphi 0, %s441
      %s444 = sphi 0, %s443
      %s458 = sphi 0, %s444
      %s462 = sphi 0, %s462
      %s464 = sphi 0, %s462
      %s465 = sphi 0, %s464
      %s479 = sphi 0, %s465
      %s483 = sphi 0, %s483
      %s485 = sphi 0, %s483
      %s486 = sphi 0, %s485
      %s500 = sphi 0, %s486
      %s504 = sphi 0, %s504
      %s506 = sphi 0, %s504
      %s507 = sphi 0, %s506
      %s521 = sphi 0, %s507
      %s525 = sphi 0, %s525
      %s527 = sphi 0, %s525
      %s528 = sphi 0, %s527
      %s542 = sphi 0, %s528
      %s546 = sphi 0, %s546
      %s548 = sphi 0, %s546
      %s549 = sphi 0, %s548
      %s563 = sphi 0, %s549
      %s567 = sphi 0, %s567
      %s569 = sphi 0, %s567
      %s570 = sphi 0, %s569
      %s584 = sphi 0, %s570
      %s588 = sphi 0, %s588
      %s590 = sphi 0, %s588
      %s591 = sphi 0, %s590
      %s605 = sphi 0, %s591
      %s609 = sphi 0, %s609
      %s611 = sphi 0, %s609
      %s612 = sphi 0, %s611
      %s626 = sphi 0, %s612
      %s630 = sphi 0, %s630
      %s632 = sphi 0, %s630
      %s633 = sphi 0, %s632
      %s647 = sphi 0, %s633
      %s651 = sphi 0, %s651
      %s653 = sphi 0, %s651
      %s654 = sphi 0, %s653
      %s668 = sphi 0, %s654
      %s672 = sphi 0, %s672
      %s674 = sphi 0, %s672
      %s675 = sphi 0, %s674
      %s689 = sphi 0, %s675
      %s695 = sphi 0, %s697
      %s698 = sphi 0, %s695
      %s699 = sphi 0, %s698
      %s715 = sphi 0, %s699
    $region4: #{tpu_custom_call.1} parent=1 // loop_header_branch
      %79 = sbr.rel (%p77) target = $region8
    $region5: #{tpu_custom_call.1} parent=1 // loop_body
      %s81 = ssub.s32 %s76, 1
      %s82 = ssub.s32 %s76, 2
      %s83 = sadd.s32 %s76, 1
      %s85 = sadd.s32 %s84, 1
      %p88 = scmp.eq.s32.totalorder %s76, 1
      %p89 = scmp.ne.s32.totalorder %s84, %s86
      %p90 = scmp.eq.s32.totalorder %s76, 0
      %p91 = por %p89, %p90
      %p92 = scmp.ne.s32.totalorder %s84, %s86
      %p93 = scmp.eq.s32.totalorder %s81, 1
      %p94 = por %p92, %p93
      %p95 = scmp.ne.s32.totalorder %s86, %s87
      %p96 = scmp.eq.s32.totalorder %s81, 0
      %p97 = por %p95, %p96
      %p98 = scmp.ne.s32.totalorder %s86, %s87
      %p99 = scmp.eq.s32.totalorder %s82, 1
      %p100 = por %p98, %p99
      %p102 = scmp.ne.s32.totalorder %s87, %s101
      %p103 = scmp.eq.s32.totalorder %s82, 0
      %p104 = por %p102, %p103
      %s106 = sadd.s32 %s105, 1
      %p109 = scmp.eq.s32.totalorder %s76, 1
      %p110 = scmp.ne.s32.totalorder %s105, %s107
      %p111 = scmp.eq.s32.totalorder %s76, 0
      %p112 = por %p110, %p111
      %p113 = scmp.ne.s32.totalorder %s105, %s107
      %p114 = scmp.eq.s32.totalorder %s81, 1
      %p115 = por %p113, %p114
      %p116 = scmp.ne.s32.totalorder %s107, %s108
      %p117 = scmp.eq.s32.totalorder %s81, 0
      %p118 = por %p116, %p117
      %p119 = scmp.ne.s32.totalorder %s107, %s108
      %p120 = scmp.eq.s32.totalorder %s82, 1
      %p121 = por %p119, %p120
      %p123 = scmp.ne.s32.totalorder %s108, %s122
      %p124 = scmp.eq.s32.totalorder %s82, 0
      %p125 = por %p123, %p124
      %s127 = sadd.s32 %s126, 1
      %p130 = scmp.eq.s32.totalorder %s76, 1
      %p131 = scmp.ne.s32.totalorder %s126, %s128
      %p132 = scmp.eq.s32.totalorder %s76, 0
      %p133 = por %p131, %p132
      %p134 = scmp.ne.s32.totalorder %s126, %s128
      %p135 = scmp.eq.s32.totalorder %s81, 1
      %p136 = por %p134, %p135
      %p137 = scmp.ne.s32.totalorder %s128, %s129
      %p138 = scmp.eq.s32.totalorder %s81, 0
      %p139 = por %p137, %p138
      %p140 = scmp.ne.s32.totalorder %s128, %s129
      %p141 = scmp.eq.s32.totalorder %s82, 1
      %p142 = por %p140, %p141
      %p144 = scmp.ne.s32.totalorder %s129, %s143
      %p145 = scmp.eq.s32.totalorder %s82, 0
      %p146 = por %p144, %p145
      %s148 = sadd.s32 %s147, 1
      %p151 = scmp.eq.s32.totalorder %s76, 1
      %p152 = scmp.ne.s32.totalorder %s147, %s149
      %p153 = scmp.eq.s32.totalorder %s76, 0
      %p154 = por %p152, %p153
      %p155 = scmp.ne.s32.totalorder %s147, %s149
      %p156 = scmp.eq.s32.totalorder %s81, 1
      %p157 = por %p155, %p156
      %p158 = scmp.ne.s32.totalorder %s149, %s150
      %p159 = scmp.eq.s32.totalorder %s81, 0
      %p160 = por %p158, %p159
      %p161 = scmp.ne.s32.totalorder %s149, %s150
      %p162 = scmp.eq.s32.totalorder %s82, 1
      %p163 = por %p161, %p162
      %p165 = scmp.ne.s32.totalorder %s150, %s164
      %p166 = scmp.eq.s32.totalorder %s82, 0
      %p167 = por %p165, %p166
      %s169 = sadd.s32 %s168, 1
      %p172 = scmp.eq.s32.totalorder %s76, 1
      %p173 = scmp.ne.s32.totalorder %s168, %s170
      %p174 = scmp.eq.s32.totalorder %s76, 0
      %p175 = por %p173, %p174
      %p176 = scmp.ne.s32.totalorder %s168, %s170
      %p177 = scmp.eq.s32.totalorder %s81, 1
      %p178 = por %p176, %p177
      %p179 = scmp.ne.s32.totalorder %s170, %s171
      %p180 = scmp.eq.s32.totalorder %s81, 0
      %p181 = por %p179, %p180
      %p182 = scmp.ne.s32.totalorder %s170, %s171
      %p183 = scmp.eq.s32.totalorder %s82, 1
      %p184 = por %p182, %p183
      %p186 = scmp.ne.s32.totalorder %s171, %s185
      %p187 = scmp.eq.s32.totalorder %s82, 0
      %p188 = por %p186, %p187
      %s190 = sadd.s32 %s189, 1
      %p193 = scmp.eq.s32.totalorder %s76, 1
      %p194 = scmp.ne.s32.totalorder %s189, %s191
      %p195 = scmp.eq.s32.totalorder %s76, 0
      %p196 = por %p194, %p195
      %p197 = scmp.ne.s32.totalorder %s189, %s191
      %p198 = scmp.eq.s32.totalorder %s81, 1
      %p199 = por %p197, %p198
      %p200 = scmp.ne.s32.totalorder %s191, %s192
      %p201 = scmp.eq.s32.totalorder %s81, 0
      %p202 = por %p200, %p201
      %p203 = scmp.ne.s32.totalorder %s191, %s192
      %p204 = scmp.eq.s32.totalorder %s82, 1
      %p205 = por %p203, %p204
      %p207 = scmp.ne.s32.totalorder %s192, %s206
      %p208 = scmp.eq.s32.totalorder %s82, 0
      %p209 = por %p207, %p208
      %s211 = sadd.s32 %s210, 1
      %p214 = scmp.eq.s32.totalorder %s76, 1
      %p215 = scmp.ne.s32.totalorder %s210, %s212
      %p216 = scmp.eq.s32.totalorder %s76, 0
      %p217 = por %p215, %p216
      %p218 = scmp.ne.s32.totalorder %s210, %s212
      %p219 = scmp.eq.s32.totalorder %s81, 1
      %p220 = por %p218, %p219
      %p221 = scmp.ne.s32.totalorder %s212, %s213
      %p222 = scmp.eq.s32.totalorder %s81, 0
      %p223 = por %p221, %p222
      %p224 = scmp.ne.s32.totalorder %s212, %s213
      %p225 = scmp.eq.s32.totalorder %s82, 1
      %p226 = por %p224, %p225
      %p228 = scmp.ne.s32.totalorder %s213, %s227
      %p229 = scmp.eq.s32.totalorder %s82, 0
      %p230 = por %p228, %p229
      %s232 = sadd.s32 %s231, 1
      %p235 = scmp.eq.s32.totalorder %s76, 1
      %p236 = scmp.ne.s32.totalorder %s231, %s233
      %p237 = scmp.eq.s32.totalorder %s76, 0
      %p238 = por %p236, %p237
      %p239 = scmp.ne.s32.totalorder %s231, %s233
      %p240 = scmp.eq.s32.totalorder %s81, 1
      %p241 = por %p239, %p240
      %p242 = scmp.ne.s32.totalorder %s233, %s234
      %p243 = scmp.eq.s32.totalorder %s81, 0
      %p244 = por %p242, %p243
      %p245 = scmp.ne.s32.totalorder %s233, %s234
      %p246 = scmp.eq.s32.totalorder %s82, 1
      %p247 = por %p245, %p246
      %p249 = scmp.ne.s32.totalorder %s234, %s248
      %p250 = scmp.eq.s32.totalorder %s82, 0
      %p251 = por %p249, %p250
      %s253 = sadd.s32 %s252, 1
      %p256 = scmp.eq.s32.totalorder %s76, 1
      %p257 = scmp.ne.s32.totalorder %s252, %s254
      %p258 = scmp.eq.s32.totalorder %s76, 0
      %p259 = por %p257, %p258
      %p260 = scmp.ne.s32.totalorder %s252, %s254
      %p261 = scmp.eq.s32.totalorder %s81, 1
      %p262 = por %p260, %p261
      %p263 = scmp.ne.s32.totalorder %s254, %s255
      %p264 = scmp.eq.s32.totalorder %s81, 0
      %p265 = por %p263, %p264
      %p266 = scmp.ne.s32.totalorder %s254, %s255
      %p267 = scmp.eq.s32.totalorder %s82, 1
      %p268 = por %p266, %p267
      %p270 = scmp.ne.s32.totalorder %s255, %s269
      %p271 = scmp.eq.s32.totalorder %s82, 0
      %p272 = por %p270, %p271
      %s274 = sadd.s32 %s273, 1
      %p277 = scmp.eq.s32.totalorder %s76, 1
      %p278 = scmp.ne.s32.totalorder %s273, %s275
      %p279 = scmp.eq.s32.totalorder %s76, 0
      %p280 = por %p278, %p279
      %p281 = scmp.ne.s32.totalorder %s273, %s275
      %p282 = scmp.eq.s32.totalorder %s81, 1
      %p283 = por %p281, %p282
      %p284 = scmp.ne.s32.totalorder %s275, %s276
      %p285 = scmp.eq.s32.totalorder %s81, 0
      %p286 = por %p284, %p285
      %p287 = scmp.ne.s32.totalorder %s275, %s276
      %p288 = scmp.eq.s32.totalorder %s82, 1
      %p289 = por %p287, %p288
      %p291 = scmp.ne.s32.totalorder %s276, %s290
      %p292 = scmp.eq.s32.totalorder %s82, 0
      %p293 = por %p291, %p292
      %s295 = sadd.s32 %s294, 1
      %p298 = scmp.eq.s32.totalorder %s76, 1
      %p299 = scmp.ne.s32.totalorder %s294, %s296
      %p300 = scmp.eq.s32.totalorder %s76, 0
      %p301 = por %p299, %p300
      %p302 = scmp.ne.s32.totalorder %s294, %s296
      %p303 = scmp.eq.s32.totalorder %s81, 1
      %p304 = por %p302, %p303
      %p305 = scmp.ne.s32.totalorder %s296, %s297
      %p306 = scmp.eq.s32.totalorder %s81, 0
      %p307 = por %p305, %p306
      %p308 = scmp.ne.s32.totalorder %s296, %s297
      %p309 = scmp.eq.s32.totalorder %s82, 1
      %p310 = por %p308, %p309
      %p312 = scmp.ne.s32.totalorder %s297, %s311
      %p313 = scmp.eq.s32.totalorder %s82, 0
      %p314 = por %p312, %p313
      %s316 = sadd.s32 %s315, 1
      %p319 = scmp.eq.s32.totalorder %s76, 1
      %p320 = scmp.ne.s32.totalorder %s315, %s317
      %p321 = scmp.eq.s32.totalorder %s76, 0
      %p322 = por %p320, %p321
      %p323 = scmp.ne.s32.totalorder %s315, %s317
      %p324 = scmp.eq.s32.totalorder %s81, 1
      %p325 = por %p323, %p324
      %p326 = scmp.ne.s32.totalorder %s317, %s318
      %p327 = scmp.eq.s32.totalorder %s81, 0
      %p328 = por %p326, %p327
      %p329 = scmp.ne.s32.totalorder %s317, %s318
      %p330 = scmp.eq.s32.totalorder %s82, 1
      %p331 = por %p329, %p330
      %p333 = scmp.ne.s32.totalorder %s318, %s332
      %p334 = scmp.eq.s32.totalorder %s82, 0
      %p335 = por %p333, %p334
      %s337 = sadd.s32 %s336, 1
      %p340 = scmp.eq.s32.totalorder %s76, 1
      %p341 = scmp.ne.s32.totalorder %s336, %s338
      %p342 = scmp.eq.s32.totalorder %s76, 0
      %p343 = por %p341, %p342
      %p344 = scmp.ne.s32.totalorder %s336, %s338
      %p345 = scmp.eq.s32.totalorder %s81, 1
      %p346 = por %p344, %p345
      %p347 = scmp.ne.s32.totalorder %s338, %s339
      %p348 = scmp.eq.s32.totalorder %s81, 0
      %p349 = por %p347, %p348
      %p350 = scmp.ne.s32.totalorder %s338, %s339
      %p351 = scmp.eq.s32.totalorder %s82, 1
      %p352 = por %p350, %p351
      %p354 = scmp.ne.s32.totalorder %s339, %s353
      %p355 = scmp.eq.s32.totalorder %s82, 0
      %p356 = por %p354, %p355
      %s358 = sadd.s32 %s357, 1
      %p361 = scmp.eq.s32.totalorder %s76, 1
      %p362 = scmp.ne.s32.totalorder %s357, %s359
      %p363 = scmp.eq.s32.totalorder %s76, 0
      %p364 = por %p362, %p363
      %p365 = scmp.ne.s32.totalorder %s357, %s359
      %p366 = scmp.eq.s32.totalorder %s81, 1
      %p367 = por %p365, %p366
      %p368 = scmp.ne.s32.totalorder %s359, %s360
      %p369 = scmp.eq.s32.totalorder %s81, 0
      %p370 = por %p368, %p369
      %p371 = scmp.ne.s32.totalorder %s359, %s360
      %p372 = scmp.eq.s32.totalorder %s82, 1
      %p373 = por %p371, %p372
      %p375 = scmp.ne.s32.totalorder %s360, %s374
      %p376 = scmp.eq.s32.totalorder %s82, 0
      %p377 = por %p375, %p376
      %s379 = sadd.s32 %s378, 1
      %p382 = scmp.eq.s32.totalorder %s76, 1
      %p383 = scmp.ne.s32.totalorder %s378, %s380
      %p384 = scmp.eq.s32.totalorder %s76, 0
      %p385 = por %p383, %p384
      %p386 = scmp.ne.s32.totalorder %s378, %s380
      %p387 = scmp.eq.s32.totalorder %s81, 1
      %p388 = por %p386, %p387
      %p389 = scmp.ne.s32.totalorder %s380, %s381
      %p390 = scmp.eq.s32.totalorder %s81, 0
      %p391 = por %p389, %p390
      %p392 = scmp.ne.s32.totalorder %s380, %s381
      %p393 = scmp.eq.s32.totalorder %s82, 1
      %p394 = por %p392, %p393
      %p396 = scmp.ne.s32.totalorder %s381, %s395
      %p397 = scmp.eq.s32.totalorder %s82, 0
      %p398 = por %p396, %p397
      %s400 = sadd.s32 %s399, 1
      %p403 = scmp.eq.s32.totalorder %s76, 1
      %p404 = scmp.ne.s32.totalorder %s399, %s401
      %p405 = scmp.eq.s32.totalorder %s76, 0
      %p406 = por %p404, %p405
      %p407 = scmp.ne.s32.totalorder %s399, %s401
      %p408 = scmp.eq.s32.totalorder %s81, 1
      %p409 = por %p407, %p408
      %p410 = scmp.ne.s32.totalorder %s401, %s402
      %p411 = scmp.eq.s32.totalorder %s81, 0
      %p412 = por %p410, %p411
      %p413 = scmp.ne.s32.totalorder %s401, %s402
      %p414 = scmp.eq.s32.totalorder %s82, 1
      %p415 = por %p413, %p414
      %p417 = scmp.ne.s32.totalorder %s402, %s416
      %p418 = scmp.eq.s32.totalorder %s82, 0
      %p419 = por %p417, %p418
      %s421 = sadd.s32 %s420, 1
      %p424 = scmp.eq.s32.totalorder %s76, 1
      %p425 = scmp.ne.s32.totalorder %s420, %s422
      %p426 = scmp.eq.s32.totalorder %s76, 0
      %p427 = por %p425, %p426
      %p428 = scmp.ne.s32.totalorder %s420, %s422
      %p429 = scmp.eq.s32.totalorder %s81, 1
      %p430 = por %p428, %p429
      %p431 = scmp.ne.s32.totalorder %s422, %s423
      %p432 = scmp.eq.s32.totalorder %s81, 0
      %p433 = por %p431, %p432
      %p434 = scmp.ne.s32.totalorder %s422, %s423
      %p435 = scmp.eq.s32.totalorder %s82, 1
      %p436 = por %p434, %p435
      %p438 = scmp.ne.s32.totalorder %s423, %s437
      %p439 = scmp.eq.s32.totalorder %s82, 0
      %p440 = por %p438, %p439
      %s442 = sadd.s32 %s441, 1
      %p445 = scmp.eq.s32.totalorder %s76, 1
      %p446 = scmp.ne.s32.totalorder %s441, %s443
      %p447 = scmp.eq.s32.totalorder %s76, 0
      %p448 = por %p446, %p447
      %p449 = scmp.ne.s32.totalorder %s441, %s443
      %p450 = scmp.eq.s32.totalorder %s81, 1
      %p451 = por %p449, %p450
      %p452 = scmp.ne.s32.totalorder %s443, %s444
      %p453 = scmp.eq.s32.totalorder %s81, 0
      %p454 = por %p452, %p453
      %p455 = scmp.ne.s32.totalorder %s443, %s444
      %p456 = scmp.eq.s32.totalorder %s82, 1
      %p457 = por %p455, %p456
      %p459 = scmp.ne.s32.totalorder %s444, %s458
      %p460 = scmp.eq.s32.totalorder %s82, 0
      %p461 = por %p459, %p460
      %s463 = sadd.s32 %s462, 1
      %p466 = scmp.eq.s32.totalorder %s76, 1
      %p467 = scmp.ne.s32.totalorder %s462, %s464
      %p468 = scmp.eq.s32.totalorder %s76, 0
      %p469 = por %p467, %p468
      %p470 = scmp.ne.s32.totalorder %s462, %s464
      %p471 = scmp.eq.s32.totalorder %s81, 1
      %p472 = por %p470, %p471
      %p473 = scmp.ne.s32.totalorder %s464, %s465
      %p474 = scmp.eq.s32.totalorder %s81, 0
      %p475 = por %p473, %p474
      %p476 = scmp.ne.s32.totalorder %s464, %s465
      %p477 = scmp.eq.s32.totalorder %s82, 1
      %p478 = por %p476, %p477
      %p480 = scmp.ne.s32.totalorder %s465, %s479
      %p481 = scmp.eq.s32.totalorder %s82, 0
      %p482 = por %p480, %p481
      %s484 = sadd.s32 %s483, 1
      %p487 = scmp.eq.s32.totalorder %s76, 1
      %p488 = scmp.ne.s32.totalorder %s483, %s485
      %p489 = scmp.eq.s32.totalorder %s76, 0
      %p490 = por %p488, %p489
      %p491 = scmp.ne.s32.totalorder %s483, %s485
      %p492 = scmp.eq.s32.totalorder %s81, 1
      %p493 = por %p491, %p492
      %p494 = scmp.ne.s32.totalorder %s485, %s486
      %p495 = scmp.eq.s32.totalorder %s81, 0
      %p496 = por %p494, %p495
      %p497 = scmp.ne.s32.totalorder %s485, %s486
      %p498 = scmp.eq.s32.totalorder %s82, 1
      %p499 = por %p497, %p498
      %p501 = scmp.ne.s32.totalorder %s486, %s500
      %p502 = scmp.eq.s32.totalorder %s82, 0
      %p503 = por %p501, %p502
      %s505 = sadd.s32 %s504, 1
      %p508 = scmp.eq.s32.totalorder %s76, 1
      %p509 = scmp.ne.s32.totalorder %s504, %s506
      %p510 = scmp.eq.s32.totalorder %s76, 0
      %p511 = por %p509, %p510
      %p512 = scmp.ne.s32.totalorder %s504, %s506
      %p513 = scmp.eq.s32.totalorder %s81, 1
      %p514 = por %p512, %p513
      %p515 = scmp.ne.s32.totalorder %s506, %s507
      %p516 = scmp.eq.s32.totalorder %s81, 0
      %p517 = por %p515, %p516
      %p518 = scmp.ne.s32.totalorder %s506, %s507
      %p519 = scmp.eq.s32.totalorder %s82, 1
      %p520 = por %p518, %p519
      %p522 = scmp.ne.s32.totalorder %s507, %s521
      %p523 = scmp.eq.s32.totalorder %s82, 0
      %p524 = por %p522, %p523
      %s526 = sadd.s32 %s525, 1
      %p529 = scmp.eq.s32.totalorder %s76, 1
      %p530 = scmp.ne.s32.totalorder %s525, %s527
      %p531 = scmp.eq.s32.totalorder %s76, 0
      %p532 = por %p530, %p531
      %p533 = scmp.ne.s32.totalorder %s525, %s527
      %p534 = scmp.eq.s32.totalorder %s81, 1
      %p535 = por %p533, %p534
      %p536 = scmp.ne.s32.totalorder %s527, %s528
      %p537 = scmp.eq.s32.totalorder %s81, 0
      %p538 = por %p536, %p537
      %p539 = scmp.ne.s32.totalorder %s527, %s528
      %p540 = scmp.eq.s32.totalorder %s82, 1
      %p541 = por %p539, %p540
      %p543 = scmp.ne.s32.totalorder %s528, %s542
      %p544 = scmp.eq.s32.totalorder %s82, 0
      %p545 = por %p543, %p544
      %s547 = sadd.s32 %s546, 1
      %p550 = scmp.eq.s32.totalorder %s76, 1
      %p551 = scmp.ne.s32.totalorder %s546, %s548
      %p552 = scmp.eq.s32.totalorder %s76, 0
      %p553 = por %p551, %p552
      %p554 = scmp.ne.s32.totalorder %s546, %s548
      %p555 = scmp.eq.s32.totalorder %s81, 1
      %p556 = por %p554, %p555
      %p557 = scmp.ne.s32.totalorder %s548, %s549
      %p558 = scmp.eq.s32.totalorder %s81, 0
      %p559 = por %p557, %p558
      %p560 = scmp.ne.s32.totalorder %s548, %s549
      %p561 = scmp.eq.s32.totalorder %s82, 1
      %p562 = por %p560, %p561
      %p564 = scmp.ne.s32.totalorder %s549, %s563
      %p565 = scmp.eq.s32.totalorder %s82, 0
      %p566 = por %p564, %p565
      %s568 = sadd.s32 %s567, 1
      %p571 = scmp.eq.s32.totalorder %s76, 1
      %p572 = scmp.ne.s32.totalorder %s567, %s569
      %p573 = scmp.eq.s32.totalorder %s76, 0
      %p574 = por %p572, %p573
      %p575 = scmp.ne.s32.totalorder %s567, %s569
      %p576 = scmp.eq.s32.totalorder %s81, 1
      %p577 = por %p575, %p576
      %p578 = scmp.ne.s32.totalorder %s569, %s570
      %p579 = scmp.eq.s32.totalorder %s81, 0
      %p580 = por %p578, %p579
      %p581 = scmp.ne.s32.totalorder %s569, %s570
      %p582 = scmp.eq.s32.totalorder %s82, 1
      %p583 = por %p581, %p582
      %p585 = scmp.ne.s32.totalorder %s570, %s584
      %p586 = scmp.eq.s32.totalorder %s82, 0
      %p587 = por %p585, %p586
      %s589 = sadd.s32 %s588, 1
      %p592 = scmp.eq.s32.totalorder %s76, 1
      %p593 = scmp.ne.s32.totalorder %s588, %s590
      %p594 = scmp.eq.s32.totalorder %s76, 0
      %p595 = por %p593, %p594
      %p596 = scmp.ne.s32.totalorder %s588, %s590
      %p597 = scmp.eq.s32.totalorder %s81, 1
      %p598 = por %p596, %p597
      %p599 = scmp.ne.s32.totalorder %s590, %s591
      %p600 = scmp.eq.s32.totalorder %s81, 0
      %p601 = por %p599, %p600
      %p602 = scmp.ne.s32.totalorder %s590, %s591
      %p603 = scmp.eq.s32.totalorder %s82, 1
      %p604 = por %p602, %p603
      %p606 = scmp.ne.s32.totalorder %s591, %s605
      %p607 = scmp.eq.s32.totalorder %s82, 0
      %p608 = por %p606, %p607
      %s610 = sadd.s32 %s609, 1
      %p613 = scmp.eq.s32.totalorder %s76, 1
      %p614 = scmp.ne.s32.totalorder %s609, %s611
      %p615 = scmp.eq.s32.totalorder %s76, 0
      %p616 = por %p614, %p615
      %p617 = scmp.ne.s32.totalorder %s609, %s611
      %p618 = scmp.eq.s32.totalorder %s81, 1
      %p619 = por %p617, %p618
      %p620 = scmp.ne.s32.totalorder %s611, %s612
      %p621 = scmp.eq.s32.totalorder %s81, 0
      %p622 = por %p620, %p621
      %p623 = scmp.ne.s32.totalorder %s611, %s612
      %p624 = scmp.eq.s32.totalorder %s82, 1
      %p625 = por %p623, %p624
      %p627 = scmp.ne.s32.totalorder %s612, %s626
      %p628 = scmp.eq.s32.totalorder %s82, 0
      %p629 = por %p627, %p628
      %s631 = sadd.s32 %s630, 1
      %p634 = scmp.eq.s32.totalorder %s76, 1
      %p635 = scmp.ne.s32.totalorder %s630, %s632
      %p636 = scmp.eq.s32.totalorder %s76, 0
      %p637 = por %p635, %p636
      %p638 = scmp.ne.s32.totalorder %s630, %s632
      %p639 = scmp.eq.s32.totalorder %s81, 1
      %p640 = por %p638, %p639
      %p641 = scmp.ne.s32.totalorder %s632, %s633
      %p642 = scmp.eq.s32.totalorder %s81, 0
      %p643 = por %p641, %p642
      %p644 = scmp.ne.s32.totalorder %s632, %s633
      %p645 = scmp.eq.s32.totalorder %s82, 1
      %p646 = por %p644, %p645
      %p648 = scmp.ne.s32.totalorder %s633, %s647
      %p649 = scmp.eq.s32.totalorder %s82, 0
      %p650 = por %p648, %p649
      %s652 = sadd.s32 %s651, 1
      %p655 = scmp.eq.s32.totalorder %s76, 1
      %p656 = scmp.ne.s32.totalorder %s651, %s653
      %p657 = scmp.eq.s32.totalorder %s76, 0
      %p658 = por %p656, %p657
      %p659 = scmp.ne.s32.totalorder %s651, %s653
      %p660 = scmp.eq.s32.totalorder %s81, 1
      %p661 = por %p659, %p660
      %p662 = scmp.ne.s32.totalorder %s653, %s654
      %p663 = scmp.eq.s32.totalorder %s81, 0
      %p664 = por %p662, %p663
      %p665 = scmp.ne.s32.totalorder %s653, %s654
      %p666 = scmp.eq.s32.totalorder %s82, 1
      %p667 = por %p665, %p666
      %p669 = scmp.ne.s32.totalorder %s654, %s668
      %p670 = scmp.eq.s32.totalorder %s82, 0
      %p671 = por %p669, %p670
      %s673 = sadd.s32 %s672, 1
      %p676 = scmp.eq.s32.totalorder %s76, 1
      %p677 = scmp.ne.s32.totalorder %s672, %s674
      %p678 = scmp.eq.s32.totalorder %s76, 0
      %p679 = por %p677, %p678
      %p680 = scmp.ne.s32.totalorder %s672, %s674
      %p681 = scmp.eq.s32.totalorder %s81, 1
      %p682 = por %p680, %p681
      %p683 = scmp.ne.s32.totalorder %s674, %s675
      %p684 = scmp.eq.s32.totalorder %s81, 0
      %p685 = por %p683, %p684
      %p686 = scmp.ne.s32.totalorder %s674, %s675
      %p687 = scmp.eq.s32.totalorder %s82, 1
      %p688 = por %p686, %p687
      %p690 = scmp.ne.s32.totalorder %s675, %s689
      %p691 = scmp.eq.s32.totalorder %s82, 0
      %p692 = por %p690, %p691
      %s693 = ssub.s32 %s76, %s83
      %p694 = scmp.eq.s32.totalorder %s693, 0
      %s696 = sadd.s32 %s695, 1
      %s697 = scalar_select %p694, %s695, %s696
      %p700 = pneg %p694
      %p701 = scmp.eq.s32.totalorder %s76, 1
      %p702 = por %p700, %p701
      %p703 = scmp.ne.s32.totalorder %s695, %s698
      %p704 = scmp.eq.s32.totalorder %s76, 0
      %p705 = por %p703, %p704
      %p706 = scmp.ne.s32.totalorder %s695, %s698
      %p707 = scmp.eq.s32.totalorder %s81, 1
      %p708 = por %p706, %p707
      %p709 = scmp.ne.s32.totalorder %s698, %s699
      %p710 = scmp.eq.s32.totalorder %s81, 0
      %p711 = por %p709, %p710
      %p712 = scmp.ne.s32.totalorder %s698, %s699
      %p713 = scmp.eq.s32.totalorder %s82, 1
      %p714 = por %p712, %p713
      %p716 = scmp.ne.s32.totalorder %s699, %s715
      %p717 = scmp.eq.s32.totalorder %s82, 0
      %p718 = por %p716, %p717
      %p719 = scmp.le.s32.totalorder 1, %s76
      %p720 = scmp.lt.s32.totalorder %s76, 3
      %p721 = pnand %p719, %p720
      %p722 = pneg %p721
      // Predicated region
      $region9: #{tpu_custom_call.1} parent=5 // pred_check
        _
      $region10: #{tpu_custom_call.1} parent=5 // pred_check_branch
        %724 = sbr.rel (%p721) target = $region12
      $region11: #{tpu_custom_call.1} parent=5 // pred_region
        %s725 = ssub.s32 %s76, 1
        // Predicated region
        $region13: #{tpu_custom_call.1} parent=11 // pred_check
          %p726 = pneg %p97
        $region14: #{tpu_custom_call.1} parent=11 // pred_check_branch
          %728 = sbr.rel (%p726) target = $region16
        $region15: #{tpu_custom_call.1} parent=11 // pred_region
          _
        $region16: #{tpu_custom_call.1} parent=11 // pred_fallthru
          _
        // Predicated region
        $region17: #{tpu_custom_call.1} parent=11 // pred_check
          %p729 = pneg %p118
        $region18: #{tpu_custom_call.1} parent=11 // pred_check_branch
          %731 = sbr.rel (%p729) target = $region20
        $region19: #{tpu_custom_call.1} parent=11 // pred_region
          _
        $region20: #{tpu_custom_call.1} parent=11 // pred_fallthru
          _
        // Predicated region
        $region21: #{tpu_custom_call.1} parent=11 // pred_check
          %p732 = pneg %p139
        $region22: #{tpu_custom_call.1} parent=11 // pred_check_branch
          %734 = sbr.rel (%p732) target = $region24
        $region23: #{tpu_custom_call.1} parent=11 // pred_region
          _
        $region24: #{tpu_custom_call.1} parent=11 // pred_fallthru
          _
        // Predicated region
        $region25: #{tpu_custom_call.1} parent=11 // pred_check
          %p735 = pneg %p160
        $region26: #{tpu_custom_call.1} parent=11 // pred_check_branch
          %737 = sbr.rel (%p735) target = $region28
        $region27: #{tpu_custom_call.1} parent=11 // pred_region
          _
        $region28: #{tpu_custom_call.1} parent=11 // pred_fallthru
          _
        // Predicated region
        $region29: #{tpu_custom_call.1} parent=11 // pred_check
          %p738 = pneg %p181
        $region30: #{tpu_custom_call.1} parent=11 // pred_check_branch
          %740 = sbr.rel (%p738) target = $region32
        $region31: #{tpu_custom_call.1} parent=11 // pred_region
          _
        $region32: #{tpu_custom_call.1} parent=11 // pred_fallthru
          _
        // Predicated region
        $region33: #{tpu_custom_call.1} parent=11 // pred_check
          %p741 = pneg %p202
        $region34: #{tpu_custom_call.1} parent=11 // pred_check_branch
          %743 = sbr.rel (%p741) target = $region36
        $region35: #{tpu_custom_call.1} parent=11 // pred_region
          _
        $region36: #{tpu_custom_call.1} parent=11 // pred_fallthru
          _
        // Predicated region
        $region37: #{tpu_custom_call.1} parent=11 // pred_check
          %p744 = pneg %p223
        $region38: #{tpu_custom_call.1} parent=11 // pred_check_branch
          %746 = sbr.rel (%p744) target = $region40
        $region39: #{tpu_custom_call.1} parent=11 // pred_region
          _
        $region40: #{tpu_custom_call.1} parent=11 // pred_fallthru
          _
        // Predicated region
        $region41: #{tpu_custom_call.1} parent=11 // pred_check
          %p747 = pneg %p244
        $region42: #{tpu_custom_call.1} parent=11 // pred_check_branch
          %749 = sbr.rel (%p747) target = $region44
        $region43: #{tpu_custom_call.1} parent=11 // pred_region
          _
        $region44: #{tpu_custom_call.1} parent=11 // pred_fallthru
          _
        // Predicated region
        $region45: #{tpu_custom_call.1} parent=11 // pred_check
          %p750 = pneg %p265
        $region46: #{tpu_custom_call.1} parent=11 // pred_check_branch
          %752 = sbr.rel (%p750) target = $region48
        $region47: #{tpu_custom_call.1} parent=11 // pred_region
          _
        $region48: #{tpu_custom_call.1} parent=11 // pred_fallthru
          _
        // Predicated region
        $region49: #{tpu_custom_call.1} parent=11 // pred_check
          %p753 = pneg %p286
        $region50: #{tpu_custom_call.1} parent=11 // pred_check_branch
          %755 = sbr.rel (%p753) target = $region52
        $region51: #{tpu_custom_call.1} parent=11 // pred_region
          _
        $region52: #{tpu_custom_call.1} parent=11 // pred_fallthru
          _
        // Predicated region
        $region53: #{tpu_custom_call.1} parent=11 // pred_check
          %p756 = pneg %p307
        $region54: #{tpu_custom_call.1} parent=11 // pred_check_branch
          %758 = sbr.rel (%p756) target = $region56
        $region55: #{tpu_custom_call.1} parent=11 // pred_region
          _
        $region56: #{tpu_custom_call.1} parent=11 // pred_fallthru
          _
        // Predicated region
        $region57: #{tpu_custom_call.1} parent=11 // pred_check
          %p759 = pneg %p328
        $region58: #{tpu_custom_call.1} parent=11 // pred_check_branch
          %761 = sbr.rel (%p759) target = $region60
        $region59: #{tpu_custom_call.1} parent=11 // pred_region
          _
        $region60: #{tpu_custom_call.1} parent=11 // pred_fallthru
          _
        // Predicated region
        $region61: #{tpu_custom_call.1} parent=11 // pred_check
          %p762 = pneg %p349
        $region62: #{tpu_custom_call.1} parent=11 // pred_check_branch
          %764 = sbr.rel (%p762) target = $region64
        $region63: #{tpu_custom_call.1} parent=11 // pred_region
          _
        $region64: #{tpu_custom_call.1} parent=11 // pred_fallthru
          _
        // Predicated region
        $region65: #{tpu_custom_call.1} parent=11 // pred_check
          %p765 = pneg %p370
        $region66: #{tpu_custom_call.1} parent=11 // pred_check_branch
          %767 = sbr.rel (%p765) target = $region68
        $region67: #{tpu_custom_call.1} parent=11 // pred_region
          _
        $region68: #{tpu_custom_call.1} parent=11 // pred_fallthru
          _
        // Predicated region
        $region69: #{tpu_custom_call.1} parent=11 // pred_check
          %p768 = pneg %p391
        $region70: #{tpu_custom_call.1} parent=11 // pred_check_branch
          %770 = sbr.rel (%p768) target = $region72
        $region71: #{tpu_custom_call.1} parent=11 // pred_region
          _
        $region72: #{tpu_custom_call.1} parent=11 // pred_fallthru
          _
        // Predicated region
        $region73: #{tpu_custom_call.1} parent=11 // pred_check
          %p771 = pneg %p412
        $region74: #{tpu_custom_call.1} parent=11 // pred_check_branch
          %773 = sbr.rel (%p771) target = $region76
        $region75: #{tpu_custom_call.1} parent=11 // pred_region
          _
        $region76: #{tpu_custom_call.1} parent=11 // pred_fallthru
          _
        // Predicated region
        $region77: #{tpu_custom_call.1} parent=11 // pred_check
          %p774 = pneg %p433
        $region78: #{tpu_custom_call.1} parent=11 // pred_check_branch
          %776 = sbr.rel (%p774) target = $region80
        $region79: #{tpu_custom_call.1} parent=11 // pred_region
          _
        $region80: #{tpu_custom_call.1} parent=11 // pred_fallthru
          _
        // Predicated region
        $region81: #{tpu_custom_call.1} parent=11 // pred_check
          %p777 = pneg %p454
        $region82: #{tpu_custom_call.1} parent=11 // pred_check_branch
          %779 = sbr.rel (%p777) target = $region84
        $region83: #{tpu_custom_call.1} parent=11 // pred_region
          _
        $region84: #{tpu_custom_call.1} parent=11 // pred_fallthru
          _
        // Predicated region
        $region85: #{tpu_custom_call.1} parent=11 // pred_check
          %p780 = pneg %p475
        $region86: #{tpu_custom_call.1} parent=11 // pred_check_branch
          %782 = sbr.rel (%p780) target = $region88
        $region87: #{tpu_custom_call.1} parent=11 // pred_region
          _
        $region88: #{tpu_custom_call.1} parent=11 // pred_fallthru
          _
        // Predicated region
        $region89: #{tpu_custom_call.1} parent=11 // pred_check
          %p783 = pneg %p496
        $region90: #{tpu_custom_call.1} parent=11 // pred_check_branch
          %785 = sbr.rel (%p783) target = $region92
        $region91: #{tpu_custom_call.1} parent=11 // pred_region
          _
        $region92: #{tpu_custom_call.1} parent=11 // pred_fallthru
          _
        // Predicated region
        $region93: #{tpu_custom_call.1} parent=11 // pred_check
          %p786 = pneg %p517
        $region94: #{tpu_custom_call.1} parent=11 // pred_check_branch
          %788 = sbr.rel (%p786) target = $region96
        $region95: #{tpu_custom_call.1} parent=11 // pred_region
          _
        $region96: #{tpu_custom_call.1} parent=11 // pred_fallthru
          _
        // Predicated region
        $region97: #{tpu_custom_call.1} parent=11 // pred_check
          %p789 = pneg %p538
        $region98: #{tpu_custom_call.1} parent=11 // pred_check_branch
          %791 = sbr.rel (%p789) target = $region100
        $region99: #{tpu_custom_call.1} parent=11 // pred_region
          _
        $region100: #{tpu_custom_call.1} parent=11 // pred_fallthru
          _
        // Predicated region
        $region101: #{tpu_custom_call.1} parent=11 // pred_check
          %p792 = pneg %p559
        $region102: #{tpu_custom_call.1} parent=11 // pred_check_branch
          %794 = sbr.rel (%p792) target = $region104
        $region103: #{tpu_custom_call.1} parent=11 // pred_region
          _
        $region104: #{tpu_custom_call.1} parent=11 // pred_fallthru
          _
        // Predicated region
        $region105: #{tpu_custom_call.1} parent=11 // pred_check
          %p795 = pneg %p580
        $region106: #{tpu_custom_call.1} parent=11 // pred_check_branch
          %797 = sbr.rel (%p795) target = $region108
        $region107: #{tpu_custom_call.1} parent=11 // pred_region
          _
        $region108: #{tpu_custom_call.1} parent=11 // pred_fallthru
          _
        // Predicated region
        $region109: #{tpu_custom_call.1} parent=11 // pred_check
          %p798 = pneg %p601
        $region110: #{tpu_custom_call.1} parent=11 // pred_check_branch
          %800 = sbr.rel (%p798) target = $region112
        $region111: #{tpu_custom_call.1} parent=11 // pred_region
          _
        $region112: #{tpu_custom_call.1} parent=11 // pred_fallthru
          _
        // Predicated region
        $region113: #{tpu_custom_call.1} parent=11 // pred_check
          %p801 = pneg %p622
        $region114: #{tpu_custom_call.1} parent=11 // pred_check_branch
          %803 = sbr.rel (%p801) target = $region116
        $region115: #{tpu_custom_call.1} parent=11 // pred_region
          _
        $region116: #{tpu_custom_call.1} parent=11 // pred_fallthru
          _
        // Predicated region
        $region117: #{tpu_custom_call.1} parent=11 // pred_check
          %p804 = pneg %p643
        $region118: #{tpu_custom_call.1} parent=11 // pred_check_branch
          %806 = sbr.rel (%p804) target = $region120
        $region119: #{tpu_custom_call.1} parent=11 // pred_region
          _
        $region120: #{tpu_custom_call.1} parent=11 // pred_fallthru
          _
        // Predicated region
        $region121: #{tpu_custom_call.1} parent=11 // pred_check
          %p807 = pneg %p664
        $region122: #{tpu_custom_call.1} parent=11 // pred_check_branch
          %809 = sbr.rel (%p807) target = $region124
        $region123: #{tpu_custom_call.1} parent=11 // pred_region
          _
        $region124: #{tpu_custom_call.1} parent=11 // pred_fallthru
          _
        // Predicated region
        $region125: #{tpu_custom_call.1} parent=11 // pred_check
          %p810 = pneg %p685
        $region126: #{tpu_custom_call.1} parent=11 // pred_check_branch
          %812 = sbr.rel (%p810) target = $region128
        $region127: #{tpu_custom_call.1} parent=11 // pred_region
          _
        $region128: #{tpu_custom_call.1} parent=11 // pred_fallthru
          _
      $region12: #{tpu_custom_call.1} parent=5 // pred_fallthru
        _
      %p813 = scmp.lt.s32.totalorder %s76, 2
      // Predicated region
      $region129: #{tpu_custom_call.1} parent=5 // pred_check
        %p814 = pneg %p813
      $region130: #{tpu_custom_call.1} parent=5 // pred_check_branch
        %816 = sbr.rel (%p814) target = $region132
      $region131: #{tpu_custom_call.1} parent=5 // pred_region
        _
      $region132: #{tpu_custom_call.1} parent=5 // pred_fallthru
        _
      %p817 = scmp.le.s32.totalorder 1, %s76
      %p818 = scmp.lt.s32.totalorder %s76, 3
      %p819 = pnand %p817, %p818
      %p820 = pneg %p819
      // Predicated region
      $region133: #{tpu_custom_call.1} parent=5 // pred_check
        _
      $region134: #{tpu_custom_call.1} parent=5 // pred_check_branch
        %822 = sbr.rel (%p819) target = $region136
      $region135: #{tpu_custom_call.1} parent=5 // pred_region
        %s823 = ssub.s32 %s76, 1
        %p824 = pneg %p97
        %p825 = pneg %p94
        %p826 = pneg %p118
        %p827 = pneg %p115
        %p828 = pneg %p139
        %p829 = pneg %p136
        %p830 = pneg %p160
        %p831 = pneg %p157
        %p832 = pneg %p181
        %p833 = pneg %p178
        %p834 = pneg %p202
        %p835 = pneg %p199
        %p836 = pneg %p223
        %p837 = pneg %p220
        %p838 = pneg %p244
        %p839 = pneg %p241
        %p840 = pneg %p265
        %p841 = pneg %p262
        %p842 = pneg %p286
        %p843 = pneg %p283
        %p844 = pneg %p307
        %p845 = pneg %p304
        %p846 = pneg %p328
        %p847 = pneg %p325
        %p848 = pneg %p349
        %p849 = pneg %p346
        %p850 = pneg %p370
        %p851 = pneg %p367
        %p852 = pneg %p391
        %p853 = pneg %p388
        %p854 = pneg %p412
        %p855 = pneg %p409
        %p856 = pneg %p433
        %p857 = pneg %p430
        %p858 = pneg %p454
        %p859 = pneg %p451
        %p860 = pneg %p475
        %p861 = pneg %p472
        %p862 = pneg %p496
        %p863 = pneg %p493
        %p864 = pneg %p517
        %p865 = pneg %p514
        %p866 = pneg %p538
        %p867 = pneg %p535
        %p868 = pneg %p559
        %p869 = pneg %p556
        %p870 = pneg %p580
        %p871 = pneg %p577
        %p872 = pneg %p601
        %p873 = pneg %p598
        %p874 = pneg %p622
        %p875 = pneg %p619
        %p876 = pneg %p643
        %p877 = pneg %p640
        %p878 = pneg %p664
        %p879 = pneg %p661
        %p880 = pneg %p685
        %p881 = pneg %p682
        %p882 = pneg %p711
        %p883 = pneg %p708
        %s884 = sand.u32 %s698, 1
        %s885 = scalar_lea.sflag [#allocation7], %s884
        %s886 = sand.u32 %s698, 1
        %s887 = smul.addr %s886, 8
        %s888 = scalar_lea.vmem [#allocation6], %s887
        %s890 = smul.u32 %s81, 128
        %s891 = sld [smem:[#allocation5 + %s890]]
        %s892 = scalar_lea.vmem %s3, %s891
        %v893 = vld [vmem:[%s892] sm:$0x1]
        %v894 = vld [vmem:[%s5] sm:$0x1]
        %v895 = vadd.f32 %v893, %v894
        %vm896 = vcmask 516096
        %897 = vst.msk [vmem:[#allocation2] sm:$0x1] %vm896, %v895
        %s898 = sadd.s32 %s890, 1
        %s899 = sld [smem:[#allocation5 + %s898]]
        %s900 = scalar_lea.vmem %s3, %s899
        %v901 = vld [vmem:[%s900] sm:$0x1]
        %v902 = vld [vmem:[%s5 + $0x1] sm:$0x1]
        %v903 = vadd.f32 %v901, %v902
        %904 = vst.msk [vmem:[#allocation2 + $0x1] sm:$0x1] %vm896, %v903
        %s905 = sadd.s32 %s890, 2
        %s906 = sld [smem:[#allocation5 + %s905]]
        %s907 = scalar_lea.vmem %s3, %s906
        %v908 = vld [vmem:[%s907] sm:$0x1]
        %v909 = vld [vmem:[%s5 + $0x2] sm:$0x1]
        %v910 = vadd.f32 %v908, %v909
        %911 = vst.msk [vmem:[#allocation2 + $0x2] sm:$0x1] %vm896, %v910
        %s912 = sadd.s32 %s890, 3
        %s913 = sld [smem:[#allocation5 + %s912]]
        %s914 = scalar_lea.vmem %s3, %s913
        %v915 = vld [vmem:[%s914] sm:$0x1]
        %v916 = vld [vmem:[%s5 + $0x3] sm:$0x1]
        %v917 = vadd.f32 %v915, %v916
        %918 = vst.msk [vmem:[#allocation2 + $0x3] sm:$0x1] %vm896, %v917
        %s919 = sadd.s32 %s890, 4
        %s920 = sld [smem:[#allocation5 + %s919]]
        %s921 = scalar_lea.vmem %s3, %s920
        %v922 = vld [vmem:[%s921] sm:$0x1]
        %v923 = vld [vmem:[%s5 + $0x4] sm:$0x1]
        %v924 = vadd.f32 %v922, %v923
        %925 = vst.msk [vmem:[#allocation2 + $0x4] sm:$0x1] %vm896, %v924
        %s926 = sadd.s32 %s890, 5
        %s927 = sld [smem:[#allocation5 + %s926]]
        %s928 = scalar_lea.vmem %s3, %s927
        %v929 = vld [vmem:[%s928] sm:$0x1]
        %v930 = vld [vmem:[%s5 + $0x5] sm:$0x1]
        %v931 = vadd.f32 %v929, %v930
        %932 = vst.msk [vmem:[#allocation2 + $0x5] sm:$0x1] %vm896, %v931
        %s933 = sadd.s32 %s890, 6
        %s934 = sld [smem:[#allocation5 + %s933]]
        %s935 = scalar_lea.vmem %s3, %s934
        %v936 = vld [vmem:[%s935] sm:$0x1]
        %v937 = vld [vmem:[%s5 + $0x6] sm:$0x1]
        %v938 = vadd.f32 %v936, %v937
        %939 = vst.msk [vmem:[#allocation2 + $0x6] sm:$0x1] %vm896, %v938
        %s940 = sadd.s32 %s890, 7
        %s941 = sld [smem:[#allocation5 + %s940]]
        %s942 = scalar_lea.vmem %s3, %s941
        %v943 = vld [vmem:[%s942] sm:$0x1]
        %v944 = vld [vmem:[%s5 + $0x7] sm:$0x1]
        %v945 = vadd.f32 %v943, %v944
        %946 = vst.msk [vmem:[#allocation2 + $0x7] sm:$0x1] %vm896, %v945
        %v947 = vld [vmem:[#allocation2] sm:$0xff]
        %v948 = vlaneseq
        %v949 = vshrl.u32 %v948, 7
        %v950 = vlaneseq
        %v951 = vand.u32 %v950, 127
        %vm952 = vcmp.ge.s32.totalorder %v949, %v951
        %v953 = vld [vmem:[%s7] sm:$0x1]
        %v954 = vld [vmem:[%s9] sm:$0x1]
        %vm955 = vcmask 523264
        %v956 = vsel %vm955, %v947, 0.0
        %957 = vadd.xlane.f32.xlu0 %v956
        %v958 = vpop.xlane.xlu0 %957
        %v959 = vrcp.pop 64.0
        %v960 = vmul.f32 %v958, %v959
        %v961 = vsub.f32 %v947, %v960
        %v962 = vmul.f32 %v961, %v961
        %v963 = vsel %vm955, %v962, 0.0
        %964 = vadd.xlane.f32.xlu0 %v963
        %v965 = vpop.xlane.xlu0 %964
        %v966 = vmul.f32 %v965, %v959
        %v967 = vadd.f32 %v966, 1e-05
        %v968 = vrsqrt.pop %v967
        %v969 = vmul.f32 %v961, %v968
        %v971 = vlaneseq
        %v972 = vshrl.u32 %v971, 7
        %v973 = vsub.s32 0, %v972
        %v974 = vrot.slane %v953, %v973
        %v976 = vmul.f32 %v969, %v974
        %v978 = vlaneseq
        %v979 = vshrl.u32 %v978, 7
        %v980 = vsub.s32 0, %v979
        %v981 = vrot.slane %v954, %v980
        %v983 = vadd.f32 %v976, %v981
        %v984 = vld [vmem:[%s11] sm:$0xff]
        %v985 = vld [vmem:[%s11 + $0x8] sm:$0xff]
        %v986 = vld [vmem:[%s11 + $0x10] sm:$0xff]
        %v987 = vld [vmem:[%s11 + $0x18] sm:$0xff]
        %v988 = vld [vmem:[%s11 + $0x20] sm:$0xff]
        %v989 = vld [vmem:[%s11 + $0x28] sm:$0xff]
        %v990 = vld [vmem:[%s11 + $0x30] sm:$0xff]
        %v991 = vld [vmem:[%s11 + $0x38] sm:$0xff]
        %v992 = vpack.c.bf16 %v983, %v983
        %v993 = vld [vmem:[%s13] sm:$0x3]
        %v995 = vlaneseq
        %v996 = vshrl.u32 %v995, 7
        %v997 = vsub.s32 0, %v996
        %v998 = vrot.slane %v993, %v997
        %v999 = vlaneseq
        %v1000 = vshrl.u32 %v999, 7
        %v1001 = vsub.s32 1, %v1000
        %v1002 = vrot.slane %v993, %v1001
        %v1013 = vunpack.c.l.b16 %v984
        %v1014 = vunpack.c.h.b16 %v984
        %v1015 = vunpack.c.l.b16 %v985
        %v1016 = vunpack.c.h.b16 %v985
        %v1017 = vunpack.c.l.b16 %v986
        %v1018 = vunpack.c.h.b16 %v986
        %v1019 = vunpack.c.l.b16 %v987
        %v1020 = vunpack.c.h.b16 %v987
        %v1021 = vunpack.c.l.b16 %v988
        %v1022 = vunpack.c.h.b16 %v988
        %v1023 = vunpack.c.l.b16 %v989
        %v1024 = vunpack.c.h.b16 %v989
        %v1025 = vunpack.c.l.b16 %v990
        %v1026 = vunpack.c.h.b16 %v990
        %v1027 = vunpack.c.l.b16 %v991
        %v1028 = vunpack.c.h.b16 %v991
        %v1029 = vpack.c.b16 %v1015, %v1013
        %v1030 = vpack.c.b16 %v1016, %v1014
        %v1031 = vpack.c.b16 %v1019, %v1017
        %v1032 = vpack.c.b16 %v1020, %v1018
        %v1033 = vpack.c.b16 %v1023, %v1021
        %v1034 = vpack.c.b16 %v1024, %v1022
        %v1035 = vpack.c.b16 %v1027, %v1025
        %v1036 = vpack.c.b16 %v1028, %v1026
        %v1046 = vsel %vm955, %v992, 0
        %1048 = vmatprep.subr.bf16.mxu0 %v1030
        %1049 = vmatpush1.bf16.msra.mxu0 %v1029
        %1050 = vmatprep.subr.bf16.mxu0 %v1032
        %1051 = vmatpush1.bf16.msra.mxu0 %v1031
        %1052 = vmatprep.subr.bf16.mxu0 %v1034
        %1053 = vmatpush1.bf16.msra.mxu0 %v1033
        %1054 = vmatprep.subr.bf16.mxu0 %v1036
        %1055 = vmatpush1.bf16.msra.mxu0 %v1035
        %1056 = vmatprep.subr.bf16.mxu0 0
        %1057 = vmatpush1.bf16.msra.mxu0 0
        %1058 = vmatprep.subr.bf16.mxu0 0
        %1059 = vmatpush1.bf16.msra.mxu0 0
        %1060 = vmatprep.subr.bf16.mxu0 0
        %1061 = vmatpush1.bf16.msra.mxu0 0
        %1062 = vmatprep.subr.bf16.mxu0 0
        %1063 = vmatpush1.bf16.msra.mxu0 0
        %1064 = vmatprep.subr.bf16.mxu0 0
        %1065 = vmatpush1.bf16.msra.mxu0 0
        %1066 = vmatprep.subr.bf16.mxu0 0
        %1067 = vmatpush1.bf16.msra.mxu0 0
        %1068 = vmatprep.subr.bf16.mxu0 0
        %1069 = vmatpush1.bf16.msra.mxu0 0
        %1070 = vmatprep.subr.bf16.mxu0 0
        %1071 = vmatpush1.bf16.msra.mxu0 0
        %1072 = vmatprep.subr.bf16.mxu0 0
        %1073 = vmatpush1.bf16.msra.mxu0 0
        %1074 = vmatprep.subr.bf16.mxu0 0
        %1075 = vmatpush1.bf16.msra.mxu0 0
        %1076 = vmatprep.subr.bf16.mxu0 0
        %1077 = vmatpush1.bf16.msra.mxu0 0
        %1078 = vmatprep.subr.bf16.mxu0 0
        %1079 = vmatpush1.bf16.msra.mxu0 0
        %1080 = vmatprep.mubr.bf16.mxu0 0
        %1081 = vmatmul.mubr.bf16.gmra.mrb[0].mxu0 %v1046
        %v1082 = vpop.f32.mrb[0].mxu0
        %v1083 = vadd.f32 %v998, %v1082
        %v1084 = vpop.f32.mrb[0].mxu0
        %v1085 = vadd.f32 %v1002, %v1084
        %v1086 = vpop.f32.mrb[0].mxu0
        %v1087 = vpop.f32.mrb[0].mxu0
        %1088 = vdwg.mxu0
        %v1089 = vmul.f32 %v1083, 0.25
        %v1090 = vpack.c.bf16 %v1089, %v1089
        %v1091 = vpack.c.bf16 %v1083, %v1083
        %v1092 = vpack.c.bf16 %v1085, %v1085
        %1094 = vrot.lane.b32.xlu0 %v1091, 64
        %v1095 = vpop.permute.xlu0 %1094
        %vm1096 = vcmask 130048
        %v1098 = vsel %vm1096, %v1090, 0
        %v1101 = vsel %vm1096, %v1095, 0
        %1103 = vmatprep.subr.bf16.mxu0 0
        %1104 = vmatpush1.bf16.xpose.msra.mxu0 %v1101
        %1105 = vmatprep.subr.bf16.mxu0 0
        %1106 = vmatpush1.bf16.xpose.msra.mxu0 0
        %1107 = vmatprep.subr.bf16.mxu0 0
        %1108 = vmatpush1.bf16.xpose.msra.mxu0 0
        %1109 = vmatprep.subr.bf16.mxu0 0
        %1110 = vmatpush1.bf16.xpose.msra.mxu0 0
        %1111 = vmatprep.subr.bf16.mxu0 0
        %1112 = vmatpush1.bf16.xpose.msra.mxu0 0
        %1113 = vmatprep.subr.bf16.mxu0 0
        %1114 = vmatpush1.bf16.xpose.msra.mxu0 0
        %1115 = vmatprep.subr.bf16.mxu0 0
        %1116 = vmatpush1.bf16.xpose.msra.mxu0 0
        %1117 = vmatprep.subr.bf16.mxu0 0
        %1118 = vmatpush1.bf16.xpose.msra.mxu0 0
        %1119 = vmatprep.subr.bf16.mxu0 0
        %1120 = vmatpush1.bf16.xpose.msra.mxu0 0
        %1121 = vmatprep.subr.bf16.mxu0 0
        %1122 = vmatpush1.bf16.xpose.msra.mxu0 0
        %1123 = vmatprep.subr.bf16.mxu0 0
        %1124 = vmatpush1.bf16.xpose.msra.mxu0 0
        %1125 = vmatprep.subr.bf16.mxu0 0
        %1126 = vmatpush1.bf16.xpose.msra.mxu0 0
        %1127 = vmatprep.subr.bf16.mxu0 0
        %1128 = vmatpush1.bf16.xpose.msra.mxu0 0
        %1129 = vmatprep.subr.bf16.mxu0 0
        %1130 = vmatpush1.bf16.xpose.msra.mxu0 0
        %1131 = vmatprep.subr.bf16.mxu0 0
        %1132 = vmatpush1.bf16.xpose.msra.mxu0 0
        %1133 = vmatprep.subr.bf16.mxu0 0
        %1134 = vmatpush1.bf16.xpose.msra.mxu0 0
        %1135 = vmatprep.mubr.bf16.mxu0 0
        %1136 = vmatmul.mubr.bf16.gmra.mrb[0].mxu0 %v1098
        %v1137 = vpop.f32.mrb[0].mxu0
        %v1138 = vadd.f32 0.0, %v1137
        %v1139 = vpop.f32.mrb[0].mxu0
        %v1140 = vpop.f32.mrb[0].mxu0
        %v1141 = vpop.f32.mrb[0].mxu0
        %1142 = vdwg.mxu0
        %v1143 = vsel %vm952, %v1138, -1e+30
        %vm1144 = vcmask 64512
        %v1145 = vsel %vm1144, %v1143, -inf
        %1146 = vmax.xlane.f32.xlu0 %v1145
        %v1147 = vpop.xlane.xlu0 %1146
        %v1148 = vsub.f32 %v1143, %v1147
        %v1149 = vmul.f32 %v1148, 1.442695
        %v1150 = vpow.pop %v1149
        %v1151 = vsel %vm1144, %v1150, 0.0
        %1152 = vadd.xlane.f32.xlu0 %v1151
        %v1153 = vpop.xlane.xlu0 %1152
        %v1154 = vrcp.pop %v1153
        %v1155 = vmul.f32 %v1150, %v1154
        %v1156 = vpack.c.bf16 %v1155, %v1155
        %v1158 = vsel %vm1144, %v1156, 0
        %vm1160 = vcmask 1043456
        %v1162 = vsel %vm1160, %v1092, 0
        %1164 = vmatprep.subr.bf16.mxu0 0
        %1165 = vmatpush1.bf16.msra.mxu0 %v1162
        %1166 = vmatprep.subr.bf16.mxu0 0
        %1167 = vmatpush1.bf16.msra.mxu0 0
        %1168 = vmatprep.subr.bf16.mxu0 0
        %1169 = vmatpush1.bf16.msra.mxu0 0
        %1170 = vmatprep.subr.bf16.mxu0 0
        %1171 = vmatpush1.bf16.msra.mxu0 0
        %1172 = vmatprep.subr.bf16.mxu0 0
        %1173 = vmatpush1.bf16.msra.mxu0 0
        %1174 = vmatprep.subr.bf16.mxu0 0
        %1175 = vmatpush1.bf16.msra.mxu0 0
        %1176 = vmatprep.subr.bf16.mxu0 0
        %1177 = vmatpush1.bf16.msra.mxu0 0
        %1178 = vmatprep.subr.bf16.mxu0 0
        %1179 = vmatpush1.bf16.msra.mxu0 0
        %1180 = vmatprep.subr.bf16.mxu0 0
        %1181 = vmatpush1.bf16.msra.mxu0 0
        %1182 = vmatprep.subr.bf16.mxu0 0
        %1183 = vmatpush1.bf16.msra.mxu0 0
        %1184 = vmatprep.subr.bf16.mxu0 0
        %1185 = vmatpush1.bf16.msra.mxu0 0
        %1186 = vmatprep.subr.bf16.mxu0 0
        %1187 = vmatpush1.bf16.msra.mxu0 0
        %1188 = vmatprep.subr.bf16.mxu0 0
        %1189 = vmatpush1.bf16.msra.mxu0 0
        %1190 = vmatprep.subr.bf16.mxu0 0
        %1191 = vmatpush1.bf16.msra.mxu0 0
        %1192 = vmatprep.subr.bf16.mxu0 0
        %1193 = vmatpush1.bf16.msra.mxu0 0
        %1194 = vmatprep.subr.bf16.mxu0 0
        %1195 = vmatpush1.bf16.msra.mxu0 0
        %1196 = vmatprep.mubr.bf16.mxu0 0
        %1197 = vmatmul.mubr.bf16.gmra.mrb[0].mxu0 %v1158
        %v1198 = vpop.f32.mrb[0].mxu0
        %v1199 = vadd.f32 0.0, %v1198
        %v1200 = vpop.f32.mrb[0].mxu0
        %v1201 = vpop.f32.mrb[0].mxu0
        %v1202 = vpop.f32.mrb[0].mxu0
        %1203 = vdwg.mxu0
        %1204 = vst.msk [vmem:[#allocation3] sm:$0xff] %vm1096, %v1199
        %1206 = vrot.lane.b32.xlu0 %v1090, 112
        %v1207 = vpop.permute.xlu0 %1206
        %1208 = vrot.lane.b32.xlu0 %v1091, 48
        %v1209 = vpop.permute.xlu0 %1208
        %v1211 = vsel %vm1096, %v1207, 0
        %v1214 = vsel %vm1096, %v1209, 0
        %1216 = vmatprep.subr.bf16.mxu0 0
        %1217 = vmatpush1.bf16.xpose.msra.mxu0 %v1214
        %1218 = vmatprep.subr.bf16.mxu0 0
        %1219 = vmatpush1.bf16.xpose.msra.mxu0 0
        %1220 = vmatprep.subr.bf16.mxu0 0
        %1221 = vmatpush1.bf16.xpose.msra.mxu0 0
        %1222 = vmatprep.subr.bf16.mxu0 0
        %1223 = vmatpush1.bf16.xpose.msra.mxu0 0
        %1224 = vmatprep.subr.bf16.mxu0 0
        %1225 = vmatpush1.bf16.xpose.msra.mxu0 0
        %1226 = vmatprep.subr.bf16.mxu0 0
        %1227 = vmatpush1.bf16.xpose.msra.mxu0 0
        %1228 = vmatprep.subr.bf16.mxu0 0
        %1229 = vmatpush1.bf16.xpose.msra.mxu0 0
        %1230 = vmatprep.subr.bf16.mxu0 0
        %1231 = vmatpush1.bf16.xpose.msra.mxu0 0
        %1232 = vmatprep.subr.bf16.mxu0 0
        %1233 = vmatpush1.bf16.xpose.msra.mxu0 0
        %1234 = vmatprep.subr.bf16.mxu0 0
        %1235 = vmatpush1.bf16.xpose.msra.mxu0 0
        %1236 = vmatprep.subr.bf16.mxu0 0
        %1237 = vmatpush1.bf16.xpose.msra.mxu0 0
        %1238 = vmatprep.subr.bf16.mxu0 0
        %1239 = vmatpush1.bf16.xpose.msra.mxu0 0
        %1240 = vmatprep.subr.bf16.mxu0 0
        %1241 = vmatpush1.bf16.xpose.msra.mxu0 0
        %1242 = vmatprep.subr.bf16.mxu0 0
        %1243 = vmatpush1.bf16.xpose.msra.mxu0 0
        %1244 = vmatprep.subr.bf16.mxu0 0
        %1245 = vmatpush1.bf16.xpose.msra.mxu0 0
        %1246 = vmatprep.subr.bf16.mxu0 0
        %1247 = vmatpush1.bf16.xpose.msra.mxu0 0
        %1248 = vmatprep.mubr.bf16.mxu0 0
        %1249 = vmatmul.mubr.bf16.gmra.mrb[0].mxu0 %v1211
        %v1250 = vpop.f32.mrb[0].mxu0
        %v1251 = vadd.f32 0.0, %v1250
        %v1252 = vpop.f32.mrb[0].mxu0
        %v1253 = vpop.f32.mrb[0].mxu0
        %v1254 = vpop.f32.mrb[0].mxu0
        %1255 = vdwg.mxu0
        %v1256 = vsel %vm952, %v1251, -1e+30
        %v1257 = vsel %vm1144, %v1256, -inf
        %1258 = vmax.xlane.f32.xlu0 %v1257
        %v1259 = vpop.xlane.xlu0 %1258
        %v1260 = vsub.f32 %v1256, %v1259
        %v1261 = vmul.f32 %v1260, 1.442695
        %v1262 = vpow.pop %v1261
        %v1263 = vsel %vm1144, %v1262, 0.0
        %1264 = vadd.xlane.f32.xlu0 %v1263
        %v1265 = vpop.xlane.xlu0 %1264
        %v1266 = vrcp.pop %v1265
        %v1267 = vmul.f32 %v1262, %v1266
        %v1268 = vpack.c.bf16 %v1267, %v1267
        %1270 = vrot.lane.b32.xlu0 %v1092, 112
        %v1271 = vpop.permute.xlu0 %1270
        %v1273 = vsel %vm1144, %v1268, 0
        %v1276 = vsel %vm1160, %v1271, 0
        %1278 = vmatprep.subr.bf16.mxu0 0
        %1279 = vmatpush1.bf16.msra.mxu0 %v1276
        %1280 = vmatprep.subr.bf16.mxu0 0
        %1281 = vmatpush1.bf16.msra.mxu0 0
        %1282 = vmatprep.subr.bf16.mxu0 0
        %1283 = vmatpush1.bf16.msra.mxu0 0
        %1284 = vmatprep.subr.bf16.mxu0 0
        %1285 = vmatpush1.bf16.msra.mxu0 0
        %1286 = vmatprep.subr.bf16.mxu0 0
        %1287 = vmatpush1.bf16.msra.mxu0 0
        %1288 = vmatprep.subr.bf16.mxu0 0
        %1289 = vmatpush1.bf16.msra.mxu0 0
        %1290 = vmatprep.subr.bf16.mxu0 0
        %1291 = vmatpush1.bf16.msra.mxu0 0
        %1292 = vmatprep.subr.bf16.mxu0 0
        %1293 = vmatpush1.bf16.msra.mxu0 0
        %1294 = vmatprep.subr.bf16.mxu0 0
        %1295 = vmatpush1.bf16.msra.mxu0 0
        %1296 = vmatprep.subr.bf16.mxu0 0
        %1297 = vmatpush1.bf16.msra.mxu0 0
        %1298 = vmatprep.subr.bf16.mxu0 0
        %1299 = vmatpush1.bf16.msra.mxu0 0
        %1300 = vmatprep.subr.bf16.mxu0 0
        %1301 = vmatpush1.bf16.msra.mxu0 0
        %1302 = vmatprep.subr.bf16.mxu0 0
        %1303 = vmatpush1.bf16.msra.mxu0 0
        %1304 = vmatprep.subr.bf16.mxu0 0
        %1305 = vmatpush1.bf16.msra.mxu0 0
        %1306 = vmatprep.subr.bf16.mxu0 0
        %1307 = vmatpush1.bf16.msra.mxu0 0
        %1308 = vmatprep.subr.bf16.mxu0 0
        %1309 = vmatpush1.bf16.msra.mxu0 0
        %1310 = vmatprep.mubr.bf16.mxu0 0
        %1311 = vmatmul.mubr.bf16.gmra.mrb[0].mxu0 %v1273
        %v1312 = vpop.f32.mrb[0].mxu0
        %v1313 = vadd.f32 0.0, %v1312
        %v1314 = vpop.f32.mrb[0].mxu0
        %v1315 = vpop.f32.mrb[0].mxu0
        %v1316 = vpop.f32.mrb[0].mxu0
        %1317 = vdwg.mxu0
        %1319 = vrot.lane.b32.xlu0 %v1313, 16
        %v1320 = vpop.permute.xlu0 %1319
        %vm1322 = vcmask 261248
        %1323 = vst.msk [vmem:[#allocation3] sm:$0xff] %vm1322, %v1320
        %1324 = vrot.lane.b32.xlu0 %v1090, 96
        %v1325 = vpop.permute.xlu0 %1324
        %1326 = vrot.lane.b32.xlu0 %v1091, 32
        %v1327 = vpop.permute.xlu0 %1326
        %v1329 = vsel %vm1096, %v1325, 0
        %v1332 = vsel %vm1096, %v1327, 0
        %1334 = vmatprep.subr.bf16.mxu0 0
        %1335 = vmatpush1.bf16.xpose.msra.mxu0 %v1332
        %1336 = vmatprep.subr.bf16.mxu0 0
        %1337 = vmatpush1.bf16.xpose.msra.mxu0 0
        %1338 = vmatprep.subr.bf16.mxu0 0
        %1339 = vmatpush1.bf16.xpose.msra.mxu0 0
        %1340 = vmatprep.subr.bf16.mxu0 0
        %1341 = vmatpush1.bf16.xpose.msra.mxu0 0
        %1342 = vmatprep.subr.bf16.mxu0 0
        %1343 = vmatpush1.bf16.xpose.msra.mxu0 0
        %1344 = vmatprep.subr.bf16.mxu0 0
        %1345 = vmatpush1.bf16.xpose.msra.mxu0 0
        %1346 = vmatprep.subr.bf16.mxu0 0
        %1347 = vmatpush1.bf16.xpose.msra.mxu0 0
        %1348 = vmatprep.subr.bf16.mxu0 0
        %1349 = vmatpush1.bf16.xpose.msra.mxu0 0
        %1350 = vmatprep.subr.bf16.mxu0 0
        %1351 = vmatpush1.bf16.xpose.msra.mxu0 0
        %1352 = vmatprep.subr.bf16.mxu0 0
        %1353 = vmatpush1.bf16.xpose.msra.mxu0 0
        %1354 = vmatprep.subr.bf16.mxu0 0
        %1355 = vmatpush1.bf16.xpose.msra.mxu0 0
        %1356 = vmatprep.subr.bf16.mxu0 0
        %1357 = vmatpush1.bf16.xpose.msra.mxu0 0
        %1358 = vmatprep.subr.bf16.mxu0 0
        %1359 = vmatpush1.bf16.xpose.msra.mxu0 0
        %1360 = vmatprep.subr.bf16.mxu0 0
        %1361 = vmatpush1.bf16.xpose.msra.mxu0 0
        %1362 = vmatprep.subr.bf16.mxu0 0
        %1363 = vmatpush1.bf16.xpose.msra.mxu0 0
        %1364 = vmatprep.subr.bf16.mxu0 0
        %1365 = vmatpush1.bf16.xpose.msra.mxu0 0
        %1366 = vmatprep.mubr.bf16.mxu0 0
        %1367 = vmatmul.mubr.bf16.gmra.mrb[0].mxu0 %v1329
        %v1368 = vpop.f32.mrb[0].mxu0
        %v1369 = vadd.f32 0.0, %v1368
        %v1370 = vpop.f32.mrb[0].mxu0
        %v1371 = vpop.f32.mrb[0].mxu0
        %v1372 = vpop.f32.mrb[0].mxu0
        %1373 = vdwg.mxu0
        %v1374 = vsel %vm952, %v1369, -1e+30
        %v1375 = vsel %vm1144, %v1374, -inf
        %1376 = vmax.xlane.f32.xlu0 %v1375
        %v1377 = vpop.xlane.xlu0 %1376
        %v1378 = vsub.f32 %v1374, %v1377
        %v1379 = vmul.f32 %v1378, 1.442695
        %v1380 = vpow.pop %v1379
        %v1381 = vsel %vm1144, %v1380, 0.0
        %1382 = vadd.xlane.f32.xlu0 %v1381
        %v1383 = vpop.xlane.xlu0 %1382
        %v1384 = vrcp.pop %v1383
        %v1385 = vmul.f32 %v1380, %v1384
        %v1386 = vpack.c.bf16 %v1385, %v1385
        %1387 = vrot.lane.b32.xlu0 %v1092, 96
        %v1388 = vpop.permute.xlu0 %1387
        %v1390 = vsel %vm1144, %v1386, 0
        %v1393 = vsel %vm1160, %v1388, 0
        %1395 = vmatprep.subr.bf16.mxu0 0
        %1396 = vmatpush1.bf16.msra.mxu0 %v1393
        %1397 = vmatprep.subr.bf16.mxu0 0
        %1398 = vmatpush1.bf16.msra.mxu0 0
        %1399 = vmatprep.subr.bf16.mxu0 0
        %1400 = vmatpush1.bf16.msra.mxu0 0
        %1401 = vmatprep.subr.bf16.mxu0 0
        %1402 = vmatpush1.bf16.msra.mxu0 0
        %1403 = vmatprep.subr.bf16.mxu0 0
        %1404 = vmatpush1.bf16.msra.mxu0 0
        %1405 = vmatprep.subr.bf16.mxu0 0
        %1406 = vmatpush1.bf16.msra.mxu0 0
        %1407 = vmatprep.subr.bf16.mxu0 0
        %1408 = vmatpush1.bf16.msra.mxu0 0
        %1409 = vmatprep.subr.bf16.mxu0 0
        %1410 = vmatpush1.bf16.msra.mxu0 0
        %1411 = vmatprep.subr.bf16.mxu0 0
        %1412 = vmatpush1.bf16.msra.mxu0 0
        %1413 = vmatprep.subr.bf16.mxu0 0
        %1414 = vmatpush1.bf16.msra.mxu0 0
        %1415 = vmatprep.subr.bf16.mxu0 0
        %1416 = vmatpush1.bf16.msra.mxu0 0
        %1417 = vmatprep.subr.bf16.mxu0 0
        %1418 = vmatpush1.bf16.msra.mxu0 0
        %1419 = vmatprep.subr.bf16.mxu0 0
        %1420 = vmatpush1.bf16.msra.mxu0 0
        %1421 = vmatprep.subr.bf16.mxu0 0
        %1422 = vmatpush1.bf16.msra.mxu0 0
        %1423 = vmatprep.subr.bf16.mxu0 0
        %1424 = vmatpush1.bf16.msra.mxu0 0
        %1425 = vmatprep.subr.bf16.mxu0 0
        %1426 = vmatpush1.bf16.msra.mxu0 0
        %1427 = vmatprep.mubr.bf16.mxu0 0
        %1428 = vmatmul.mubr.bf16.gmra.mrb[0].mxu0 %v1390
        %v1429 = vpop.f32.mrb[0].mxu0
        %v1430 = vadd.f32 0.0, %v1429
        %v1431 = vpop.f32.mrb[0].mxu0
        %v1432 = vpop.f32.mrb[0].mxu0
        %v1433 = vpop.f32.mrb[0].mxu0
        %1434 = vdwg.mxu0
        %1436 = vrot.lane.b32.xlu0 %v1430, 32
        %v1437 = vpop.permute.xlu0 %1436
        %vm1439 = vcmask 392448
        %1440 = vst.msk [vmem:[#allocation3] sm:$0xff] %vm1439, %v1437
        %1441 = vrot.lane.b32.xlu0 %v1090, 80
        %v1442 = vpop.permute.xlu0 %1441
        %1443 = vrot.lane.b32.xlu0 %v1091, 16
        %v1444 = vpop.permute.xlu0 %1443
        %v1446 = vsel %vm1096, %v1442, 0
        %v1449 = vsel %vm1096, %v1444, 0
        %1451 = vmatprep.subr.bf16.mxu0 0
        %1452 = vmatpush1.bf16.xpose.msra.mxu0 %v1449
        %1453 = vmatprep.subr.bf16.mxu0 0
        %1454 = vmatpush1.bf16.xpose.msra.mxu0 0
        %1455 = vmatprep.subr.bf16.mxu0 0
        %1456 = vmatpush1.bf16.xpose.msra.mxu0 0
        %1457 = vmatprep.subr.bf16.mxu0 0
        %1458 = vmatpush1.bf16.xpose.msra.mxu0 0
        %1459 = vmatprep.subr.bf16.mxu0 0
        %1460 = vmatpush1.bf16.xpose.msra.mxu0 0
        %1461 = vmatprep.subr.bf16.mxu0 0
        %1462 = vmatpush1.bf16.xpose.msra.mxu0 0
        %1463 = vmatprep.subr.bf16.mxu0 0
        %1464 = vmatpush1.bf16.xpose.msra.mxu0 0
        %1465 = vmatprep.subr.bf16.mxu0 0
        %1466 = vmatpush1.bf16.xpose.msra.mxu0 0
        %1467 = vmatprep.subr.bf16.mxu0 0
        %1468 = vmatpush1.bf16.xpose.msra.mxu0 0
        %1469 = vmatprep.subr.bf16.mxu0 0
        %1470 = vmatpush1.bf16.xpose.msra.mxu0 0
        %1471 = vmatprep.subr.bf16.mxu0 0
        %1472 = vmatpush1.bf16.xpose.msra.mxu0 0
        %1473 = vmatprep.subr.bf16.mxu0 0
        %1474 = vmatpush1.bf16.xpose.msra.mxu0 0
        %1475 = vmatprep.subr.bf16.mxu0 0
        %1476 = vmatpush1.bf16.xpose.msra.mxu0 0
        %1477 = vmatprep.subr.bf16.mxu0 0
        %1478 = vmatpush1.bf16.xpose.msra.mxu0 0
        %1479 = vmatprep.subr.bf16.mxu0 0
        %1480 = vmatpush1.bf16.xpose.msra.mxu0 0
        %1481 = vmatprep.subr.bf16.mxu0 0
        %1482 = vmatpush1.bf16.xpose.msra.mxu0 0
        %1483 = vmatprep.mubr.bf16.mxu0 0
        %1484 = vmatmul.mubr.bf16.gmra.mrb[0].mxu0 %v1446
        %v1485 = vpop.f32.mrb[0].mxu0
        %v1486 = vadd.f32 0.0, %v1485
        %v1487 = vpop.f32.mrb[0].mxu0
        %v1488 = vpop.f32.mrb[0].mxu0
        %v1489 = vpop.f32.mrb[0].mxu0
        %1490 = vdwg.mxu0
        %v1491 = vsel %vm952, %v1486, -1e+30
        %v1492 = vsel %vm1144, %v1491, -inf
        %1493 = vmax.xlane.f32.xlu0 %v1492
        %v1494 = vpop.xlane.xlu0 %1493
        %v1495 = vsub.f32 %v1491, %v1494
        %v1496 = vmul.f32 %v1495, 1.442695
        %v1497 = vpow.pop %v1496
        %v1498 = vsel %vm1144, %v1497, 0.0
        %1499 = vadd.xlane.f32.xlu0 %v1498
        %v1500 = vpop.xlane.xlu0 %1499
        %v1501 = vrcp.pop %v1500
        %v1502 = vmul.f32 %v1497, %v1501
        %v1503 = vpack.c.bf16 %v1502, %v1502
        %1504 = vrot.lane.b32.xlu0 %v1092, 80
        %v1505 = vpop.permute.xlu0 %1504
        %v1507 = vsel %vm1144, %v1503, 0
        %v1510 = vsel %vm1160, %v1505, 0
        %1512 = vmatprep.subr.bf16.mxu0 0
        %1513 = vmatpush1.bf16.msra.mxu0 %v1510
        %1514 = vmatprep.subr.bf16.mxu0 0
        %1515 = vmatpush1.bf16.msra.mxu0 0
        %1516 = vmatprep.subr.bf16.mxu0 0
        %1517 = vmatpush1.bf16.msra.mxu0 0
        %1518 = vmatprep.subr.bf16.mxu0 0
        %1519 = vmatpush1.bf16.msra.mxu0 0
        %1520 = vmatprep.subr.bf16.mxu0 0
        %1521 = vmatpush1.bf16.msra.mxu0 0
        %1522 = vmatprep.subr.bf16.mxu0 0
        %1523 = vmatpush1.bf16.msra.mxu0 0
        %1524 = vmatprep.subr.bf16.mxu0 0
        %1525 = vmatpush1.bf16.msra.mxu0 0
        %1526 = vmatprep.subr.bf16.mxu0 0
        %1527 = vmatpush1.bf16.msra.mxu0 0
        %1528 = vmatprep.subr.bf16.mxu0 0
        %1529 = vmatpush1.bf16.msra.mxu0 0
        %1530 = vmatprep.subr.bf16.mxu0 0
        %1531 = vmatpush1.bf16.msra.mxu0 0
        %1532 = vmatprep.subr.bf16.mxu0 0
        %1533 = vmatpush1.bf16.msra.mxu0 0
        %1534 = vmatprep.subr.bf16.mxu0 0
        %1535 = vmatpush1.bf16.msra.mxu0 0
        %1536 = vmatprep.subr.bf16.mxu0 0
        %1537 = vmatpush1.bf16.msra.mxu0 0
        %1538 = vmatprep.subr.bf16.mxu0 0
        %1539 = vmatpush1.bf16.msra.mxu0 0
        %1540 = vmatprep.subr.bf16.mxu0 0
        %1541 = vmatpush1.bf16.msra.mxu0 0
        %1542 = vmatprep.subr.bf16.mxu0 0
        %1543 = vmatpush1.bf16.msra.mxu0 0
        %1544 = vmatprep.mubr.bf16.mxu0 0
        %1545 = vmatmul.mubr.bf16.gmra.mrb[0].mxu0 %v1507
        %v1546 = vpop.f32.mrb[0].mxu0
        %v1547 = vadd.f32 0.0, %v1546
        %v1548 = vpop.f32.mrb[0].mxu0
        %v1549 = vpop.f32.mrb[0].mxu0
        %v1550 = vpop.f32.mrb[0].mxu0
        %1551 = vdwg.mxu0
        %1553 = vrot.lane.b32.xlu0 %v1547, 48
        %v1554 = vpop.permute.xlu0 %1553
        %vm1556 = vcmask 523648
        %1557 = vst.msk [vmem:[#allocation3] sm:$0xff] %vm1556, %v1554
        %v1558 = vld [vmem:[#allocation3] sm:$0xff]
        %v1559 = vld [vmem:[%s15] sm:$0xf]
        %v1560 = vld [vmem:[%s15 + $0x4] sm:$0xf]
        %v1561 = vld [vmem:[%s15 + $0x8] sm:$0xf]
        %v1562 = vld [vmem:[%s15 + $0xc] sm:$0xf]
        %v1563 = vld [vmem:[%s15 + $0x10] sm:$0xf]
        %v1564 = vld [vmem:[%s15 + $0x14] sm:$0xf]
        %v1565 = vld [vmem:[%s15 + $0x18] sm:$0xf]
        %v1566 = vld [vmem:[%s15 + $0x1c] sm:$0xf]
        %v1567 = vpack.c.bf16 %v1558, %v1558
        %v1576 = vunpack.c.l.b16 %v1559
        %v1577 = vunpack.c.l.b16 %v1560
        %v1578 = vunpack.c.l.b16 %v1561
        %v1579 = vunpack.c.l.b16 %v1562
        %v1580 = vunpack.c.l.b16 %v1563
        %v1581 = vunpack.c.l.b16 %v1564
        %v1582 = vunpack.c.l.b16 %v1565
        %v1583 = vunpack.c.l.b16 %v1566
        %v1584 = vpack.c.b16 %v1577, %v1576
        %v1585 = vpack.c.b16 %v1579, %v1578
        %v1586 = vpack.c.b16 %v1581, %v1580
        %v1587 = vpack.c.b16 %v1583, %v1582
        %v1593 = vsel %vm955, %v1567, 0
        %1595 = vmatprep.subr.bf16.mxu0 0
        %1596 = vmatpush1.bf16.msra.mxu0 %v1584
        %1597 = vmatprep.subr.bf16.mxu0 0
        %1598 = vmatpush1.bf16.msra.mxu0 %v1585
        %1599 = vmatprep.subr.bf16.mxu0 0
        %1600 = vmatpush1.bf16.msra.mxu0 %v1586
        %1601 = vmatprep.subr.bf16.mxu0 0
        %1602 = vmatpush1.bf16.msra.mxu0 %v1587
        %1603 = vmatprep.subr.bf16.mxu0 0
        %1604 = vmatpush1.bf16.msra.mxu0 0
        %1605 = vmatprep.subr.bf16.mxu0 0
        %1606 = vmatpush1.bf16.msra.mxu0 0
        %1607 = vmatprep.subr.bf16.mxu0 0
        %1608 = vmatpush1.bf16.msra.mxu0 0
        %1609 = vmatprep.subr.bf16.mxu0 0
        %1610 = vmatpush1.bf16.msra.mxu0 0
        %1611 = vmatprep.subr.bf16.mxu0 0
        %1612 = vmatpush1.bf16.msra.mxu0 0
        %1613 = vmatprep.subr.bf16.mxu0 0
        %1614 = vmatpush1.bf16.msra.mxu0 0
        %1615 = vmatprep.subr.bf16.mxu0 0
        %1616 = vmatpush1.bf16.msra.mxu0 0
        %1617 = vmatprep.subr.bf16.mxu0 0
        %1618 = vmatpush1.bf16.msra.mxu0 0
        %1619 = vmatprep.subr.bf16.mxu0 0
        %1620 = vmatpush1.bf16.msra.mxu0 0
        %1621 = vmatprep.subr.bf16.mxu0 0
        %1622 = vmatpush1.bf16.msra.mxu0 0
        %1623 = vmatprep.subr.bf16.mxu0 0
        %1624 = vmatpush1.bf16.msra.mxu0 0
        %1625 = vmatprep.subr.bf16.mxu0 0
        %1626 = vmatpush1.bf16.msra.mxu0 0
        %1627 = vmatprep.mubr.bf16.mxu0 0
        %1628 = vmatmul.mubr.bf16.gmra.mrb[0].mxu0 %v1593
        %v1629 = vpop.f32.mrb[0].mxu0
        %v1630 = vadd.f32 0.0, %v1629
        %v1631 = vpop.f32.mrb[0].mxu0
        %v1632 = vpop.f32.mrb[0].mxu0
        %v1633 = vpop.f32.mrb[0].mxu0
        %1634 = vdwg.mxu0
        %v1635 = vadd.f32 %v947, %v1630
        %v1636 = vld [vmem:[%s17] sm:$0x1]
        %v1638 = vlaneseq
        %v1639 = vshrl.u32 %v1638, 7
        %v1640 = vsub.s32 0, %v1639
        %v1641 = vrot.slane %v1636, %v1640
        %v1643 = vadd.f32 %v1635, %v1641
        %v1644 = vld [vmem:[%s19] sm:$0x1]
        %v1645 = vld [vmem:[%s21] sm:$0x1]
        %v1646 = vsel %vm955, %v1643, 0.0
        %1647 = vadd.xlane.f32.xlu0 %v1646
        %v1648 = vpop.xlane.xlu0 %1647
        %v1649 = vmul.f32 %v1648, %v959
        %v1650 = vsub.f32 %v1643, %v1649
        %v1651 = vmul.f32 %v1650, %v1650
        %v1652 = vsel %vm955, %v1651, 0.0
        %1653 = vadd.xlane.f32.xlu0 %v1652
        %v1654 = vpop.xlane.xlu0 %1653
        %v1655 = vmul.f32 %v1654, %v959
        %v1656 = vadd.f32 %v1655, 1e-05
        %v1657 = vrsqrt.pop %v1656
        %v1658 = vmul.f32 %v1650, %v1657
        %v1660 = vlaneseq
        %v1661 = vshrl.u32 %v1660, 7
        %v1662 = vsub.s32 0, %v1661
        %v1663 = vrot.slane %v1644, %v1662
        %v1665 = vmul.f32 %v1658, %v1663
        %v1667 = vlaneseq
        %v1668 = vshrl.u32 %v1667, 7
        %v1669 = vsub.s32 0, %v1668
        %v1670 = vrot.slane %v1645, %v1669
        %v1672 = vadd.f32 %v1665, %v1670
        %v1673 = vld [vmem:[%s23] sm:$0xff]
        %v1674 = vld [vmem:[%s23 + $0x8] sm:$0xff]
        %v1675 = vld [vmem:[%s23 + $0x10] sm:$0xff]
        %v1676 = vld [vmem:[%s23 + $0x18] sm:$0xff]
        %v1677 = vld [vmem:[%s23 + $0x20] sm:$0xff]
        %v1678 = vld [vmem:[%s23 + $0x28] sm:$0xff]
        %v1679 = vld [vmem:[%s23 + $0x30] sm:$0xff]
        %v1680 = vld [vmem:[%s23 + $0x38] sm:$0xff]
        %v1681 = vpack.c.bf16 %v1672, %v1672
        %v1682 = vld [vmem:[%s25] sm:$0x3]
        %v1684 = vlaneseq
        %v1685 = vshrl.u32 %v1684, 7
        %v1686 = vsub.s32 0, %v1685
        %v1687 = vrot.slane %v1682, %v1686
        %v1688 = vlaneseq
        %v1689 = vshrl.u32 %v1688, 7
        %v1690 = vsub.s32 1, %v1689
        %v1691 = vrot.slane %v1682, %v1690
        %v1702 = vunpack.c.l.b16 %v1673
        %v1703 = vunpack.c.h.b16 %v1673
        %v1704 = vunpack.c.l.b16 %v1674
        %v1705 = vunpack.c.h.b16 %v1674
        %v1706 = vunpack.c.l.b16 %v1675
        %v1707 = vunpack.c.h.b16 %v1675
        %v1708 = vunpack.c.l.b16 %v1676
        %v1709 = vunpack.c.h.b16 %v1676
        %v1710 = vunpack.c.l.b16 %v1677
        %v1711 = vunpack.c.h.b16 %v1677
        %v1712 = vunpack.c.l.b16 %v1678
        %v1713 = vunpack.c.h.b16 %v1678
        %v1714 = vunpack.c.l.b16 %v1679
        %v1715 = vunpack.c.h.b16 %v1679
        %v1716 = vunpack.c.l.b16 %v1680
        %v1717 = vunpack.c.h.b16 %v1680
        %v1718 = vpack.c.b16 %v1704, %v1702
        %v1719 = vpack.c.b16 %v1705, %v1703
        %v1720 = vpack.c.b16 %v1708, %v1706
        %v1721 = vpack.c.b16 %v1709, %v1707
        %v1722 = vpack.c.b16 %v1712, %v1710
        %v1723 = vpack.c.b16 %v1713, %v1711
        %v1724 = vpack.c.b16 %v1716, %v1714
        %v1725 = vpack.c.b16 %v1717, %v1715
        %v1735 = vsel %vm955, %v1681, 0
        %1737 = vmatprep.subr.bf16.mxu0 %v1719
        %1738 = vmatpush1.bf16.msra.mxu0 %v1718
        %1739 = vmatprep.subr.bf16.mxu0 %v1721
        %1740 = vmatpush1.bf16.msra.mxu0 %v1720
        %1741 = vmatprep.subr.bf16.mxu0 %v1723
        %1742 = vmatpush1.bf16.msra.mxu0 %v1722
        %1743 = vmatprep.subr.bf16.mxu0 %v1725
        %1744 = vmatpush1.bf16.msra.mxu0 %v1724
        %1745 = vmatprep.subr.bf16.mxu0 0
        %1746 = vmatpush1.bf16.msra.mxu0 0
        %1747 = vmatprep.subr.bf16.mxu0 0
        %1748 = vmatpush1.bf16.msra.mxu0 0
        %1749 = vmatprep.subr.bf16.mxu0 0
        %1750 = vmatpush1.bf16.msra.mxu0 0
        %1751 = vmatprep.subr.bf16.mxu0 0
        %1752 = vmatpush1.bf16.msra.mxu0 0
        %1753 = vmatprep.subr.bf16.mxu0 0
        %1754 = vmatpush1.bf16.msra.mxu0 0
        %1755 = vmatprep.subr.bf16.mxu0 0
        %1756 = vmatpush1.bf16.msra.mxu0 0
        %1757 = vmatprep.subr.bf16.mxu0 0
        %1758 = vmatpush1.bf16.msra.mxu0 0
        %1759 = vmatprep.subr.bf16.mxu0 0
        %1760 = vmatpush1.bf16.msra.mxu0 0
        %1761 = vmatprep.subr.bf16.mxu0 0
        %1762 = vmatpush1.bf16.msra.mxu0 0
        %1763 = vmatprep.subr.bf16.mxu0 0
        %1764 = vmatpush1.bf16.msra.mxu0 0
        %1765 = vmatprep.subr.bf16.mxu0 0
        %1766 = vmatpush1.bf16.msra.mxu0 0
        %1767 = vmatprep.subr.bf16.mxu0 0
        %1768 = vmatpush1.bf16.msra.mxu0 0
        %1769 = vmatprep.mubr.bf16.mxu0 0
        %1770 = vmatmul.mubr.bf16.gmra.mrb[0].mxu0 %v1735
        %v1771 = vpop.f32.mrb[0].mxu0
        %v1772 = vadd.f32 %v1687, %v1771
        %v1773 = vpop.f32.mrb[0].mxu0
        %v1774 = vadd.f32 %v1691, %v1773
        %v1775 = vpop.f32.mrb[0].mxu0
        %v1776 = vpop.f32.mrb[0].mxu0
        %1777 = vdwg.mxu0
        %v1778 = vmul.f32 %v1772, %v1772
        %v1779 = vmul.f32 %v1774, %v1774
        %v1780 = vmul.f32 %v1772, %v1778
        %v1781 = vmul.f32 %v1774, %v1779
        %v1782 = vmul.f32 %v1780, 0.044715
        %v1783 = vmul.f32 %v1781, 0.044715
        %v1784 = vadd.f32 %v1772, %v1782
        %v1785 = vadd.f32 %v1774, %v1783
        %v1786 = vmul.f32 %v1784, 0.7978846
        %v1787 = vmul.f32 %v1785, 0.7978846
        %v1788 = vtanh.pop %v1786
        %v1789 = vtanh.pop %v1787
        %v1790 = vadd.f32 %v1788, 1.0
        %v1791 = vadd.f32 %v1789, 1.0
        %v1792 = vmul.f32 %v1790, 0.5
        %v1793 = vmul.f32 %v1791, 0.5
        %v1794 = vmul.f32 %v1772, %v1792
        %v1795 = vmul.f32 %v1774, %v1793
        %v1796 = vld [vmem:[%s27] sm:$0xf]
        %v1797 = vld [vmem:[%s27 + $0x4] sm:$0xf]
        %v1798 = vld [vmem:[%s27 + $0x8] sm:$0xf]
        %v1799 = vld [vmem:[%s27 + $0xc] sm:$0xf]
        %v1800 = vld [vmem:[%s27 + $0x10] sm:$0xf]
        %v1801 = vld [vmem:[%s27 + $0x14] sm:$0xf]
        %v1802 = vld [vmem:[%s27 + $0x18] sm:$0xf]
        %v1803 = vld [vmem:[%s27 + $0x1c] sm:$0xf]
        %v1804 = vld [vmem:[%s27 + $0x20] sm:$0xf]
        %v1805 = vld [vmem:[%s27 + $0x24] sm:$0xf]
        %v1806 = vld [vmem:[%s27 + $0x28] sm:$0xf]
        %v1807 = vld [vmem:[%s27 + $0x2c] sm:$0xf]
        %v1808 = vld [vmem:[%s27 + $0x30] sm:$0xf]
        %v1809 = vld [vmem:[%s27 + $0x34] sm:$0xf]
        %v1810 = vld [vmem:[%s27 + $0x38] sm:$0xf]
        %v1811 = vld [vmem:[%s27 + $0x3c] sm:$0xf]
        %v1812 = vld [vmem:[%s27 + $0x40] sm:$0xf]
        %v1813 = vld [vmem:[%s27 + $0x44] sm:$0xf]
        %v1814 = vld [vmem:[%s27 + $0x48] sm:$0xf]
        %v1815 = vld [vmem:[%s27 + $0x4c] sm:$0xf]
        %v1816 = vld [vmem:[%s27 + $0x50] sm:$0xf]
        %v1817 = vld [vmem:[%s27 + $0x54] sm:$0xf]
        %v1818 = vld [vmem:[%s27 + $0x58] sm:$0xf]
        %v1819 = vld [vmem:[%s27 + $0x5c] sm:$0xf]
        %v1820 = vld [vmem:[%s27 + $0x60] sm:$0xf]
        %v1821 = vld [vmem:[%s27 + $0x64] sm:$0xf]
        %v1822 = vld [vmem:[%s27 + $0x68] sm:$0xf]
        %v1823 = vld [vmem:[%s27 + $0x6c] sm:$0xf]
        %v1824 = vld [vmem:[%s27 + $0x70] sm:$0xf]
        %v1825 = vld [vmem:[%s27 + $0x74] sm:$0xf]
        %v1826 = vld [vmem:[%s27 + $0x78] sm:$0xf]
        %v1827 = vld [vmem:[%s27 + $0x7c] sm:$0xf]
        %v1828 = vpack.c.bf16 %v1794, %v1794
        %v1829 = vpack.c.bf16 %v1795, %v1795
        %v1862 = vunpack.c.l.b16 %v1796
        %v1863 = vunpack.c.l.b16 %v1797
        %v1864 = vunpack.c.l.b16 %v1798
        %v1865 = vunpack.c.l.b16 %v1799
        %v1866 = vunpack.c.l.b16 %v1800
        %v1867 = vunpack.c.l.b16 %v1801
        %v1868 = vunpack.c.l.b16 %v1802
        %v1869 = vunpack.c.l.b16 %v1803
        %v1870 = vunpack.c.l.b16 %v1804
        %v1871 = vunpack.c.l.b16 %v1805
        %v1872 = vunpack.c.l.b16 %v1806
        %v1873 = vunpack.c.l.b16 %v1807
        %v1874 = vunpack.c.l.b16 %v1808
        %v1875 = vunpack.c.l.b16 %v1809
        %v1876 = vunpack.c.l.b16 %v1810
        %v1877 = vunpack.c.l.b16 %v1811
        %v1878 = vunpack.c.l.b16 %v1812
        %v1879 = vunpack.c.l.b16 %v1813
        %v1880 = vunpack.c.l.b16 %v1814
        %v1881 = vunpack.c.l.b16 %v1815
        %v1882 = vunpack.c.l.b16 %v1816
        %v1883 = vunpack.c.l.b16 %v1817
        %v1884 = vunpack.c.l.b16 %v1818
        %v1885 = vunpack.c.l.b16 %v1819
        %v1886 = vunpack.c.l.b16 %v1820
        %v1887 = vunpack.c.l.b16 %v1821
        %v1888 = vunpack.c.l.b16 %v1822
        %v1889 = vunpack.c.l.b16 %v1823
        %v1890 = vunpack.c.l.b16 %v1824
        %v1891 = vunpack.c.l.b16 %v1825
        %v1892 = vunpack.c.l.b16 %v1826
        %v1893 = vunpack.c.l.b16 %v1827
        %v1894 = vpack.c.b16 %v1863, %v1862
        %v1895 = vpack.c.b16 %v1865, %v1864
        %v1896 = vpack.c.b16 %v1867, %v1866
        %v1897 = vpack.c.b16 %v1869, %v1868
        %v1898 = vpack.c.b16 %v1871, %v1870
        %v1899 = vpack.c.b16 %v1873, %v1872
        %v1900 = vpack.c.b16 %v1875, %v1874
        %v1901 = vpack.c.b16 %v1877, %v1876
        %v1902 = vpack.c.b16 %v1879, %v1878
        %v1903 = vpack.c.b16 %v1881, %v1880
        %v1904 = vpack.c.b16 %v1883, %v1882
        %v1905 = vpack.c.b16 %v1885, %v1884
        %v1906 = vpack.c.b16 %v1887, %v1886
        %v1907 = vpack.c.b16 %v1889, %v1888
        %v1908 = vpack.c.b16 %v1891, %v1890
        %v1909 = vpack.c.b16 %v1893, %v1892
        %1926 = vmatprep.subr.bf16.mxu0 0
        %1927 = vmatpush1.bf16.msra.mxu0 %v1894
        %1928 = vmatprep.subr.bf16.mxu0 0
        %1929 = vmatpush1.bf16.msra.mxu0 %v1895
        %1930 = vmatprep.subr.bf16.mxu0 0
        %1931 = vmatpush1.bf16.msra.mxu0 %v1896
        %1932 = vmatprep.subr.bf16.mxu0 0
        %1933 = vmatpush1.bf16.msra.mxu0 %v1897
        %1934 = vmatprep.subr.bf16.mxu0 0
        %1935 = vmatpush1.bf16.msra.mxu0 %v1898
        %1936 = vmatprep.subr.bf16.mxu0 0
        %1937 = vmatpush1.bf16.msra.mxu0 %v1899
        %1938 = vmatprep.subr.bf16.mxu0 0
        %1939 = vmatpush1.bf16.msra.mxu0 %v1900
        %1940 = vmatprep.subr.bf16.mxu0 0
        %1941 = vmatpush1.bf16.msra.mxu0 %v1901
        %1942 = vmatprep.subr.bf16.mxu0 0
        %1943 = vmatpush1.bf16.msra.mxu0 %v1902
        %1944 = vmatprep.subr.bf16.mxu0 0
        %1945 = vmatpush1.bf16.msra.mxu0 %v1903
        %1946 = vmatprep.subr.bf16.mxu0 0
        %1947 = vmatpush1.bf16.msra.mxu0 %v1904
        %1948 = vmatprep.subr.bf16.mxu0 0
        %1949 = vmatpush1.bf16.msra.mxu0 %v1905
        %1950 = vmatprep.subr.bf16.mxu0 0
        %1951 = vmatpush1.bf16.msra.mxu0 %v1906
        %1952 = vmatprep.subr.bf16.mxu0 0
        %1953 = vmatpush1.bf16.msra.mxu0 %v1907
        %1954 = vmatprep.subr.bf16.mxu0 0
        %1955 = vmatpush1.bf16.msra.mxu0 %v1908
        %1956 = vmatprep.subr.bf16.mxu0 0
        %1957 = vmatpush1.bf16.msra.mxu0 %v1909
        %1958 = vmatprep.mubr.bf16.mxu0 %v1829
        %1959 = vmatmul.mubr.bf16.gmra.mrb[0].mxu0 %v1828
        %v1960 = vpop.f32.mrb[0].mxu0
        %v1961 = vadd.f32 0.0, %v1960
        %v1962 = vpop.f32.mrb[0].mxu0
        %v1963 = vpop.f32.mrb[0].mxu0
        %v1964 = vpop.f32.mrb[0].mxu0
        %1965 = vdwg.mxu0
        %v1966 = vadd.f32 %v1643, %v1961
        %v1967 = vld [vmem:[%s29] sm:$0x1]
        %v1969 = vlaneseq
        %v1970 = vshrl.u32 %v1969, 7
        %v1971 = vsub.s32 0, %v1970
        %v1972 = vrot.slane %v1967, %v1971
        %v1974 = vadd.f32 %v1966, %v1972
        %v1975 = vld [vmem:[%s31] sm:$0x1]
        %v1976 = vld [vmem:[%s33] sm:$0x1]
        %v1977 = vsel %vm955, %v1974, 0.0
        %1978 = vadd.xlane.f32.xlu0 %v1977
        %v1979 = vpop.xlane.xlu0 %1978
        %v1980 = vmul.f32 %v1979, %v959
        %v1981 = vsub.f32 %v1974, %v1980
        %v1982 = vmul.f32 %v1981, %v1981
        %v1983 = vsel %vm955, %v1982, 0.0
        %1984 = vadd.xlane.f32.xlu0 %v1983
        %v1985 = vpop.xlane.xlu0 %1984
        %v1986 = vmul.f32 %v1985, %v959
        %v1987 = vadd.f32 %v1986, 1e-05
        %v1988 = vrsqrt.pop %v1987
        %v1989 = vmul.f32 %v1981, %v1988
        %v1991 = vlaneseq
        %v1992 = vshrl.u32 %v1991, 7
        %v1993 = vsub.s32 0, %v1992
        %v1994 = vrot.slane %v1975, %v1993
        %v1996 = vmul.f32 %v1989, %v1994
        %v1998 = vlaneseq
        %v1999 = vshrl.u32 %v1998, 7
        %v2000 = vsub.s32 0, %v1999
        %v2001 = vrot.slane %v1976, %v2000
        %v2003 = vadd.f32 %v1996, %v2001
        %v2004 = vld [vmem:[%s35] sm:$0xff]
        %v2005 = vld [vmem:[%s35 + $0x8] sm:$0xff]
        %v2006 = vld [vmem:[%s35 + $0x10] sm:$0xff]
        %v2007 = vld [vmem:[%s35 + $0x18] sm:$0xff]
        %v2008 = vld [vmem:[%s35 + $0x20] sm:$0xff]
        %v2009 = vld [vmem:[%s35 + $0x28] sm:$0xff]
        %v2010 = vld [vmem:[%s35 + $0x30] sm:$0xff]
        %v2011 = vld [vmem:[%s35 + $0x38] sm:$0xff]
        %v2012 = vpack.c.bf16 %v2003, %v2003
        %v2013 = vld [vmem:[%s37] sm:$0x3]
        %v2015 = vlaneseq
        %v2016 = vshrl.u32 %v2015, 7
        %v2017 = vsub.s32 0, %v2016
        %v2018 = vrot.slane %v2013, %v2017
        %v2019 = vlaneseq
        %v2020 = vshrl.u32 %v2019, 7
        %v2021 = vsub.s32 1, %v2020
        %v2022 = vrot.slane %v2013, %v2021
        %v2033 = vunpack.c.l.b16 %v2004
        %v2034 = vunpack.c.h.b16 %v2004
        %v2035 = vunpack.c.l.b16 %v2005
        %v2036 = vunpack.c.h.b16 %v2005
        %v2037 = vunpack.c.l.b16 %v2006
        %v2038 = vunpack.c.h.b16 %v2006
        %v2039 = vunpack.c.l.b16 %v2007
        %v2040 = vunpack.c.h.b16 %v2007
        %v2041 = vunpack.c.l.b16 %v2008
        %v2042 = vunpack.c.h.b16 %v2008
        %v2043 = vunpack.c.l.b16 %v2009
        %v2044 = vunpack.c.h.b16 %v2009
        %v2045 = vunpack.c.l.b16 %v2010
        %v2046 = vunpack.c.h.b16 %v2010
        %v2047 = vunpack.c.l.b16 %v2011
        %v2048 = vunpack.c.h.b16 %v2011
        %v2049 = vpack.c.b16 %v2035, %v2033
        %v2050 = vpack.c.b16 %v2036, %v2034
        %v2051 = vpack.c.b16 %v2039, %v2037
        %v2052 = vpack.c.b16 %v2040, %v2038
        %v2053 = vpack.c.b16 %v2043, %v2041
        %v2054 = vpack.c.b16 %v2044, %v2042
        %v2055 = vpack.c.b16 %v2047, %v2045
        %v2056 = vpack.c.b16 %v2048, %v2046
        %v2066 = vsel %vm955, %v2012, 0
        %2068 = vmatprep.subr.bf16.mxu0 %v2050
        %2069 = vmatpush1.bf16.msra.mxu0 %v2049
        %2070 = vmatprep.subr.bf16.mxu0 %v2052
        %2071 = vmatpush1.bf16.msra.mxu0 %v2051
        %2072 = vmatprep.subr.bf16.mxu0 %v2054
        %2073 = vmatpush1.bf16.msra.mxu0 %v2053
        %2074 = vmatprep.subr.bf16.mxu0 %v2056
        %2075 = vmatpush1.bf16.msra.mxu0 %v2055
        %2076 = vmatprep.subr.bf16.mxu0 0
        %2077 = vmatpush1.bf16.msra.mxu0 0
        %2078 = vmatprep.subr.bf16.mxu0 0
        %2079 = vmatpush1.bf16.msra.mxu0 0
        %2080 = vmatprep.subr.bf16.mxu0 0
        %2081 = vmatpush1.bf16.msra.mxu0 0
        %2082 = vmatprep.subr.bf16.mxu0 0
        %2083 = vmatpush1.bf16.msra.mxu0 0
        %2084 = vmatprep.subr.bf16.mxu0 0
        %2085 = vmatpush1.bf16.msra.mxu0 0
        %2086 = vmatprep.subr.bf16.mxu0 0
        %2087 = vmatpush1.bf16.msra.mxu0 0
        %2088 = vmatprep.subr.bf16.mxu0 0
        %2089 = vmatpush1.bf16.msra.mxu0 0
        %2090 = vmatprep.subr.bf16.mxu0 0
        %2091 = vmatpush1.bf16.msra.mxu0 0
        %2092 = vmatprep.subr.bf16.mxu0 0
        %2093 = vmatpush1.bf16.msra.mxu0 0
        %2094 = vmatprep.subr.bf16.mxu0 0
        %2095 = vmatpush1.bf16.msra.mxu0 0
        %2096 = vmatprep.subr.bf16.mxu0 0
        %2097 = vmatpush1.bf16.msra.mxu0 0
        %2098 = vmatprep.subr.bf16.mxu0 0
        %2099 = vmatpush1.bf16.msra.mxu0 0
        %2100 = vmatprep.mubr.bf16.mxu0 0
        %2101 = vmatmul.mubr.bf16.gmra.mrb[0].mxu0 %v2066
        %v2102 = vpop.f32.mrb[0].mxu0
        %v2103 = vadd.f32 %v2018, %v2102
        %v2104 = vpop.f32.mrb[0].mxu0
        %v2105 = vadd.f32 %v2022, %v2104
        %v2106 = vpop.f32.mrb[0].mxu0
        %v2107 = vpop.f32.mrb[0].mxu0
        %2108 = vdwg.mxu0
        %v2109 = vmul.f32 %v2103, 0.25
        %v2110 = vpack.c.bf16 %v2109, %v2109
        %v2111 = vpack.c.bf16 %v2103, %v2103
        %v2112 = vpack.c.bf16 %v2105, %v2105
        %2114 = vrot.lane.b32.xlu0 %v2111, 64
        %v2115 = vpop.permute.xlu0 %2114
        %v2117 = vsel %vm1096, %v2110, 0
        %v2120 = vsel %vm1096, %v2115, 0
        %2122 = vmatprep.subr.bf16.mxu0 0
        %2123 = vmatpush1.bf16.xpose.msra.mxu0 %v2120
        %2124 = vmatprep.subr.bf16.mxu0 0
        %2125 = vmatpush1.bf16.xpose.msra.mxu0 0
        %2126 = vmatprep.subr.bf16.mxu0 0
        %2127 = vmatpush1.bf16.xpose.msra.mxu0 0
        %2128 = vmatprep.subr.bf16.mxu0 0
        %2129 = vmatpush1.bf16.xpose.msra.mxu0 0
        %2130 = vmatprep.subr.bf16.mxu0 0
        %2131 = vmatpush1.bf16.xpose.msra.mxu0 0
        %2132 = vmatprep.subr.bf16.mxu0 0
        %2133 = vmatpush1.bf16.xpose.msra.mxu0 0
        %2134 = vmatprep.subr.bf16.mxu0 0
        %2135 = vmatpush1.bf16.xpose.msra.mxu0 0
        %2136 = vmatprep.subr.bf16.mxu0 0
        %2137 = vmatpush1.bf16.xpose.msra.mxu0 0
        %2138 = vmatprep.subr.bf16.mxu0 0
        %2139 = vmatpush1.bf16.xpose.msra.mxu0 0
        %2140 = vmatprep.subr.bf16.mxu0 0
        %2141 = vmatpush1.bf16.xpose.msra.mxu0 0
        %2142 = vmatprep.subr.bf16.mxu0 0
        %2143 = vmatpush1.bf16.xpose.msra.mxu0 0
        %2144 = vmatprep.subr.bf16.mxu0 0
        %2145 = vmatpush1.bf16.xpose.msra.mxu0 0
        %2146 = vmatprep.subr.bf16.mxu0 0
        %2147 = vmatpush1.bf16.xpose.msra.mxu0 0
        %2148 = vmatprep.subr.bf16.mxu0 0
        %2149 = vmatpush1.bf16.xpose.msra.mxu0 0
        %2150 = vmatprep.subr.bf16.mxu0 0
        %2151 = vmatpush1.bf16.xpose.msra.mxu0 0
        %2152 = vmatprep.subr.bf16.mxu0 0
        %2153 = vmatpush1.bf16.xpose.msra.mxu0 0
        %2154 = vmatprep.mubr.bf16.mxu0 0
        %2155 = vmatmul.mubr.bf16.gmra.mrb[0].mxu0 %v2117
        %v2156 = vpop.f32.mrb[0].mxu0
        %v2157 = vadd.f32 0.0, %v2156
        %v2158 = vpop.f32.mrb[0].mxu0
        %v2159 = vpop.f32.mrb[0].mxu0
        %v2160 = vpop.f32.mrb[0].mxu0
        %2161 = vdwg.mxu0
        %v2162 = vsel %vm952, %v2157, -1e+30
        %v2163 = vsel %vm1144, %v2162, -inf
        %2164 = vmax.xlane.f32.xlu0 %v2163
        %v2165 = vpop.xlane.xlu0 %2164
        %v2166 = vsub.f32 %v2162, %v2165
        %v2167 = vmul.f32 %v2166, 1.442695
        %v2168 = vpow.pop %v2167
        %v2169 = vsel %vm1144, %v2168, 0.0
        %2170 = vadd.xlane.f32.xlu0 %v2169
        %v2171 = vpop.xlane.xlu0 %2170
        %v2172 = vrcp.pop %v2171
        %v2173 = vmul.f32 %v2168, %v2172
        %v2174 = vpack.c.bf16 %v2173, %v2173
        %v2176 = vsel %vm1144, %v2174, 0
        %v2179 = vsel %vm1160, %v2112, 0
        %2181 = vmatprep.subr.bf16.mxu0 0
        %2182 = vmatpush1.bf16.msra.mxu0 %v2179
        %2183 = vmatprep.subr.bf16.mxu0 0
        %2184 = vmatpush1.bf16.msra.mxu0 0
        %2185 = vmatprep.subr.bf16.mxu0 0
        %2186 = vmatpush1.bf16.msra.mxu0 0
        %2187 = vmatprep.subr.bf16.mxu0 0
        %2188 = vmatpush1.bf16.msra.mxu0 0
        %2189 = vmatprep.subr.bf16.mxu0 0
        %2190 = vmatpush1.bf16.msra.mxu0 0
        %2191 = vmatprep.subr.bf16.mxu0 0
        %2192 = vmatpush1.bf16.msra.mxu0 0
        %2193 = vmatprep.subr.bf16.mxu0 0
        %2194 = vmatpush1.bf16.msra.mxu0 0
        %2195 = vmatprep.subr.bf16.mxu0 0
        %2196 = vmatpush1.bf16.msra.mxu0 0
        %2197 = vmatprep.subr.bf16.mxu0 0
        %2198 = vmatpush1.bf16.msra.mxu0 0
        %2199 = vmatprep.subr.bf16.mxu0 0
        %2200 = vmatpush1.bf16.msra.mxu0 0
        %2201 = vmatprep.subr.bf16.mxu0 0
        %2202 = vmatpush1.bf16.msra.mxu0 0
        %2203 = vmatprep.subr.bf16.mxu0 0
        %2204 = vmatpush1.bf16.msra.mxu0 0
        %2205 = vmatprep.subr.bf16.mxu0 0
        %2206 = vmatpush1.bf16.msra.mxu0 0
        %2207 = vmatprep.subr.bf16.mxu0 0
        %2208 = vmatpush1.bf16.msra.mxu0 0
        %2209 = vmatprep.subr.bf16.mxu0 0
        %2210 = vmatpush1.bf16.msra.mxu0 0
        %2211 = vmatprep.subr.bf16.mxu0 0
        %2212 = vmatpush1.bf16.msra.mxu0 0
        %2213 = vmatprep.mubr.bf16.mxu0 0
        %2214 = vmatmul.mubr.bf16.gmra.mrb[0].mxu0 %v2176
        %v2215 = vpop.f32.mrb[0].mxu0
        %v2216 = vadd.f32 0.0, %v2215
        %v2217 = vpop.f32.mrb[0].mxu0
        %v2218 = vpop.f32.mrb[0].mxu0
        %v2219 = vpop.f32.mrb[0].mxu0
        %2220 = vdwg.mxu0
        %2221 = vst.msk [vmem:[#allocation3] sm:$0xff] %vm1096, %v2216
        %2223 = vrot.lane.b32.xlu0 %v2110, 112
        %v2224 = vpop.permute.xlu0 %2223
        %2225 = vrot.lane.b32.xlu0 %v2111, 48
        %v2226 = vpop.permute.xlu0 %2225
        %v2228 = vsel %vm1096, %v2224, 0
        %v2231 = vsel %vm1096, %v2226, 0
        %2233 = vmatprep.subr.bf16.mxu0 0
        %2234 = vmatpush1.bf16.xpose.msra.mxu0 %v2231
        %2235 = vmatprep.subr.bf16.mxu0 0
        %2236 = vmatpush1.bf16.xpose.msra.mxu0 0
        %2237 = vmatprep.subr.bf16.mxu0 0
        %2238 = vmatpush1.bf16.xpose.msra.mxu0 0
        %2239 = vmatprep.subr.bf16.mxu0 0
        %2240 = vmatpush1.bf16.xpose.msra.mxu0 0
        %2241 = vmatprep.subr.bf16.mxu0 0
        %2242 = vmatpush1.bf16.xpose.msra.mxu0 0
        %2243 = vmatprep.subr.bf16.mxu0 0
        %2244 = vmatpush1.bf16.xpose.msra.mxu0 0
        %2245 = vmatprep.subr.bf16.mxu0 0
        %2246 = vmatpush1.bf16.xpose.msra.mxu0 0
        %2247 = vmatprep.subr.bf16.mxu0 0
        %2248 = vmatpush1.bf16.xpose.msra.mxu0 0
        %2249 = vmatprep.subr.bf16.mxu0 0
        %2250 = vmatpush1.bf16.xpose.msra.mxu0 0
        %2251 = vmatprep.subr.bf16.mxu0 0
        %2252 = vmatpush1.bf16.xpose.msra.mxu0 0
        %2253 = vmatprep.subr.bf16.mxu0 0
        %2254 = vmatpush1.bf16.xpose.msra.mxu0 0
        %2255 = vmatprep.subr.bf16.mxu0 0
        %2256 = vmatpush1.bf16.xpose.msra.mxu0 0
        %2257 = vmatprep.subr.bf16.mxu0 0
        %2258 = vmatpush1.bf16.xpose.msra.mxu0 0
        %2259 = vmatprep.subr.bf16.mxu0 0
        %2260 = vmatpush1.bf16.xpose.msra.mxu0 0
        %2261 = vmatprep.subr.bf16.mxu0 0
        %2262 = vmatpush1.bf16.xpose.msra.mxu0 0
        %2263 = vmatprep.subr.bf16.mxu0 0
        %2264 = vmatpush1.bf16.xpose.msra.mxu0 0
        %2265 = vmatprep.mubr.bf16.mxu0 0
        %2266 = vmatmul.mubr.bf16.gmra.mrb[0].mxu0 %v2228
        %v2267 = vpop.f32.mrb[0].mxu0
        %v2268 = vadd.f32 0.0, %v2267
        %v2269 = vpop.f32.mrb[0].mxu0
        %v2270 = vpop.f32.mrb[0].mxu0
        %v2271 = vpop.f32.mrb[0].mxu0
        %2272 = vdwg.mxu0
        %v2273 = vsel %vm952, %v2268, -1e+30
        %v2274 = vsel %vm1144, %v2273, -inf
        %2275 = vmax.xlane.f32.xlu0 %v2274
        %v2276 = vpop.xlane.xlu0 %2275
        %v2277 = vsub.f32 %v2273, %v2276
        %v2278 = vmul.f32 %v2277, 1.442695
        %v2279 = vpow.pop %v2278
        %v2280 = vsel %vm1144, %v2279, 0.0
        %2281 = vadd.xlane.f32.xlu0 %v2280
        %v2282 = vpop.xlane.xlu0 %2281
        %v2283 = vrcp.pop %v2282
        %v2284 = vmul.f32 %v2279, %v2283
        %v2285 = vpack.c.bf16 %v2284, %v2284
        %2287 = vrot.lane.b32.xlu0 %v2112, 112
        %v2288 = vpop.permute.xlu0 %2287
        %v2290 = vsel %vm1144, %v2285, 0
        %v2293 = vsel %vm1160, %v2288, 0
        %2295 = vmatprep.subr.bf16.mxu0 0
        %2296 = vmatpush1.bf16.msra.mxu0 %v2293
        %2297 = vmatprep.subr.bf16.mxu0 0
        %2298 = vmatpush1.bf16.msra.mxu0 0
        %2299 = vmatprep.subr.bf16.mxu0 0
        %2300 = vmatpush1.bf16.msra.mxu0 0
        %2301 = vmatprep.subr.bf16.mxu0 0
        %2302 = vmatpush1.bf16.msra.mxu0 0
        %2303 = vmatprep.subr.bf16.mxu0 0
        %2304 = vmatpush1.bf16.msra.mxu0 0
        %2305 = vmatprep.subr.bf16.mxu0 0
        %2306 = vmatpush1.bf16.msra.mxu0 0
        %2307 = vmatprep.subr.bf16.mxu0 0
        %2308 = vmatpush1.bf16.msra.mxu0 0
        %2309 = vmatprep.subr.bf16.mxu0 0
        %2310 = vmatpush1.bf16.msra.mxu0 0
        %2311 = vmatprep.subr.bf16.mxu0 0
        %2312 = vmatpush1.bf16.msra.mxu0 0
        %2313 = vmatprep.subr.bf16.mxu0 0
        %2314 = vmatpush1.bf16.msra.mxu0 0
        %2315 = vmatprep.subr.bf16.mxu0 0
        %2316 = vmatpush1.bf16.msra.mxu0 0
        %2317 = vmatprep.subr.bf16.mxu0 0
        %2318 = vmatpush1.bf16.msra.mxu0 0
        %2319 = vmatprep.subr.bf16.mxu0 0
        %2320 = vmatpush1.bf16.msra.mxu0 0
        %2321 = vmatprep.subr.bf16.mxu0 0
        %2322 = vmatpush1.bf16.msra.mxu0 0
        %2323 = vmatprep.subr.bf16.mxu0 0
        %2324 = vmatpush1.bf16.msra.mxu0 0
        %2325 = vmatprep.subr.bf16.mxu0 0
        %2326 = vmatpush1.bf16.msra.mxu0 0
        %2327 = vmatprep.mubr.bf16.mxu0 0
        %2328 = vmatmul.mubr.bf16.gmra.mrb[0].mxu0 %v2290
        %v2329 = vpop.f32.mrb[0].mxu0
        %v2330 = vadd.f32 0.0, %v2329
        %v2331 = vpop.f32.mrb[0].mxu0
        %v2332 = vpop.f32.mrb[0].mxu0
        %v2333 = vpop.f32.mrb[0].mxu0
        %2334 = vdwg.mxu0
        %2336 = vrot.lane.b32.xlu0 %v2330, 16
        %v2337 = vpop.permute.xlu0 %2336
        %2339 = vst.msk [vmem:[#allocation3] sm:$0xff] %vm1322, %v2337
        %2340 = vrot.lane.b32.xlu0 %v2110, 96
        %v2341 = vpop.permute.xlu0 %2340
        %2342 = vrot.lane.b32.xlu0 %v2111, 32
        %v2343 = vpop.permute.xlu0 %2342
        %v2345 = vsel %vm1096, %v2341, 0
        %v2348 = vsel %vm1096, %v2343, 0
        %2350 = vmatprep.subr.bf16.mxu0 0
        %2351 = vmatpush1.bf16.xpose.msra.mxu0 %v2348
        %2352 = vmatprep.subr.bf16.mxu0 0
        %2353 = vmatpush1.bf16.xpose.msra.mxu0 0
        %2354 = vmatprep.subr.bf16.mxu0 0
        %2355 = vmatpush1.bf16.xpose.msra.mxu0 0
        %2356 = vmatprep.subr.bf16.mxu0 0
        %2357 = vmatpush1.bf16.xpose.msra.mxu0 0
        %2358 = vmatprep.subr.bf16.mxu0 0
        %2359 = vmatpush1.bf16.xpose.msra.mxu0 0
        %2360 = vmatprep.subr.bf16.mxu0 0
        %2361 = vmatpush1.bf16.xpose.msra.mxu0 0
        %2362 = vmatprep.subr.bf16.mxu0 0
        %2363 = vmatpush1.bf16.xpose.msra.mxu0 0
        %2364 = vmatprep.subr.bf16.mxu0 0
        %2365 = vmatpush1.bf16.xpose.msra.mxu0 0
        %2366 = vmatprep.subr.bf16.mxu0 0
        %2367 = vmatpush1.bf16.xpose.msra.mxu0 0
        %2368 = vmatprep.subr.bf16.mxu0 0
        %2369 = vmatpush1.bf16.xpose.msra.mxu0 0
        %2370 = vmatprep.subr.bf16.mxu0 0
        %2371 = vmatpush1.bf16.xpose.msra.mxu0 0
        %2372 = vmatprep.subr.bf16.mxu0 0
        %2373 = vmatpush1.bf16.xpose.msra.mxu0 0
        %2374 = vmatprep.subr.bf16.mxu0 0
        %2375 = vmatpush1.bf16.xpose.msra.mxu0 0
        %2376 = vmatprep.subr.bf16.mxu0 0
        %2377 = vmatpush1.bf16.xpose.msra.mxu0 0
        %2378 = vmatprep.subr.bf16.mxu0 0
        %2379 = vmatpush1.bf16.xpose.msra.mxu0 0
        %2380 = vmatprep.subr.bf16.mxu0 0
        %2381 = vmatpush1.bf16.xpose.msra.mxu0 0
        %2382 = vmatprep.mubr.bf16.mxu0 0
        %2383 = vmatmul.mubr.bf16.gmra.mrb[0].mxu0 %v2345
        %v2384 = vpop.f32.mrb[0].mxu0
        %v2385 = vadd.f32 0.0, %v2384
        %v2386 = vpop.f32.mrb[0].mxu0
        %v2387 = vpop.f32.mrb[0].mxu0
        %v2388 = vpop.f32.mrb[0].mxu0
        %2389 = vdwg.mxu0
        %v2390 = vsel %vm952, %v2385, -1e+30
        %v2391 = vsel %vm1144, %v2390, -inf
        %2392 = vmax.xlane.f32.xlu0 %v2391
        %v2393 = vpop.xlane.xlu0 %2392
        %v2394 = vsub.f32 %v2390, %v2393
        %v2395 = vmul.f32 %v2394, 1.442695
        %v2396 = vpow.pop %v2395
        %v2397 = vsel %vm1144, %v2396, 0.0
        %2398 = vadd.xlane.f32.xlu0 %v2397
        %v2399 = vpop.xlane.xlu0 %2398
        %v2400 = vrcp.pop %v2399
        %v2401 = vmul.f32 %v2396, %v2400
        %v2402 = vpack.c.bf16 %v2401, %v2401
        %2403 = vrot.lane.b32.xlu0 %v2112, 96
        %v2404 = vpop.permute.xlu0 %2403
        %v2406 = vsel %vm1144, %v2402, 0
        %v2409 = vsel %vm1160, %v2404, 0
        %2411 = vmatprep.subr.bf16.mxu0 0
        %2412 = vmatpush1.bf16.msra.mxu0 %v2409
        %2413 = vmatprep.subr.bf16.mxu0 0
        %2414 = vmatpush1.bf16.msra.mxu0 0
        %2415 = vmatprep.subr.bf16.mxu0 0
        %2416 = vmatpush1.bf16.msra.mxu0 0
        %2417 = vmatprep.subr.bf16.mxu0 0
        %2418 = vmatpush1.bf16.msra.mxu0 0
        %2419 = vmatprep.subr.bf16.mxu0 0
        %2420 = vmatpush1.bf16.msra.mxu0 0
        %2421 = vmatprep.subr.bf16.mxu0 0
        %2422 = vmatpush1.bf16.msra.mxu0 0
        %2423 = vmatprep.subr.bf16.mxu0 0
        %2424 = vmatpush1.bf16.msra.mxu0 0
        %2425 = vmatprep.subr.bf16.mxu0 0
        %2426 = vmatpush1.bf16.msra.mxu0 0
        %2427 = vmatprep.subr.bf16.mxu0 0
        %2428 = vmatpush1.bf16.msra.mxu0 0
        %2429 = vmatprep.subr.bf16.mxu0 0
        %2430 = vmatpush1.bf16.msra.mxu0 0
        %2431 = vmatprep.subr.bf16.mxu0 0
        %2432 = vmatpush1.bf16.msra.mxu0 0
        %2433 = vmatprep.subr.bf16.mxu0 0
        %2434 = vmatpush1.bf16.msra.mxu0 0
        %2435 = vmatprep.subr.bf16.mxu0 0
        %2436 = vmatpush1.bf16.msra.mxu0 0
        %2437 = vmatprep.subr.bf16.mxu0 0
        %2438 = vmatpush1.bf16.msra.mxu0 0
        %2439 = vmatprep.subr.bf16.mxu0 0
        %2440 = vmatpush1.bf16.msra.mxu0 0
        %2441 = vmatprep.subr.bf16.mxu0 0
        %2442 = vmatpush1.bf16.msra.mxu0 0
        %2443 = vmatprep.mubr.bf16.mxu0 0
        %2444 = vmatmul.mubr.bf16.gmra.mrb[0].mxu0 %v2406
        %v2445 = vpop.f32.mrb[0].mxu0
        %v2446 = vadd.f32 0.0, %v2445
        %v2447 = vpop.f32.mrb[0].mxu0
        %v2448 = vpop.f32.mrb[0].mxu0
        %v2449 = vpop.f32.mrb[0].mxu0
        %2450 = vdwg.mxu0
        %2452 = vrot.lane.b32.xlu0 %v2446, 32
        %v2453 = vpop.permute.xlu0 %2452
        %2455 = vst.msk [vmem:[#allocation3] sm:$0xff] %vm1439, %v2453
        %2456 = vrot.lane.b32.xlu0 %v2110, 80
        %v2457 = vpop.permute.xlu0 %2456
        %2458 = vrot.lane.b32.xlu0 %v2111, 16
        %v2459 = vpop.permute.xlu0 %2458
        %v2461 = vsel %vm1096, %v2457, 0
        %v2464 = vsel %vm1096, %v2459, 0
        %2466 = vmatprep.subr.bf16.mxu0 0
        %2467 = vmatpush1.bf16.xpose.msra.mxu0 %v2464
        %2468 = vmatprep.subr.bf16.mxu0 0
        %2469 = vmatpush1.bf16.xpose.msra.mxu0 0
        %2470 = vmatprep.subr.bf16.mxu0 0
        %2471 = vmatpush1.bf16.xpose.msra.mxu0 0
        %2472 = vmatprep.subr.bf16.mxu0 0
        %2473 = vmatpush1.bf16.xpose.msra.mxu0 0
        %2474 = vmatprep.subr.bf16.mxu0 0
        %2475 = vmatpush1.bf16.xpose.msra.mxu0 0
        %2476 = vmatprep.subr.bf16.mxu0 0
        %2477 = vmatpush1.bf16.xpose.msra.mxu0 0
        %2478 = vmatprep.subr.bf16.mxu0 0
        %2479 = vmatpush1.bf16.xpose.msra.mxu0 0
        %2480 = vmatprep.subr.bf16.mxu0 0
        %2481 = vmatpush1.bf16.xpose.msra.mxu0 0
        %2482 = vmatprep.subr.bf16.mxu0 0
        %2483 = vmatpush1.bf16.xpose.msra.mxu0 0
        %2484 = vmatprep.subr.bf16.mxu0 0
        %2485 = vmatpush1.bf16.xpose.msra.mxu0 0
        %2486 = vmatprep.subr.bf16.mxu0 0
        %2487 = vmatpush1.bf16.xpose.msra.mxu0 0
        %2488 = vmatprep.subr.bf16.mxu0 0
        %2489 = vmatpush1.bf16.xpose.msra.mxu0 0
        %2490 = vmatprep.subr.bf16.mxu0 0
        %2491 = vmatpush1.bf16.xpose.msra.mxu0 0
        %2492 = vmatprep.subr.bf16.mxu0 0
        %2493 = vmatpush1.bf16.xpose.msra.mxu0 0
        %2494 = vmatprep.subr.bf16.mxu0 0
        %2495 = vmatpush1.bf16.xpose.msra.mxu0 0
        %2496 = vmatprep.subr.bf16.mxu0 0
        %2497 = vmatpush1.bf16.xpose.msra.mxu0 0
        %2498 = vmatprep.mubr.bf16.mxu0 0
        %2499 = vmatmul.mubr.bf16.gmra.mrb[0].mxu0 %v2461
        %v2500 = vpop.f32.mrb[0].mxu0
        %v2501 = vadd.f32 0.0, %v2500
        %v2502 = vpop.f32.mrb[0].mxu0
        %v2503 = vpop.f32.mrb[0].mxu0
        %v2504 = vpop.f32.mrb[0].mxu0
        %2505 = vdwg.mxu0
        %v2506 = vsel %vm952, %v2501, -1e+30
        %v2507 = vsel %vm1144, %v2506, -inf
        %2508 = vmax.xlane.f32.xlu0 %v2507
        %v2509 = vpop.xlane.xlu0 %2508
        %v2510 = vsub.f32 %v2506, %v2509
        %v2511 = vmul.f32 %v2510, 1.442695
        %v2512 = vpow.pop %v2511
        %v2513 = vsel %vm1144, %v2512, 0.0
        %2514 = vadd.xlane.f32.xlu0 %v2513
        %v2515 = vpop.xlane.xlu0 %2514
        %v2516 = vrcp.pop %v2515
        %v2517 = vmul.f32 %v2512, %v2516
        %v2518 = vpack.c.bf16 %v2517, %v2517
        %2519 = vrot.lane.b32.xlu0 %v2112, 80
        %v2520 = vpop.permute.xlu0 %2519
        %v2522 = vsel %vm1144, %v2518, 0
        %v2525 = vsel %vm1160, %v2520, 0
        %2527 = vmatprep.subr.bf16.mxu0 0
        %2528 = vmatpush1.bf16.msra.mxu0 %v2525
        %2529 = vmatprep.subr.bf16.mxu0 0
        %2530 = vmatpush1.bf16.msra.mxu0 0
        %2531 = vmatprep.subr.bf16.mxu0 0
        %2532 = vmatpush1.bf16.msra.mxu0 0
        %2533 = vmatprep.subr.bf16.mxu0 0
        %2534 = vmatpush1.bf16.msra.mxu0 0
        %2535 = vmatprep.subr.bf16.mxu0 0
        %2536 = vmatpush1.bf16.msra.mxu0 0
        %2537 = vmatprep.subr.bf16.mxu0 0
        %2538 = vmatpush1.bf16.msra.mxu0 0
        %2539 = vmatprep.subr.bf16.mxu0 0
        %2540 = vmatpush1.bf16.msra.mxu0 0
        %2541 = vmatprep.subr.bf16.mxu0 0
        %2542 = vmatpush1.bf16.msra.mxu0 0
        %2543 = vmatprep.subr.bf16.mxu0 0
        %2544 = vmatpush1.bf16.msra.mxu0 0
        %2545 = vmatprep.subr.bf16.mxu0 0
        %2546 = vmatpush1.bf16.msra.mxu0 0
        %2547 = vmatprep.subr.bf16.mxu0 0
        %2548 = vmatpush1.bf16.msra.mxu0 0
        %2549 = vmatprep.subr.bf16.mxu0 0
        %2550 = vmatpush1.bf16.msra.mxu0 0
        %2551 = vmatprep.subr.bf16.mxu0 0
        %2552 = vmatpush1.bf16.msra.mxu0 0
        %2553 = vmatprep.subr.bf16.mxu0 0
        %2554 = vmatpush1.bf16.msra.mxu0 0
        %2555 = vmatprep.subr.bf16.mxu0 0
        %2556 = vmatpush1.bf16.msra.mxu0 0
        %2557 = vmatprep.subr.bf16.mxu0 0
        %2558 = vmatpush1.bf16.msra.mxu0 0
        %2559 = vmatprep.mubr.bf16.mxu0 0
        %2560 = vmatmul.mubr.bf16.gmra.mrb[0].mxu0 %v2522
        %v2561 = vpop.f32.mrb[0].mxu0
        %v2562 = vadd.f32 0.0, %v2561
        %v2563 = vpop.f32.mrb[0].mxu0
        %v2564 = vpop.f32.mrb[0].mxu0
        %v2565 = vpop.f32.mrb[0].mxu0
        %2566 = vdwg.mxu0
        %2568 = vrot.lane.b32.xlu0 %v2562, 48
        %v2569 = vpop.permute.xlu0 %2568
        %2571 = vst.msk [vmem:[#allocation3] sm:$0xff] %vm1556, %v2569
        %v2572 = vld [vmem:[#allocation3] sm:$0xff]
        %v2573 = vld [vmem:[%s39] sm:$0xf]
        %v2574 = vld [vmem:[%s39 + $0x4] sm:$0xf]
        %v2575 = vld [vmem:[%s39 + $0x8] sm:$0xf]
        %v2576 = vld [vmem:[%s39 + $0xc] sm:$0xf]
        %v2577 = vld [vmem:[%s39 + $0x10] sm:$0xf]
        %v2578 = vld [vmem:[%s39 + $0x14] sm:$0xf]
        %v2579 = vld [vmem:[%s39 + $0x18] sm:$0xf]
        %v2580 = vld [vmem:[%s39 + $0x1c] sm:$0xf]
        %v2581 = vpack.c.bf16 %v2572, %v2572
        %v2590 = vunpack.c.l.b16 %v2573
        %v2591 = vunpack.c.l.b16 %v2574
        %v2592 = vunpack.c.l.b16 %v2575
        %v2593 = vunpack.c.l.b16 %v2576
        %v2594 = vunpack.c.l.b16 %v2577
        %v2595 = vunpack.c.l.b16 %v2578
        %v2596 = vunpack.c.l.b16 %v2579
        %v2597 = vunpack.c.l.b16 %v2580
        %v2598 = vpack.c.b16 %v2591, %v2590
        %v2599 = vpack.c.b16 %v2593, %v2592
        %v2600 = vpack.c.b16 %v2595, %v2594
        %v2601 = vpack.c.b16 %v2597, %v2596
        %v2607 = vsel %vm955, %v2581, 0
        %2609 = vmatprep.subr.bf16.mxu0 0
        %2610 = vmatpush1.bf16.msra.mxu0 %v2598
        %2611 = vmatprep.subr.bf16.mxu0 0
        %2612 = vmatpush1.bf16.msra.mxu0 %v2599
        %2613 = vmatprep.subr.bf16.mxu0 0
        %2614 = vmatpush1.bf16.msra.mxu0 %v2600
        %2615 = vmatprep.subr.bf16.mxu0 0
        %2616 = vmatpush1.bf16.msra.mxu0 %v2601
        %2617 = vmatprep.subr.bf16.mxu0 0
        %2618 = vmatpush1.bf16.msra.mxu0 0
        %2619 = vmatprep.subr.bf16.mxu0 0
        %2620 = vmatpush1.bf16.msra.mxu0 0
        %2621 = vmatprep.subr.bf16.mxu0 0
        %2622 = vmatpush1.bf16.msra.mxu0 0
        %2623 = vmatprep.subr.bf16.mxu0 0
        %2624 = vmatpush1.bf16.msra.mxu0 0
        %2625 = vmatprep.subr.bf16.mxu0 0
        %2626 = vmatpush1.bf16.msra.mxu0 0
        %2627 = vmatprep.subr.bf16.mxu0 0
        %2628 = vmatpush1.bf16.msra.mxu0 0
        %2629 = vmatprep.subr.bf16.mxu0 0
        %2630 = vmatpush1.bf16.msra.mxu0 0
        %2631 = vmatprep.subr.bf16.mxu0 0
        %2632 = vmatpush1.bf16.msra.mxu0 0
        %2633 = vmatprep.subr.bf16.mxu0 0
        %2634 = vmatpush1.bf16.msra.mxu0 0
        %2635 = vmatprep.subr.bf16.mxu0 0
        %2636 = vmatpush1.bf16.msra.mxu0 0
        %2637 = vmatprep.subr.bf16.mxu0 0
        %2638 = vmatpush1.bf16.msra.mxu0 0
        %2639 = vmatprep.subr.bf16.mxu0 0
        %2640 = vmatpush1.bf16.msra.mxu0 0
        %2641 = vmatprep.mubr.bf16.mxu0 0
        %2642 = vmatmul.mubr.bf16.gmra.mrb[0].mxu0 %v2607
        %v2643 = vpop.f32.mrb[0].mxu0
        %v2644 = vadd.f32 0.0, %v2643
        %v2645 = vpop.f32.mrb[0].mxu0
        %v2646 = vpop.f32.mrb[0].mxu0
        %v2647 = vpop.f32.mrb[0].mxu0
        %2648 = vdwg.mxu0
        %v2649 = vadd.f32 %v1974, %v2644
        %v2650 = vld [vmem:[%s41] sm:$0x1]
        %v2652 = vlaneseq
        %v2653 = vshrl.u32 %v2652, 7
        %v2654 = vsub.s32 0, %v2653
        %v2655 = vrot.slane %v2650, %v2654
        %v2657 = vadd.f32 %v2649, %v2655
        %v2658 = vld [vmem:[%s43] sm:$0x1]
        %v2659 = vld [vmem:[%s45] sm:$0x1]
        %v2660 = vsel %vm955, %v2657, 0.0
        %2661 = vadd.xlane.f32.xlu0 %v2660
        %v2662 = vpop.xlane.xlu0 %2661
        %v2663 = vmul.f32 %v2662, %v959
        %v2664 = vsub.f32 %v2657, %v2663
        %v2665 = vmul.f32 %v2664, %v2664
        %v2666 = vsel %vm955, %v2665, 0.0
        %2667 = vadd.xlane.f32.xlu0 %v2666
        %v2668 = vpop.xlane.xlu0 %2667
        %v2669 = vmul.f32 %v2668, %v959
        %v2670 = vadd.f32 %v2669, 1e-05
        %v2671 = vrsqrt.pop %v2670
        %v2672 = vmul.f32 %v2664, %v2671
        %v2674 = vlaneseq
        %v2675 = vshrl.u32 %v2674, 7
        %v2676 = vsub.s32 0, %v2675
        %v2677 = vrot.slane %v2658, %v2676
        %v2679 = vmul.f32 %v2672, %v2677
        %v2681 = vlaneseq
        %v2682 = vshrl.u32 %v2681, 7
        %v2683 = vsub.s32 0, %v2682
        %v2684 = vrot.slane %v2659, %v2683
        %v2686 = vadd.f32 %v2679, %v2684
        %v2687 = vld [vmem:[%s47] sm:$0xff]
        %v2688 = vld [vmem:[%s47 + $0x8] sm:$0xff]
        %v2689 = vld [vmem:[%s47 + $0x10] sm:$0xff]
        %v2690 = vld [vmem:[%s47 + $0x18] sm:$0xff]
        %v2691 = vld [vmem:[%s47 + $0x20] sm:$0xff]
        %v2692 = vld [vmem:[%s47 + $0x28] sm:$0xff]
        %v2693 = vld [vmem:[%s47 + $0x30] sm:$0xff]
        %v2694 = vld [vmem:[%s47 + $0x38] sm:$0xff]
        %v2695 = vpack.c.bf16 %v2686, %v2686
        %v2696 = vld [vmem:[%s49] sm:$0x3]
        %v2698 = vlaneseq
        %v2699 = vshrl.u32 %v2698, 7
        %v2700 = vsub.s32 0, %v2699
        %v2701 = vrot.slane %v2696, %v2700
        %v2702 = vlaneseq
        %v2703 = vshrl.u32 %v2702, 7
        %v2704 = vsub.s32 1, %v2703
        %v2705 = vrot.slane %v2696, %v2704
        %v2716 = vunpack.c.l.b16 %v2687
        %v2717 = vunpack.c.h.b16 %v2687
        %v2718 = vunpack.c.l.b16 %v2688
        %v2719 = vunpack.c.h.b16 %v2688
        %v2720 = vunpack.c.l.b16 %v2689
        %v2721 = vunpack.c.h.b16 %v2689
        %v2722 = vunpack.c.l.b16 %v2690
        %v2723 = vunpack.c.h.b16 %v2690
        %v2724 = vunpack.c.l.b16 %v2691
        %v2725 = vunpack.c.h.b16 %v2691
        %v2726 = vunpack.c.l.b16 %v2692
        %v2727 = vunpack.c.h.b16 %v2692
        %v2728 = vunpack.c.l.b16 %v2693
        %v2729 = vunpack.c.h.b16 %v2693
        %v2730 = vunpack.c.l.b16 %v2694
        %v2731 = vunpack.c.h.b16 %v2694
        %v2732 = vpack.c.b16 %v2718, %v2716
        %v2733 = vpack.c.b16 %v2719, %v2717
        %v2734 = vpack.c.b16 %v2722, %v2720
        %v2735 = vpack.c.b16 %v2723, %v2721
        %v2736 = vpack.c.b16 %v2726, %v2724
        %v2737 = vpack.c.b16 %v2727, %v2725
        %v2738 = vpack.c.b16 %v2730, %v2728
        %v2739 = vpack.c.b16 %v2731, %v2729
        %v2749 = vsel %vm955, %v2695, 0
        %2751 = vmatprep.subr.bf16.mxu0 %v2733
        %2752 = vmatpush1.bf16.msra.mxu0 %v2732
        %2753 = vmatprep.subr.bf16.mxu0 %v2735
        %2754 = vmatpush1.bf16.msra.mxu0 %v2734
        %2755 = vmatprep.subr.bf16.mxu0 %v2737
        %2756 = vmatpush1.bf16.msra.mxu0 %v2736
        %2757 = vmatprep.subr.bf16.mxu0 %v2739
        %2758 = vmatpush1.bf16.msra.mxu0 %v2738
        %2759 = vmatprep.subr.bf16.mxu0 0
        %2760 = vmatpush1.bf16.msra.mxu0 0
        %2761 = vmatprep.subr.bf16.mxu0 0
        %2762 = vmatpush1.bf16.msra.mxu0 0
        %2763 = vmatprep.subr.bf16.mxu0 0
        %2764 = vmatpush1.bf16.msra.mxu0 0
        %2765 = vmatprep.subr.bf16.mxu0 0
        %2766 = vmatpush1.bf16.msra.mxu0 0
        %2767 = vmatprep.subr.bf16.mxu0 0
        %2768 = vmatpush1.bf16.msra.mxu0 0
        %2769 = vmatprep.subr.bf16.mxu0 0
        %2770 = vmatpush1.bf16.msra.mxu0 0
        %2771 = vmatprep.subr.bf16.mxu0 0
        %2772 = vmatpush1.bf16.msra.mxu0 0
        %2773 = vmatprep.subr.bf16.mxu0 0
        %2774 = vmatpush1.bf16.msra.mxu0 0
        %2775 = vmatprep.subr.bf16.mxu0 0
        %2776 = vmatpush1.bf16.msra.mxu0 0
        %2777 = vmatprep.subr.bf16.mxu0 0
        %2778 = vmatpush1.bf16.msra.mxu0 0
        %2779 = vmatprep.subr.bf16.mxu0 0
        %2780 = vmatpush1.bf16.msra.mxu0 0
        %2781 = vmatprep.subr.bf16.mxu0 0
        %2782 = vmatpush1.bf16.msra.mxu0 0
        %2783 = vmatprep.mubr.bf16.mxu0 0
        %2784 = vmatmul.mubr.bf16.gmra.mrb[0].mxu0 %v2749
        %v2785 = vpop.f32.mrb[0].mxu0
        %v2786 = vadd.f32 %v2701, %v2785
        %v2787 = vpop.f32.mrb[0].mxu0
        %v2788 = vadd.f32 %v2705, %v2787
        %v2789 = vpop.f32.mrb[0].mxu0
        %v2790 = vpop.f32.mrb[0].mxu0
        %2791 = vdwg.mxu0
        %v2792 = vmul.f32 %v2786, %v2786
        %v2793 = vmul.f32 %v2788, %v2788
        %v2794 = vmul.f32 %v2786, %v2792
        %v2795 = vmul.f32 %v2788, %v2793
        %v2796 = vmul.f32 %v2794, 0.044715
        %v2797 = vmul.f32 %v2795, 0.044715
        %v2798 = vadd.f32 %v2786, %v2796
        %v2799 = vadd.f32 %v2788, %v2797
        %v2800 = vmul.f32 %v2798, 0.7978846
        %v2801 = vmul.f32 %v2799, 0.7978846
        %v2802 = vtanh.pop %v2800
        %v2803 = vtanh.pop %v2801
        %v2804 = vadd.f32 %v2802, 1.0
        %v2805 = vadd.f32 %v2803, 1.0
        %v2806 = vmul.f32 %v2804, 0.5
        %v2807 = vmul.f32 %v2805, 0.5
        %v2808 = vmul.f32 %v2786, %v2806
        %v2809 = vmul.f32 %v2788, %v2807
        %v2810 = vld [vmem:[%s51] sm:$0xf]
        %v2811 = vld [vmem:[%s51 + $0x4] sm:$0xf]
        %v2812 = vld [vmem:[%s51 + $0x8] sm:$0xf]
        %v2813 = vld [vmem:[%s51 + $0xc] sm:$0xf]
        %v2814 = vld [vmem:[%s51 + $0x10] sm:$0xf]
        %v2815 = vld [vmem:[%s51 + $0x14] sm:$0xf]
        %v2816 = vld [vmem:[%s51 + $0x18] sm:$0xf]
        %v2817 = vld [vmem:[%s51 + $0x1c] sm:$0xf]
        %v2818 = vld [vmem:[%s51 + $0x20] sm:$0xf]
        %v2819 = vld [vmem:[%s51 + $0x24] sm:$0xf]
        %v2820 = vld [vmem:[%s51 + $0x28] sm:$0xf]
        %v2821 = vld [vmem:[%s51 + $0x2c] sm:$0xf]
        %v2822 = vld [vmem:[%s51 + $0x30] sm:$0xf]
        %v2823 = vld [vmem:[%s51 + $0x34] sm:$0xf]
        %v2824 = vld [vmem:[%s51 + $0x38] sm:$0xf]
        %v2825 = vld [vmem:[%s51 + $0x3c] sm:$0xf]
        %v2826 = vld [vmem:[%s51 + $0x40] sm:$0xf]
        %v2827 = vld [vmem:[%s51 + $0x44] sm:$0xf]
        %v2828 = vld [vmem:[%s51 + $0x48] sm:$0xf]
        %v2829 = vld [vmem:[%s51 + $0x4c] sm:$0xf]
        %v2830 = vld [vmem:[%s51 + $0x50] sm:$0xf]
        %v2831 = vld [vmem:[%s51 + $0x54] sm:$0xf]
        %v2832 = vld [vmem:[%s51 + $0x58] sm:$0xf]
        %v2833 = vld [vmem:[%s51 + $0x5c] sm:$0xf]
        %v2834 = vld [vmem:[%s51 + $0x60] sm:$0xf]
        %v2835 = vld [vmem:[%s51 + $0x64] sm:$0xf]
        %v2836 = vld [vmem:[%s51 + $0x68] sm:$0xf]
        %v2837 = vld [vmem:[%s51 + $0x6c] sm:$0xf]
        %v2838 = vld [vmem:[%s51 + $0x70] sm:$0xf]
        %v2839 = vld [vmem:[%s51 + $0x74] sm:$0xf]
        %v2840 = vld [vmem:[%s51 + $0x78] sm:$0xf]
        %v2841 = vld [vmem:[%s51 + $0x7c] sm:$0xf]
        %v2842 = vpack.c.bf16 %v2808, %v2808
        %v2843 = vpack.c.bf16 %v2809, %v2809
        %v2876 = vunpack.c.l.b16 %v2810
        %v2877 = vunpack.c.l.b16 %v2811
        %v2878 = vunpack.c.l.b16 %v2812
        %v2879 = vunpack.c.l.b16 %v2813
        %v2880 = vunpack.c.l.b16 %v2814
        %v2881 = vunpack.c.l.b16 %v2815
        %v2882 = vunpack.c.l.b16 %v2816
        %v2883 = vunpack.c.l.b16 %v2817
        %v2884 = vunpack.c.l.b16 %v2818
        %v2885 = vunpack.c.l.b16 %v2819
        %v2886 = vunpack.c.l.b16 %v2820
        %v2887 = vunpack.c.l.b16 %v2821
        %v2888 = vunpack.c.l.b16 %v2822
        %v2889 = vunpack.c.l.b16 %v2823
        %v2890 = vunpack.c.l.b16 %v2824
        %v2891 = vunpack.c.l.b16 %v2825
        %v2892 = vunpack.c.l.b16 %v2826
        %v2893 = vunpack.c.l.b16 %v2827
        %v2894 = vunpack.c.l.b16 %v2828
        %v2895 = vunpack.c.l.b16 %v2829
        %v2896 = vunpack.c.l.b16 %v2830
        %v2897 = vunpack.c.l.b16 %v2831
        %v2898 = vunpack.c.l.b16 %v2832
        %v2899 = vunpack.c.l.b16 %v2833
        %v2900 = vunpack.c.l.b16 %v2834
        %v2901 = vunpack.c.l.b16 %v2835
        %v2902 = vunpack.c.l.b16 %v2836
        %v2903 = vunpack.c.l.b16 %v2837
        %v2904 = vunpack.c.l.b16 %v2838
        %v2905 = vunpack.c.l.b16 %v2839
        %v2906 = vunpack.c.l.b16 %v2840
        %v2907 = vunpack.c.l.b16 %v2841
        %v2908 = vpack.c.b16 %v2877, %v2876
        %v2909 = vpack.c.b16 %v2879, %v2878
        %v2910 = vpack.c.b16 %v2881, %v2880
        %v2911 = vpack.c.b16 %v2883, %v2882
        %v2912 = vpack.c.b16 %v2885, %v2884
        %v2913 = vpack.c.b16 %v2887, %v2886
        %v2914 = vpack.c.b16 %v2889, %v2888
        %v2915 = vpack.c.b16 %v2891, %v2890
        %v2916 = vpack.c.b16 %v2893, %v2892
        %v2917 = vpack.c.b16 %v2895, %v2894
        %v2918 = vpack.c.b16 %v2897, %v2896
        %v2919 = vpack.c.b16 %v2899, %v2898
        %v2920 = vpack.c.b16 %v2901, %v2900
        %v2921 = vpack.c.b16 %v2903, %v2902
        %v2922 = vpack.c.b16 %v2905, %v2904
        %v2923 = vpack.c.b16 %v2907, %v2906
        %2940 = vmatprep.subr.bf16.mxu0 0
        %2941 = vmatpush1.bf16.msra.mxu0 %v2908
        %2942 = vmatprep.subr.bf16.mxu0 0
        %2943 = vmatpush1.bf16.msra.mxu0 %v2909
        %2944 = vmatprep.subr.bf16.mxu0 0
        %2945 = vmatpush1.bf16.msra.mxu0 %v2910
        %2946 = vmatprep.subr.bf16.mxu0 0
        %2947 = vmatpush1.bf16.msra.mxu0 %v2911
        %2948 = vmatprep.subr.bf16.mxu0 0
        %2949 = vmatpush1.bf16.msra.mxu0 %v2912
        %2950 = vmatprep.subr.bf16.mxu0 0
        %2951 = vmatpush1.bf16.msra.mxu0 %v2913
        %2952 = vmatprep.subr.bf16.mxu0 0
        %2953 = vmatpush1.bf16.msra.mxu0 %v2914
        %2954 = vmatprep.subr.bf16.mxu0 0
        %2955 = vmatpush1.bf16.msra.mxu0 %v2915
        %2956 = vmatprep.subr.bf16.mxu0 0
        %2957 = vmatpush1.bf16.msra.mxu0 %v2916
        %2958 = vmatprep.subr.bf16.mxu0 0
        %2959 = vmatpush1.bf16.msra.mxu0 %v2917
        %2960 = vmatprep.subr.bf16.mxu0 0
        %2961 = vmatpush1.bf16.msra.mxu0 %v2918
        %2962 = vmatprep.subr.bf16.mxu0 0
        %2963 = vmatpush1.bf16.msra.mxu0 %v2919
        %2964 = vmatprep.subr.bf16.mxu0 0
        %2965 = vmatpush1.bf16.msra.mxu0 %v2920
        %2966 = vmatprep.subr.bf16.mxu0 0
        %2967 = vmatpush1.bf16.msra.mxu0 %v2921
        %2968 = vmatprep.subr.bf16.mxu0 0
        %2969 = vmatpush1.bf16.msra.mxu0 %v2922
        %2970 = vmatprep.subr.bf16.mxu0 0
        %2971 = vmatpush1.bf16.msra.mxu0 %v2923
        %2972 = vmatprep.mubr.bf16.mxu0 %v2843
        %2973 = vmatmul.mubr.bf16.gmra.mrb[0].mxu0 %v2842
        %v2974 = vpop.f32.mrb[0].mxu0
        %v2975 = vadd.f32 0.0, %v2974
        %v2976 = vpop.f32.mrb[0].mxu0
        %v2977 = vpop.f32.mrb[0].mxu0
        %v2978 = vpop.f32.mrb[0].mxu0
        %2979 = vdwg.mxu0
        %v2980 = vadd.f32 %v2657, %v2975
        %v2981 = vld [vmem:[%s53] sm:$0x1]
        %v2983 = vlaneseq
        %v2984 = vshrl.u32 %v2983, 7
        %v2985 = vsub.s32 0, %v2984
        %v2986 = vrot.slane %v2981, %v2985
        %v2988 = vadd.f32 %v2980, %v2986
        %v2989 = vld [vmem:[%s55] sm:$0x1]
        %v2990 = vld [vmem:[%s57] sm:$0x1]
        %v2991 = vsel %vm955, %v2988, 0.0
        %2992 = vadd.xlane.f32.xlu0 %v2991
        %v2993 = vpop.xlane.xlu0 %2992
        %v2994 = vmul.f32 %v2993, %v959
        %v2995 = vsub.f32 %v2988, %v2994
        %v2996 = vmul.f32 %v2995, %v2995
        %v2997 = vsel %vm955, %v2996, 0.0
        %2998 = vadd.xlane.f32.xlu0 %v2997
        %v2999 = vpop.xlane.xlu0 %2998
        %v3000 = vmul.f32 %v2999, %v959
        %v3001 = vadd.f32 %v3000, 1e-05
        %v3002 = vrsqrt.pop %v3001
        %v3003 = vmul.f32 %v2995, %v3002
        %v3005 = vlaneseq
        %v3006 = vshrl.u32 %v3005, 7
        %v3007 = vsub.s32 0, %v3006
        %v3008 = vrot.slane %v2989, %v3007
        %v3010 = vmul.f32 %v3003, %v3008
        %v3012 = vlaneseq
        %v3013 = vshrl.u32 %v3012, 7
        %v3014 = vsub.s32 0, %v3013
        %v3015 = vrot.slane %v2990, %v3014
        %v3017 = vadd.f32 %v3010, %v3015
        %v3018 = vld [vmem:[%s59] sm:$0xf]
        %v3019 = vld [vmem:[%s59 + $0x4] sm:$0xf]
        %v3020 = vld [vmem:[%s59 + $0x8] sm:$0xf]
        %v3021 = vld [vmem:[%s59 + $0xc] sm:$0xf]
        %v3022 = vld [vmem:[%s59 + $0x10] sm:$0xf]
        %v3023 = vld [vmem:[%s59 + $0x14] sm:$0xf]
        %v3024 = vld [vmem:[%s59 + $0x18] sm:$0xf]
        %v3025 = vld [vmem:[%s59 + $0x1c] sm:$0xf]
        %v3026 = vpack.c.bf16 %v3017, %v3017
        %v3035 = vunpack.c.l.b16 %v3018
        %v3036 = vunpack.c.l.b16 %v3019
        %v3037 = vunpack.c.l.b16 %v3020
        %v3038 = vunpack.c.l.b16 %v3021
        %v3039 = vunpack.c.l.b16 %v3022
        %v3040 = vunpack.c.l.b16 %v3023
        %v3041 = vunpack.c.l.b16 %v3024
        %v3042 = vunpack.c.l.b16 %v3025
        %v3043 = vpack.c.b16 %v3036, %v3035
        %v3044 = vpack.c.b16 %v3038, %v3037
        %v3045 = vpack.c.b16 %v3040, %v3039
        %v3046 = vpack.c.b16 %v3042, %v3041
        %v3052 = vsel %vm955, %v3026, 0
        %3054 = vmatprep.subr.bf16.mxu0 0
        %3055 = vmatpush1.bf16.msra.mxu0 %v3043
        %3056 = vmatprep.subr.bf16.mxu0 0
        %3057 = vmatpush1.bf16.msra.mxu0 %v3044
        %3058 = vmatprep.subr.bf16.mxu0 0
        %3059 = vmatpush1.bf16.msra.mxu0 %v3045
        %3060 = vmatprep.subr.bf16.mxu0 0
        %3061 = vmatpush1.bf16.msra.mxu0 %v3046
        %3062 = vmatprep.subr.bf16.mxu0 0
        %3063 = vmatpush1.bf16.msra.mxu0 0
        %3064 = vmatprep.subr.bf16.mxu0 0
        %3065 = vmatpush1.bf16.msra.mxu0 0
        %3066 = vmatprep.subr.bf16.mxu0 0
        %3067 = vmatpush1.bf16.msra.mxu0 0
        %3068 = vmatprep.subr.bf16.mxu0 0
        %3069 = vmatpush1.bf16.msra.mxu0 0
        %3070 = vmatprep.subr.bf16.mxu0 0
        %3071 = vmatpush1.bf16.msra.mxu0 0
        %3072 = vmatprep.subr.bf16.mxu0 0
        %3073 = vmatpush1.bf16.msra.mxu0 0
        %3074 = vmatprep.subr.bf16.mxu0 0
        %3075 = vmatpush1.bf16.msra.mxu0 0
        %3076 = vmatprep.subr.bf16.mxu0 0
        %3077 = vmatpush1.bf16.msra.mxu0 0
        %3078 = vmatprep.subr.bf16.mxu0 0
        %3079 = vmatpush1.bf16.msra.mxu0 0
        %3080 = vmatprep.subr.bf16.mxu0 0
        %3081 = vmatpush1.bf16.msra.mxu0 0
        %3082 = vmatprep.subr.bf16.mxu0 0
        %3083 = vmatpush1.bf16.msra.mxu0 0
        %3084 = vmatprep.subr.bf16.mxu0 0
        %3085 = vmatpush1.bf16.msra.mxu0 0
        %3086 = vmatprep.mubr.bf16.mxu0 0
        %3087 = vmatmul.mubr.bf16.gmra.mrb[0].mxu0 %v3052
        %v3088 = vpop.f32.mrb[0].mxu0
        %v3089 = vadd.f32 0.0, %v3088
        %v3090 = vpop.f32.mrb[0].mxu0
        %v3091 = vpop.f32.mrb[0].mxu0
        %v3092 = vpop.f32.mrb[0].mxu0
        %3093 = vdwg.mxu0
        %3094 = vst [vmem:[%s888] sm:$0xff] %v3089
        %s3095 = sand.u32 %s698, 1
        %s3096 = scalar_lea.sflag [#allocation7], %s3095
        %s3097 = sand.u32 %s698, 1
        %s3098 = smul.addr %s3097, 8
        %s3099 = scalar_lea.vmem [#allocation6], %s3098
        // Predicated region
        $region137: #{tpu_custom_call.1} parent=135 // pred_check
          %p3100 = pneg %p708
        $region138: #{tpu_custom_call.1} parent=135 // pred_check_branch
          %3102 = sbr.rel (%p3100) target = $region140
        $region139: #{tpu_custom_call.1} parent=135 // pred_region
          %s3104 = ssub.s32 128, 128
          %3105 = vsyncadd %s3096, %s3104
          %s3106 = smul.addr %s81, 128
          %s3107 = scalar_lea.hbm %s61, %s3106
          %s3109 = sshll.u32 %s3099, 4
          %s3110 = int_to_ptr.vmem [resolvable:$true] %s3109
          %3112 = dma.vmem_to_hbm [thread:$0]  %s3110, 128, %s3107, %s3096
        $region140: #{tpu_custom_call.1} parent=135 // pred_fallthru
          _
      $region136: #{tpu_custom_call.1} parent=5 // pred_fallthru
        _
      %p3113 = scmp.le.s32.totalorder 2, %s76
      // Predicated region
      $region141: #{tpu_custom_call.1} parent=5 // pred_check
        %p3114 = pneg %p3113
      $region142: #{tpu_custom_call.1} parent=5 // pred_check_branch
        %3116 = sbr.rel (%p3114) target = $region144
      $region143: #{tpu_custom_call.1} parent=5 // pred_region
        %s3117 = ssub.s32 %s76, 2
        // Predicated region
        $region145: #{tpu_custom_call.1} parent=143 // pred_check
          %p3118 = pneg %p714
        $region146: #{tpu_custom_call.1} parent=143 // pred_check_branch
          %3120 = sbr.rel (%p3118) target = $region148
        $region147: #{tpu_custom_call.1} parent=143 // pred_region
          %s3121 = sand.u32 %s699, 1
          %s3122 = scalar_lea.sflag [#allocation7], %s3121
          %s3123 = sand.u32 %s699, 1
          %s3124 = smul.addr %s3123, 8
          %s3125 = scalar_lea.vmem [#allocation6], %s3124
          %3126 = dma.done %s3122, 128
        $region148: #{tpu_custom_call.1} parent=143 // pred_fallthru
          _
      $region144: #{tpu_custom_call.1} parent=5 // pred_fallthru
        _
    $region6: #{tpu_custom_call.1} parent=1 // loop_footer
      %s80 = sadd.s32 1, %s76
    $region7: #{tpu_custom_call.1} parent=1 // loop_footer_branch
      %75 = sbr.rel target = $region3
    $region8: #{tpu_custom_call.1} parent=1 // loop_exit
      _
    %3127 = vsyncpa [#allocation7], 1
    %s3128 = scalar_lea.sflag [#allocation7], 1
    %3129 = vsyncpa %s3128, 1

</llo_original>
